<compile_context>
chip_gen: v5e
topology: v5e:2x2
jax: 0.10.0
libtpu: 0.0.40
codegen_flags: <defaults>
</compile_context>

<pallas_src>
import jax
import jax.numpy as jnp
from jax.experimental import pallas as pl
from jax.experimental.pallas import tpu as pltpu

_EPS = 1e-5          # InstanceNorm3d eps   (nnU-Net default norm_op_kwargs)
_NEG_SLOPE = 1e-2    # LeakyReLU neg. slope (nnU-Net default nonlin_kwargs)
_LANES = 128


def _round_up(n, m):
    return ((n + m - 1) // m) * m


# ---------------------------------------------------------------------------
# Fused Pallas kernel: conv (channel matmul) + InstanceNorm3d + LeakyReLU.
#   cols : (N, K, S)   -- per-sample (channels*taps, voxels) slab, lane-dense S
#   w    : (Cout, K)
#   g, b : (Cout, 1)   -- instance-norm affine
#   out  : (N, Cout, S)
# ---------------------------------------------------------------------------
def _fused_conv_in_lrelu_kernel(x_ref, w_ref, g_ref, b_ref, o_ref):
    x = x_ref[0].astype(jnp.float32)                              # (K, S)
    w = w_ref[...].astype(jnp.float32)                            # (Cout, K)
    y = jnp.dot(w, x, preferred_element_type=jnp.float32)         # MXU: (Cout, S)
    # InstanceNorm over the spatial axis (biased variance, as in PyTorch).
    mean = jnp.mean(y, axis=1, keepdims=True)
    yc = y - mean
    var = jnp.mean(yc * yc, axis=1, keepdims=True)
    yn = yc * jax.lax.rsqrt(var + _EPS)
    yn = yn * g_ref[...] + b_ref[...]
    # LeakyReLU epilogue fused before the only HBM store of this activation.
    o_ref[0] = jnp.where(yn >= 0, yn, _NEG_SLOPE * yn).astype(o_ref.dtype)


def _fused_conv_in_lrelu(cols, w_mat, gamma, beta):
    n, k, s = cols.shape
    c_out = w_mat.shape[0]
    # Zero-pad the contraction dim to a lane multiple (exact: zeros add nothing).
    kp = _round_up(k, _LANES)
    if kp != k:
        cols = jnp.pad(cols, ((0, 0), (0, kp - k), (0, 0)))
        w_mat = jnp.pad(w_mat, ((0, 0), (0, kp - k)))
    g2 = gamma.reshape(c_out, 1).astype(jnp.float32)
    b2 = beta.reshape(c_out, 1).astype(jnp.float32)

    return pl.pallas_call(
        _fused_conv_in_lrelu_kernel,
        out_shape=jax.ShapeDtypeStruct((n, c_out, s), cols.dtype),
        grid_spec=pltpu.PrefetchScalarGridSpec(
            num_scalar_prefetch=0,
            grid=(n,),  # one grid step per sample: whole (K, S) slab per step
            in_specs=[
                pl.BlockSpec((1, kp, s), lambda i: (i, 0, 0)),
                pl.BlockSpec((c_out, kp), lambda i: (0, 0)),
                pl.BlockSpec((c_out, 1), lambda i: (0, 0)),
                pl.BlockSpec((c_out, 1), lambda i: (0, 0)),
            ],
            out_specs=pl.BlockSpec((1, c_out, s), lambda i: (i, 0, 0)),
        ),
        compiler_params=pltpu.CompilerParams(
            dimension_semantics=("parallel",),       # megacore sharding of batch
            vmem_limit_bytes=32 * 1024 * 1024,       # safe on v5e/v6e/v7x
        ),
    )(cols, w_mat, g2, b2)


# ---------------------------------------------------------------------------
# Data-layout plumbing around the fused kernel (XLA side).
# ---------------------------------------------------------------------------
def _im2col_3x3x3(x, dilation):
    """27-tap im2col for a 'same' 3x3x3 conv with padding == dilation."""
    n, c, d, h, w = x.shape
    p = dilation
    xp = jnp.pad(x, ((0, 0), (0, 0), (p, p), (p, p), (p, p)))
    taps = []
    for kz in range(3):
        for ky in range(3):
            for kx in range(3):
                oz, oy, ox = kz * dilation, ky * dilation, kx * dilation
                taps.append(xp[:, :, oz:oz + d, oy:oy + h, ox:ox + w])
    col = jnp.stack(taps, axis=1)                    # (N, 27, C, D, H, W)
    return col.reshape(n, 27 * c, d * h * w)         # tap-major, then channel


def pallas_conv_norm_act(x, w, padding, dilation, gamma, beta):
    """Conv3d (bias-free, see header) + InstanceNorm3d + LeakyReLU via Pallas."""
    n, c_in, d, h, w_sp = x.shape
    c_out, k = w.shape[0], w.shape[2]
    s = d * h * w_sp
    if k == 1:
        cols = x.reshape(n, c_in, s)
        w_mat = w.reshape(c_out, c_in)
    else:
        assert k == 3 and padding == dilation, "module uses 'same' 3x3x3 convs"
        cols = _im2col_3x3x3(x, dilation)
        # w[co, ci, kz, ky, kx] -> w_mat[co, tap*C_in + ci]
        w_mat = jnp.transpose(w, (0, 2, 3, 4, 1)).reshape(c_out, 27 * c_in)
    y = _fused_conv_in_lrelu(cols, w_mat, gamma, beta)
    return y.reshape(n, c_out, d, h, w_sp)


def _maxpool3d_2x2x2(x):
    # TODO(synk): MaxPool3d(2, stride=2) left as a jnp reshape+max; the 2-wide
    # lane-pair reduction has no clean/profitable Pallas formulation here.
    n, c, d, h, w = x.shape
    return x.reshape(n, c, d // 2, 2, h // 2, 2, w // 2, 2).max(axis=(3, 5, 7))


# ---------------------------------------------------------------------------
# Module forward (structure shared between the Pallas path and the reference).
# ---------------------------------------------------------------------------
def _ic_conv3d_forward(x, p, conv_norm_act):
    """ICConv3d.forward (norm / nonlin shared across the three dilated convs)."""
    out1 = conv_norm_act(x, p["w1"], 1, 1, p["gamma"], p["beta"])
    res1 = jnp.concatenate([x, out1], axis=1)                     # cat((x, out_1))
    out2 = conv_norm_act(res1, p["w2"], 2, 2, p["gamma"], p["beta"])
    res2 = jnp.concatenate([out2, res1], axis=1)                  # cat((out_2, residual_1))
    out3 = conv_norm_act(res2, p["w3"], 3, 3, p["gamma"], p["beta"])
    cat = jnp.concatenate([res2, out3], axis=1)                   # cat((residual_2, out_3))
    return conv_norm_act(cat, p["w11"], 0, 1, p["gamma11"], p["beta11"])


def dense_down_layer_2_forward(x, params, conv_norm_act):
    """DenseDownLayer_2 with num_blocks=1 (a Sequential of >1 block would pass a
    tuple into the next block and fail in the reference PyTorch code as well)."""
    p = params
    out1 = _ic_conv3d_forward(x, p["ic1"], conv_norm_act)          # (N, C,  ...)
    cat1 = jnp.concatenate([out1, x], axis=1)                      # (N, 2C, ...)
    out = _ic_conv3d_forward(cat1, p["ic2"], conv_norm_act)        # (N, 2C, ...)
    cat2 = jnp.concatenate([out, x, out1], axis=1)                 # (N, 4C, ...)
    residual_out = conv_norm_act(cat2, p["w3"], 0, 1, p["gamma3"], p["beta3"])
    pooled = _maxpool3d_2x2x2(residual_out)
    return pooled, residual_out


# ---------------------------------------------------------------------------
# Pure-JAX reference (lax.conv_general_dilated + jnp norm/act) for validation.
# ---------------------------------------------------------------------------
def ref_conv_norm_act(x, w, padding, dilation, gamma, beta):
    y = jax.lax.conv_general_dilated(
        x, w, window_strides=(1, 1, 1),
        padding=[(padding, padding)] * 3,
        rhs_dilation=(dilation, dilation, dilation),
        dimension_numbers=("NCDHW", "OIDHW", "NCDHW"),
        precision=jax.lax.Precision.HIGHEST)
    mean = y.mean(axis=(2, 3, 4), keepdims=True)
    var = jnp.mean((y - mean) ** 2, axis=(2, 3, 4), keepdims=True)
    yn = (y - mean) * jax.lax.rsqrt(var + _EPS)
    yn = yn * gamma.reshape(1, -1, 1, 1, 1) + beta.reshape(1, -1, 1, 1, 1)
    return jnp.where(yn >= 0, yn, _NEG_SLOPE * yn)


# ---------------------------------------------------------------------------
# Parameter init.
# ---------------------------------------------------------------------------
def _init_icconv_params(key, inplanes, planes):
    ks = jax.random.split(key, 8)

    def conv_w(k, co, ci, ksz):
        return (jax.random.normal(k, (co, ci, ksz, ksz, ksz), jnp.float32)
                / jnp.sqrt(ci * ksz ** 3))

    return {
        "w1": conv_w(ks[0], planes, inplanes, 3),
        "w2": conv_w(ks[1], planes, inplanes + planes, 3),
        "w3": conv_w(ks[2], planes, inplanes + 2 * planes, 3),
        "w11": conv_w(ks[3], planes, inplanes + 3 * planes, 1),
        "gamma": 1.0 + 0.1 * jax.random.normal(ks[4], (planes,), jnp.float32),
        "beta": 0.1 * jax.random.normal(ks[5], (planes,), jnp.float32),
        "gamma11": 1.0 + 0.1 * jax.random.normal(ks[6], (planes,), jnp.float32),
        "beta11": 0.1 * jax.random.normal(ks[7], (planes,), jnp.float32),
    }


def init_dense_down_layer_params(key, in_planes):
    k1, k2, k3, k4, k5 = jax.random.split(key, 5)
    return {
        "ic1": _init_icconv_params(k1, in_planes, in_planes),
        "ic2": _init_icconv_params(k2, 2 * in_planes, 2 * in_planes),
        "w3": (jax.random.normal(k3, (2 * in_planes, 4 * in_planes, 1, 1, 1),
                                 jnp.float32) / jnp.sqrt(4 * in_planes)),
        "gamma3": 1.0 + 0.1 * jax.random.normal(k4, (2 * in_planes,), jnp.float32),
        "beta3": 0.1 * jax.random.normal(k5, (2 * in_planes,), jnp.float32),
    }


# ---------------------------------------------------------------------------
if __name__ == "__main__":
    key = jax.random.PRNGKey(0)
    kx, kp = jax.random.split(key)

    # Small NCDHW input consistent with the 3-D module:
    # batch=2, channels=4, spatial 8x8x8 (S = 512, lane-dense multiple of 128).
    N, C, D, H, W = 2, 4, 8, 8, 8
    x = jax.random.normal(kx, (N, C, D, H, W), jnp.float32)
    params = init_dense_down_layer_params(kp, C)

    fwd_pallas = jax.jit(
        lambda xx, pp: dense_down_layer_2_forward(xx, pp, pallas_conv_norm_act))
    fwd_ref = jax.jit(
        lambda xx, pp: dense_down_layer_2_forward(xx, pp, ref_conv_norm_act))

    pooled, residual = jax.block_until_ready(fwd_pallas(x, params))
    pooled_ref, residual_ref = jax.block_until_ready(fwd_ref(x, params))

    assert pooled.shape == (N, 2 * C, D // 2, H // 2, W // 2)
    assert residual.shape == (N, 2 * C, D, H, W)
    assert pooled.dtype == x.dtype and residual.dtype == x.dtype

    err_pool = float(jnp.max(jnp.abs(pooled - pooled_ref)))
    err_res = float(jnp.max(jnp.abs(residual - residual_ref)))
    assert err_pool < 2e-2 and err_res < 2e-2, (err_pool, err_res)

    print("KERNEL_OK")
</pallas_src>

<mosaic_0001>
module attributes {stable_mosaic.version = 11 : i64} {
  func.func @_fused_conv_in_lrelu_kernel(%arg0: i32, %arg1: memref<1x128x512xf32, #tpu.memory_space<vmem>>, %arg2: memref<4x128xf32, #tpu.memory_space<vmem>>, %arg3: memref<4x1xf32, #tpu.memory_space<vmem>>, %arg4: memref<4x1xf32, #tpu.memory_space<vmem>>, %arg5: memref<1x4x512xf32, #tpu.memory_space<vmem>>) attributes {dimension_semantics = [#tpu.dimension_semantics<parallel>], iteration_bounds = array<i64: 2>, scalar_prefetch = 0 : i64, scratch_operands = 0 : i64, tpu.core_type = #tpu.core_type<tc>, window_params = [{transform_indices = @transform_0, window_bounds = array<i64: 1, 128, 512>}, {pipeline_mode = #tpu.pipeline_mode<synchronous>, transform_indices = @transform_1, window_bounds = array<i64: 4, 128>}, {pipeline_mode = #tpu.pipeline_mode<synchronous>, transform_indices = @transform_2, window_bounds = array<i64: 4, 1>}, {pipeline_mode = #tpu.pipeline_mode<synchronous>, transform_indices = @transform_3, window_bounds = array<i64: 4, 1>}, {transform_indices = @transform_4, window_bounds = array<i64: 1, 4, 512>}]} {
    %c0 = arith.constant 0 : index
    %c0_0 = arith.constant 0 : index
    %c0_1 = arith.constant 0 : index
    %0 = vector.load %arg1[%c0, %c0_0, %c0_1] : memref<1x128x512xf32, #tpu.memory_space<vmem>>, vector<1x128x512xf32>
    %1 = vector.shape_cast %0 : vector<1x128x512xf32> to vector<128x512xf32>
    %c0_2 = arith.constant 0 : index
    %c0_3 = arith.constant 0 : index
    %2 = vector.load %arg2[%c0_2, %c0_3] : memref<4x128xf32, #tpu.memory_space<vmem>>, vector<4x128xf32>
    %cst = arith.constant dense<0.000000e+00> : vector<4x512xf32>
    %3 = tpu.matmul %2, %1, %cst {dimension_numbers = #tpu.dot_dimension_numbers<[1], [0], [0], [1], [0, 0, 1, 1], [], []>} : vector<4x128xf32>, vector<128x512xf32>, vector<4x512xf32> -> vector<4x512xf32>
    %cst_4 = arith.constant dense<0.000000e+00> : vector<4xf32>
    %4 = vector.multi_reduction <add>, %3, %cst_4 [1] : vector<4x512xf32> to vector<4xf32>
    %5 = vector.shape_cast %4 : vector<4xf32> to vector<4x1xf32>
    %cst_5 = arith.constant 5.120000e+02 : f32
    %6 = vector.broadcast %cst_5 : f32 to vector<4x1xf32>
    %7 = arith.divf %5, %6 : vector<4x1xf32>
    %8 = vector.broadcast %7 : vector<4x1xf32> to vector<4x512xf32>
    %9 = arith.subf %3, %8 : vector<4x512xf32>
    %10 = arith.mulf %9, %9 : vector<4x512xf32>
    %cst_6 = arith.constant dense<0.000000e+00> : vector<4xf32>
    %11 = vector.multi_reduction <add>, %10, %cst_6 [1] : vector<4x512xf32> to vector<4xf32>
    %12 = vector.shape_cast %11 : vector<4xf32> to vector<4x1xf32>
    %cst_7 = arith.constant 5.120000e+02 : f32
    %13 = vector.broadcast %cst_7 : f32 to vector<4x1xf32>
    %14 = arith.divf %12, %13 : vector<4x1xf32>
    %cst_8 = arith.constant 9.99999974E-6 : f32
    %15 = vector.broadcast %cst_8 : f32 to vector<4x1xf32>
    %16 = arith.addf %14, %15 : vector<4x1xf32>
    %17 = math.rsqrt %16 : vector<4x1xf32>
    %18 = vector.broadcast %17 : vector<4x1xf32> to vector<4x512xf32>
    %19 = arith.mulf %9, %18 : vector<4x512xf32>
    %c0_9 = arith.constant 0 : index
    %c0_10 = arith.constant 0 : index
    %20 = vector.load %arg3[%c0_9, %c0_10] : memref<4x1xf32, #tpu.memory_space<vmem>>, vector<4x1xf32>
    %21 = vector.broadcast %20 : vector<4x1xf32> to vector<4x512xf32>
    %22 = arith.mulf %19, %21 : vector<4x512xf32>
    %c0_11 = arith.constant 0 : index
    %c0_12 = arith.constant 0 : index
    %23 = vector.load %arg4[%c0_11, %c0_12] : memref<4x1xf32, #tpu.memory_space<vmem>>, vector<4x1xf32>
    %24 = vector.broadcast %23 : vector<4x1xf32> to vector<4x512xf32>
    %25 = arith.addf %22, %24 : vector<4x512xf32>
    %cst_13 = arith.constant 0.000000e+00 : f32
    %26 = vector.broadcast %cst_13 : f32 to vector<4x512xf32>
    %27 = arith.cmpf oge, %25, %26 : vector<4x512xf32>
    %cst_14 = arith.constant 0.00999999977 : f32
    %28 = vector.broadcast %cst_14 : f32 to vector<4x512xf32>
    %29 = arith.mulf %28, %25 : vector<4x512xf32>
    %30 = arith.select %27, %25, %29 : vector<4x512xi1>, vector<4x512xf32>
    %c0_15 = arith.constant 0 : index
    %c0_16 = arith.constant 0 : index
    %c0_17 = arith.constant 0 : index
    %31 = vector.load %arg5[%c0_15, %c0_16, %c0_17] : memref<1x4x512xf32, #tpu.memory_space<vmem>>, vector<1x4x512xf32>
    %32 = vector.shape_cast %31 : vector<1x4x512xf32> to vector<4x512xf32>
    %33 = vector.shape_cast %30 : vector<4x512xf32> to vector<1x4x512xf32>
    tpu.vector_store %arg5[%c0_15, %c0_16, %c0_17], %33 {strides = array<i32>} : memref<1x4x512xf32, #tpu.memory_space<vmem>>, vector<1x4x512xf32>,
    return
  }
  func.func @transform_0(%arg0: i32) -> (i32, i32, i32) {
    %c0_i32 = arith.constant 0 : i32
    %c0_i32_0 = arith.constant 0 : i32
    %c0_i32_1 = arith.constant 0 : i32
    return %arg0, %c0_i32, %c0_i32_0 : i32, i32, i32
  }
  func.func @transform_1(%arg0: i32) -> (i32, i32) {
    %c0_i32 = arith.constant 0 : i32
    %c0_i32_0 = arith.constant 0 : i32
    %c0_i32_1 = arith.constant 0 : i32
    return %c0_i32, %c0_i32_0 : i32, i32
  }
  func.func @transform_2(%arg0: i32) -> (i32, i32) {
    %c0_i32 = arith.constant 0 : i32
    %c0_i32_0 = arith.constant 0 : i32
    %c0_i32_1 = arith.constant 0 : i32
    return %c0_i32, %c0_i32_0 : i32, i32
  }
  func.func @transform_3(%arg0: i32) -> (i32, i32) {
    %c0_i32 = arith.constant 0 : i32
    %c0_i32_0 = arith.constant 0 : i32
    %c0_i32_1 = arith.constant 0 : i32
    return %c0_i32, %c0_i32_0 : i32, i32
  }
  func.func @transform_4(%arg0: i32) -> (i32, i32, i32) {
    %c0_i32 = arith.constant 0 : i32
    %c0_i32_0 = arith.constant 0 : i32
    %c0_i32_1 = arith.constant 0 : i32
    return %arg0, %c0_i32, %c0_i32_0 : i32, i32, i32
  }
}

module attributes {stable_mosaic.version = 11 : i64} {
  func.func @_fused_conv_in_lrelu_kernel(%arg0: i32, %arg1: memref<1x256x512xf32, #tpu.memory_space<vmem>>, %arg2: memref<4x256xf32, #tpu.memory_space<vmem>>, %arg3: memref<4x1xf32, #tpu.memory_space<vmem>>, %arg4: memref<4x1xf32, #tpu.memory_space<vmem>>, %arg5: memref<1x4x512xf32, #tpu.memory_space<vmem>>) attributes {dimension_semantics = [#tpu.dimension_semantics<parallel>], iteration_bounds = array<i64: 2>, scalar_prefetch = 0 : i64, scratch_operands = 0 : i64, tpu.core_type = #tpu.core_type<tc>, window_params = [{transform_indices = @transform_0, window_bounds = array<i64: 1, 256, 512>}, {pipeline_mode = #tpu.pipeline_mode<synchronous>, transform_indices = @transform_1, window_bounds = array<i64: 4, 256>}, {pipeline_mode = #tpu.pipeline_mode<synchronous>, transform_indices = @transform_2, window_bounds = array<i64: 4, 1>}, {pipeline_mode = #tpu.pipeline_mode<synchronous>, transform_indices = @transform_3, window_bounds = array<i64: 4, 1>}, {transform_indices = @transform_4, window_bounds = array<i64: 1, 4, 512>}]} {
    %c0 = arith.constant 0 : index
    %c0_0 = arith.constant 0 : index
    %c0_1 = arith.constant 0 : index
    %0 = vector.load %arg1[%c0, %c0_0, %c0_1] : memref<1x256x512xf32, #tpu.memory_space<vmem>>, vector<1x256x512xf32>
    %1 = vector.shape_cast %0 : vector<1x256x512xf32> to vector<256x512xf32>
    %c0_2 = arith.constant 0 : index
    %c0_3 = arith.constant 0 : index
    %2 = vector.load %arg2[%c0_2, %c0_3] : memref<4x256xf32, #tpu.memory_space<vmem>>, vector<4x256xf32>
    %cst = arith.constant dense<0.000000e+00> : vector<4x512xf32>
    %3 = tpu.matmul %2, %1, %cst {dimension_numbers = #tpu.dot_dimension_numbers<[1], [0], [0], [1], [0, 0, 1, 1], [], []>} : vector<4x256xf32>, vector<256x512xf32>, vector<4x512xf32> -> vector<4x512xf32>
    %cst_4 = arith.constant dense<0.000000e+00> : vector<4xf32>
    %4 = vector.multi_reduction <add>, %3, %cst_4 [1] : vector<4x512xf32> to vector<4xf32>
    %5 = vector.shape_cast %4 : vector<4xf32> to vector<4x1xf32>
    %cst_5 = arith.constant 5.120000e+02 : f32
    %6 = vector.broadcast %cst_5 : f32 to vector<4x1xf32>
    %7 = arith.divf %5, %6 : vector<4x1xf32>
    %8 = vector.broadcast %7 : vector<4x1xf32> to vector<4x512xf32>
    %9 = arith.subf %3, %8 : vector<4x512xf32>
    %10 = arith.mulf %9, %9 : vector<4x512xf32>
    %cst_6 = arith.constant dense<0.000000e+00> : vector<4xf32>
    %11 = vector.multi_reduction <add>, %10, %cst_6 [1] : vector<4x512xf32> to vector<4xf32>
    %12 = vector.shape_cast %11 : vector<4xf32> to vector<4x1xf32>
    %cst_7 = arith.constant 5.120000e+02 : f32
    %13 = vector.broadcast %cst_7 : f32 to vector<4x1xf32>
    %14 = arith.divf %12, %13 : vector<4x1xf32>
    %cst_8 = arith.constant 9.99999974E-6 : f32
    %15 = vector.broadcast %cst_8 : f32 to vector<4x1xf32>
    %16 = arith.addf %14, %15 : vector<4x1xf32>
    %17 = math.rsqrt %16 : vector<4x1xf32>
    %18 = vector.broadcast %17 : vector<4x1xf32> to vector<4x512xf32>
    %19 = arith.mulf %9, %18 : vector<4x512xf32>
    %c0_9 = arith.constant 0 : index
    %c0_10 = arith.constant 0 : index
    %20 = vector.load %arg3[%c0_9, %c0_10] : memref<4x1xf32, #tpu.memory_space<vmem>>, vector<4x1xf32>
    %21 = vector.broadcast %20 : vector<4x1xf32> to vector<4x512xf32>
    %22 = arith.mulf %19, %21 : vector<4x512xf32>
    %c0_11 = arith.constant 0 : index
    %c0_12 = arith.constant 0 : index
    %23 = vector.load %arg4[%c0_11, %c0_12] : memref<4x1xf32, #tpu.memory_space<vmem>>, vector<4x1xf32>
    %24 = vector.broadcast %23 : vector<4x1xf32> to vector<4x512xf32>
    %25 = arith.addf %22, %24 : vector<4x512xf32>
    %cst_13 = arith.constant 0.000000e+00 : f32
    %26 = vector.broadcast %cst_13 : f32 to vector<4x512xf32>
    %27 = arith.cmpf oge, %25, %26 : vector<4x512xf32>
    %cst_14 = arith.constant 0.00999999977 : f32
    %28 = vector.broadcast %cst_14 : f32 to vector<4x512xf32>
    %29 = arith.mulf %28, %25 : vector<4x512xf32>
    %30 = arith.select %27, %25, %29 : vector<4x512xi1>, vector<4x512xf32>
    %c0_15 = arith.constant 0 : index
    %c0_16 = arith.constant 0 : index
    %c0_17 = arith.constant 0 : index
    %31 = vector.load %arg5[%c0_15, %c0_16, %c0_17] : memref<1x4x512xf32, #tpu.memory_space<vmem>>, vector<1x4x512xf32>
    %32 = vector.shape_cast %31 : vector<1x4x512xf32> to vector<4x512xf32>
    %33 = vector.shape_cast %30 : vector<4x512xf32> to vector<1x4x512xf32>
    tpu.vector_store %arg5[%c0_15, %c0_16, %c0_17], %33 {strides = array<i32>} : memref<1x4x512xf32, #tpu.memory_space<vmem>>, vector<1x4x512xf32>,
    return
  }
  func.func @transform_0(%arg0: i32) -> (i32, i32, i32) {
    %c0_i32 = arith.constant 0 : i32
    %c0_i32_0 = arith.constant 0 : i32
    %c0_i32_1 = arith.constant 0 : i32
    return %arg0, %c0_i32, %c0_i32_0 : i32, i32, i32
  }
  func.func @transform_1(%arg0: i32) -> (i32, i32) {
    %c0_i32 = arith.constant 0 : i32
    %c0_i32_0 = arith.constant 0 : i32
    %c0_i32_1 = arith.constant 0 : i32
    return %c0_i32, %c0_i32_0 : i32, i32
  }
  func.func @transform_2(%arg0: i32) -> (i32, i32) {
    %c0_i32 = arith.constant 0 : i32
    %c0_i32_0 = arith.constant 0 : i32
    %c0_i32_1 = arith.constant 0 : i32
    return %c0_i32, %c0_i32_0 : i32, i32
  }
  func.func @transform_3(%arg0: i32) -> (i32, i32) {
    %c0_i32 = arith.constant 0 : i32
    %c0_i32_0 = arith.constant 0 : i32
    %c0_i32_1 = arith.constant 0 : i32
    return %c0_i32, %c0_i32_0 : i32, i32
  }
  func.func @transform_4(%arg0: i32) -> (i32, i32, i32) {
    %c0_i32 = arith.constant 0 : i32
    %c0_i32_0 = arith.constant 0 : i32
    %c0_i32_1 = arith.constant 0 : i32
    return %arg0, %c0_i32, %c0_i32_0 : i32, i32, i32
  }
}

module attributes {stable_mosaic.version = 11 : i64} {
  func.func @_fused_conv_in_lrelu_kernel(%arg0: i32, %arg1: memref<1x384x512xf32, #tpu.memory_space<vmem>>, %arg2: memref<4x384xf32, #tpu.memory_space<vmem>>, %arg3: memref<4x1xf32, #tpu.memory_space<vmem>>, %arg4: memref<4x1xf32, #tpu.memory_space<vmem>>, %arg5: memref<1x4x512xf32, #tpu.memory_space<vmem>>) attributes {dimension_semantics = [#tpu.dimension_semantics<parallel>], iteration_bounds = array<i64: 2>, scalar_prefetch = 0 : i64, scratch_operands = 0 : i64, tpu.core_type = #tpu.core_type<tc>, window_params = [{transform_indices = @transform_0, window_bounds = array<i64: 1, 384, 512>}, {pipeline_mode = #tpu.pipeline_mode<synchronous>, transform_indices = @transform_1, window_bounds = array<i64: 4, 384>}, {pipeline_mode = #tpu.pipeline_mode<synchronous>, transform_indices = @transform_2, window_bounds = array<i64: 4, 1>}, {pipeline_mode = #tpu.pipeline_mode<synchronous>, transform_indices = @transform_3, window_bounds = array<i64: 4, 1>}, {transform_indices = @transform_4, window_bounds = array<i64: 1, 4, 512>}]} {
    %c0 = arith.constant 0 : index
    %c0_0 = arith.constant 0 : index
    %c0_1 = arith.constant 0 : index
    %0 = vector.load %arg1[%c0, %c0_0, %c0_1] : memref<1x384x512xf32, #tpu.memory_space<vmem>>, vector<1x384x512xf32>
    %1 = vector.shape_cast %0 : vector<1x384x512xf32> to vector<384x512xf32>
    %c0_2 = arith.constant 0 : index
    %c0_3 = arith.constant 0 : index
    %2 = vector.load %arg2[%c0_2, %c0_3] : memref<4x384xf32, #tpu.memory_space<vmem>>, vector<4x384xf32>
    %cst = arith.constant dense<0.000000e+00> : vector<4x512xf32>
    %3 = tpu.matmul %2, %1, %cst {dimension_numbers = #tpu.dot_dimension_numbers<[1], [0], [0], [1], [0, 0, 1, 1], [], []>} : vector<4x384xf32>, vector<384x512xf32>, vector<4x512xf32> -> vector<4x512xf32>
    %cst_4 = arith.constant dense<0.000000e+00> : vector<4xf32>
    %4 = vector.multi_reduction <add>, %3, %cst_4 [1] : vector<4x512xf32> to vector<4xf32>
    %5 = vector.shape_cast %4 : vector<4xf32> to vector<4x1xf32>
    %cst_5 = arith.constant 5.120000e+02 : f32
    %6 = vector.broadcast %cst_5 : f32 to vector<4x1xf32>
    %7 = arith.divf %5, %6 : vector<4x1xf32>
    %8 = vector.broadcast %7 : vector<4x1xf32> to vector<4x512xf32>
    %9 = arith.subf %3, %8 : vector<4x512xf32>
    %10 = arith.mulf %9, %9 : vector<4x512xf32>
    %cst_6 = arith.constant dense<0.000000e+00> : vector<4xf32>
    %11 = vector.multi_reduction <add>, %10, %cst_6 [1] : vector<4x512xf32> to vector<4xf32>
    %12 = vector.shape_cast %11 : vector<4xf32> to vector<4x1xf32>
    %cst_7 = arith.constant 5.120000e+02 : f32
    %13 = vector.broadcast %cst_7 : f32 to vector<4x1xf32>
    %14 = arith.divf %12, %13 : vector<4x1xf32>
    %cst_8 = arith.constant 9.99999974E-6 : f32
    %15 = vector.broadcast %cst_8 : f32 to vector<4x1xf32>
    %16 = arith.addf %14, %15 : vector<4x1xf32>
    %17 = math.rsqrt %16 : vector<4x1xf32>
    %18 = vector.broadcast %17 : vector<4x1xf32> to vector<4x512xf32>
    %19 = arith.mulf %9, %18 : vector<4x512xf32>
    %c0_9 = arith.constant 0 : index
    %c0_10 = arith.constant 0 : index
    %20 = vector.load %arg3[%c0_9, %c0_10] : memref<4x1xf32, #tpu.memory_space<vmem>>, vector<4x1xf32>
    %21 = vector.broadcast %20 : vector<4x1xf32> to vector<4x512xf32>
    %22 = arith.mulf %19, %21 : vector<4x512xf32>
    %c0_11 = arith.constant 0 : index
    %c0_12 = arith.constant 0 : index
    %23 = vector.load %arg4[%c0_11, %c0_12] : memref<4x1xf32, #tpu.memory_space<vmem>>, vector<4x1xf32>
    %24 = vector.broadcast %23 : vector<4x1xf32> to vector<4x512xf32>
    %25 = arith.addf %22, %24 : vector<4x512xf32>
    %cst_13 = arith.constant 0.000000e+00 : f32
    %26 = vector.broadcast %cst_13 : f32 to vector<4x512xf32>
    %27 = arith.cmpf oge, %25, %26 : vector<4x512xf32>
    %cst_14 = arith.constant 0.00999999977 : f32
    %28 = vector.broadcast %cst_14 : f32 to vector<4x512xf32>
    %29 = arith.mulf %28, %25 : vector<4x512xf32>
    %30 = arith.select %27, %25, %29 : vector<4x512xi1>, vector<4x512xf32>
    %c0_15 = arith.constant 0 : index
    %c0_16 = arith.constant 0 : index
    %c0_17 = arith.constant 0 : index
    %31 = vector.load %arg5[%c0_15, %c0_16, %c0_17] : memref<1x4x512xf32, #tpu.memory_space<vmem>>, vector<1x4x512xf32>
    %32 = vector.shape_cast %31 : vector<1x4x512xf32> to vector<4x512xf32>
    %33 = vector.shape_cast %30 : vector<4x512xf32> to vector<1x4x512xf32>
    tpu.vector_store %arg5[%c0_15, %c0_16, %c0_17], %33 {strides = array<i32>} : memref<1x4x512xf32, #tpu.memory_space<vmem>>, vector<1x4x512xf32>,
    return
  }
  func.func @transform_0(%arg0: i32) -> (i32, i32, i32) {
    %c0_i32 = arith.constant 0 : i32
    %c0_i32_0 = arith.constant 0 : i32
    %c0_i32_1 = arith.constant 0 : i32
    return %arg0, %c0_i32, %c0_i32_0 : i32, i32, i32
  }
  func.func @transform_1(%arg0: i32) -> (i32, i32) {
    %c0_i32 = arith.constant 0 : i32
    %c0_i32_0 = arith.constant 0 : i32
    %c0_i32_1 = arith.constant 0 : i32
    return %c0_i32, %c0_i32_0 : i32, i32
  }
  func.func @transform_2(%arg0: i32) -> (i32, i32) {
    %c0_i32 = arith.constant 0 : i32
    %c0_i32_0 = arith.constant 0 : i32
    %c0_i32_1 = arith.constant 0 : i32
    return %c0_i32, %c0_i32_0 : i32, i32
  }
  func.func @transform_3(%arg0: i32) -> (i32, i32) {
    %c0_i32 = arith.constant 0 : i32
    %c0_i32_0 = arith.constant 0 : i32
    %c0_i32_1 = arith.constant 0 : i32
    return %c0_i32, %c0_i32_0 : i32, i32
  }
  func.func @transform_4(%arg0: i32) -> (i32, i32, i32) {
    %c0_i32 = arith.constant 0 : i32
    %c0_i32_0 = arith.constant 0 : i32
    %c0_i32_1 = arith.constant 0 : i32
    return %arg0, %c0_i32, %c0_i32_0 : i32, i32, i32
  }
}

module attributes {stable_mosaic.version = 11 : i64} {
  func.func @_fused_conv_in_lrelu_kernel(%arg0: i32, %arg1: memref<1x256x512xf32, #tpu.memory_space<vmem>>, %arg2: memref<8x256xf32, #tpu.memory_space<vmem>>, %arg3: memref<8x1xf32, #tpu.memory_space<vmem>>, %arg4: memref<8x1xf32, #tpu.memory_space<vmem>>, %arg5: memref<1x8x512xf32, #tpu.memory_space<vmem>>) attributes {dimension_semantics = [#tpu.dimension_semantics<parallel>], iteration_bounds = array<i64: 2>, scalar_prefetch = 0 : i64, scratch_operands = 0 : i64, tpu.core_type = #tpu.core_type<tc>, window_params = [{transform_indices = @transform_0, window_bounds = array<i64: 1, 256, 512>}, {pipeline_mode = #tpu.pipeline_mode<synchronous>, transform_indices = @transform_1, window_bounds = array<i64: 8, 256>}, {pipeline_mode = #tpu.pipeline_mode<synchronous>, transform_indices = @transform_2, window_bounds = array<i64: 8, 1>}, {pipeline_mode = #tpu.pipeline_mode<synchronous>, transform_indices = @transform_3, window_bounds = array<i64: 8, 1>}, {transform_indices = @transform_4, window_bounds = array<i64: 1, 8, 512>}]} {
    %c0 = arith.constant 0 : index
    %c0_0 = arith.constant 0 : index
    %c0_1 = arith.constant 0 : index
    %0 = vector.load %arg1[%c0, %c0_0, %c0_1] : memref<1x256x512xf32, #tpu.memory_space<vmem>>, vector<1x256x512xf32>
    %1 = vector.shape_cast %0 : vector<1x256x512xf32> to vector<256x512xf32>
    %c0_2 = arith.constant 0 : index
    %c0_3 = arith.constant 0 : index
    %2 = vector.load %arg2[%c0_2, %c0_3] : memref<8x256xf32, #tpu.memory_space<vmem>>, vector<8x256xf32>
    %cst = arith.constant dense<0.000000e+00> : vector<8x512xf32>
    %3 = tpu.matmul %2, %1, %cst {dimension_numbers = #tpu.dot_dimension_numbers<[1], [0], [0], [1], [0, 0, 1, 1], [], []>} : vector<8x256xf32>, vector<256x512xf32>, vector<8x512xf32> -> vector<8x512xf32>
    %cst_4 = arith.constant dense<0.000000e+00> : vector<8xf32>
    %4 = vector.multi_reduction <add>, %3, %cst_4 [1] : vector<8x512xf32> to vector<8xf32>
    %5 = vector.shape_cast %4 : vector<8xf32> to vector<8x1xf32>
    %cst_5 = arith.constant 5.120000e+02 : f32
    %6 = vector.broadcast %cst_5 : f32 to vector<8x1xf32>
    %7 = arith.divf %5, %6 : vector<8x1xf32>
    %8 = vector.broadcast %7 : vector<8x1xf32> to vector<8x512xf32>
    %9 = arith.subf %3, %8 : vector<8x512xf32>
    %10 = arith.mulf %9, %9 : vector<8x512xf32>
    %cst_6 = arith.constant dense<0.000000e+00> : vector<8xf32>
    %11 = vector.multi_reduction <add>, %10, %cst_6 [1] : vector<8x512xf32> to vector<8xf32>
    %12 = vector.shape_cast %11 : vector<8xf32> to vector<8x1xf32>
    %cst_7 = arith.constant 5.120000e+02 : f32
    %13 = vector.broadcast %cst_7 : f32 to vector<8x1xf32>
    %14 = arith.divf %12, %13 : vector<8x1xf32>
    %cst_8 = arith.constant 9.99999974E-6 : f32
    %15 = vector.broadcast %cst_8 : f32 to vector<8x1xf32>
    %16 = arith.addf %14, %15 : vector<8x1xf32>
    %17 = math.rsqrt %16 : vector<8x1xf32>
    %18 = vector.broadcast %17 : vector<8x1xf32> to vector<8x512xf32>
    %19 = arith.mulf %9, %18 : vector<8x512xf32>
    %c0_9 = arith.constant 0 : index
    %c0_10 = arith.constant 0 : index
    %20 = vector.load %arg3[%c0_9, %c0_10] : memref<8x1xf32, #tpu.memory_space<vmem>>, vector<8x1xf32>
    %21 = vector.broadcast %20 : vector<8x1xf32> to vector<8x512xf32>
    %22 = arith.mulf %19, %21 : vector<8x512xf32>
    %c0_11 = arith.constant 0 : index
    %c0_12 = arith.constant 0 : index
    %23 = vector.load %arg4[%c0_11, %c0_12] : memref<8x1xf32, #tpu.memory_space<vmem>>, vector<8x1xf32>
    %24 = vector.broadcast %23 : vector<8x1xf32> to vector<8x512xf32>
    %25 = arith.addf %22, %24 : vector<8x512xf32>
    %cst_13 = arith.constant 0.000000e+00 : f32
    %26 = vector.broadcast %cst_13 : f32 to vector<8x512xf32>
    %27 = arith.cmpf oge, %25, %26 : vector<8x512xf32>
    %cst_14 = arith.constant 0.00999999977 : f32
    %28 = vector.broadcast %cst_14 : f32 to vector<8x512xf32>
    %29 = arith.mulf %28, %25 : vector<8x512xf32>
    %30 = arith.select %27, %25, %29 : vector<8x512xi1>, vector<8x512xf32>
    %c0_15 = arith.constant 0 : index
    %c0_16 = arith.constant 0 : index
    %c0_17 = arith.constant 0 : index
    %31 = vector.load %arg5[%c0_15, %c0_16, %c0_17] : memref<1x8x512xf32, #tpu.memory_space<vmem>>, vector<1x8x512xf32>
    %32 = vector.shape_cast %31 : vector<1x8x512xf32> to vector<8x512xf32>
    %33 = vector.shape_cast %30 : vector<8x512xf32> to vector<1x8x512xf32>
    tpu.vector_store %arg5[%c0_15, %c0_16, %c0_17], %33 {strides = array<i32>} : memref<1x8x512xf32, #tpu.memory_space<vmem>>, vector<1x8x512xf32>,
    return
  }
  func.func @transform_0(%arg0: i32) -> (i32, i32, i32) {
    %c0_i32 = arith.constant 0 : i32
    %c0_i32_0 = arith.constant 0 : i32
    %c0_i32_1 = arith.constant 0 : i32
    return %arg0, %c0_i32, %c0_i32_0 : i32, i32, i32
  }
  func.func @transform_1(%arg0: i32) -> (i32, i32) {
    %c0_i32 = arith.constant 0 : i32
    %c0_i32_0 = arith.constant 0 : i32
    %c0_i32_1 = arith.constant 0 : i32
    return %c0_i32, %c0_i32_0 : i32, i32
  }
  func.func @transform_2(%arg0: i32) -> (i32, i32) {
    %c0_i32 = arith.constant 0 : i32
    %c0_i32_0 = arith.constant 0 : i32
    %c0_i32_1 = arith.constant 0 : i32
    return %c0_i32, %c0_i32_0 : i32, i32
  }
  func.func @transform_3(%arg0: i32) -> (i32, i32) {
    %c0_i32 = arith.constant 0 : i32
    %c0_i32_0 = arith.constant 0 : i32
    %c0_i32_1 = arith.constant 0 : i32
    return %c0_i32, %c0_i32_0 : i32, i32
  }
  func.func @transform_4(%arg0: i32) -> (i32, i32, i32) {
    %c0_i32 = arith.constant 0 : i32
    %c0_i32_0 = arith.constant 0 : i32
    %c0_i32_1 = arith.constant 0 : i32
    return %arg0, %c0_i32, %c0_i32_0 : i32, i32, i32
  }
}

module attributes {stable_mosaic.version = 11 : i64} {
  func.func @_fused_conv_in_lrelu_kernel(%arg0: i32, %arg1: memref<1x512x512xf32, #tpu.memory_space<vmem>>, %arg2: memref<8x512xf32, #tpu.memory_space<vmem>>, %arg3: memref<8x1xf32, #tpu.memory_space<vmem>>, %arg4: memref<8x1xf32, #tpu.memory_space<vmem>>, %arg5: memref<1x8x512xf32, #tpu.memory_space<vmem>>) attributes {dimension_semantics = [#tpu.dimension_semantics<parallel>], iteration_bounds = array<i64: 2>, scalar_prefetch = 0 : i64, scratch_operands = 0 : i64, tpu.core_type = #tpu.core_type<tc>, window_params = [{transform_indices = @transform_0, window_bounds = array<i64: 1, 512, 512>}, {pipeline_mode = #tpu.pipeline_mode<synchronous>, transform_indices = @transform_1, window_bounds = array<i64: 8, 512>}, {pipeline_mode = #tpu.pipeline_mode<synchronous>, transform_indices = @transform_2, window_bounds = array<i64: 8, 1>}, {pipeline_mode = #tpu.pipeline_mode<synchronous>, transform_indices = @transform_3, window_bounds = array<i64: 8, 1>}, {transform_indices = @transform_4, window_bounds = array<i64: 1, 8, 512>}]} {
    %c0 = arith.constant 0 : index
    %c0_0 = arith.constant 0 : index
    %c0_1 = arith.constant 0 : index
    %0 = vector.load %arg1[%c0, %c0_0, %c0_1] : memref<1x512x512xf32, #tpu.memory_space<vmem>>, vector<1x512x512xf32>
    %1 = vector.shape_cast %0 : vector<1x512x512xf32> to vector<512x512xf32>
    %c0_2 = arith.constant 0 : index
    %c0_3 = arith.constant 0 : index
    %2 = vector.load %arg2[%c0_2, %c0_3] : memref<8x512xf32, #tpu.memory_space<vmem>>, vector<8x512xf32>
    %cst = arith.constant dense<0.000000e+00> : vector<8x512xf32>
    %3 = tpu.matmul %2, %1, %cst {dimension_numbers = #tpu.dot_dimension_numbers<[1], [0], [0], [1], [0, 0, 1, 1], [], []>} : vector<8x512xf32>, vector<512x512xf32>, vector<8x512xf32> -> vector<8x512xf32>
    %cst_4 = arith.constant dense<0.000000e+00> : vector<8xf32>
    %4 = vector.multi_reduction <add>, %3, %cst_4 [1] : vector<8x512xf32> to vector<8xf32>
    %5 = vector.shape_cast %4 : vector<8xf32> to vector<8x1xf32>
    %cst_5 = arith.constant 5.120000e+02 : f32
    %6 = vector.broadcast %cst_5 : f32 to vector<8x1xf32>
    %7 = arith.divf %5, %6 : vector<8x1xf32>
    %8 = vector.broadcast %7 : vector<8x1xf32> to vector<8x512xf32>
    %9 = arith.subf %3, %8 : vector<8x512xf32>
    %10 = arith.mulf %9, %9 : vector<8x512xf32>
    %cst_6 = arith.constant dense<0.000000e+00> : vector<8xf32>
    %11 = vector.multi_reduction <add>, %10, %cst_6 [1] : vector<8x512xf32> to vector<8xf32>
    %12 = vector.shape_cast %11 : vector<8xf32> to vector<8x1xf32>
    %cst_7 = arith.constant 5.120000e+02 : f32
    %13 = vector.broadcast %cst_7 : f32 to vector<8x1xf32>
    %14 = arith.divf %12, %13 : vector<8x1xf32>
    %cst_8 = arith.constant 9.99999974E-6 : f32
    %15 = vector.broadcast %cst_8 : f32 to vector<8x1xf32>
    %16 = arith.addf %14, %15 : vector<8x1xf32>
    %17 = math.rsqrt %16 : vector<8x1xf32>
    %18 = vector.broadcast %17 : vector<8x1xf32> to vector<8x512xf32>
    %19 = arith.mulf %9, %18 : vector<8x512xf32>
    %c0_9 = arith.constant 0 : index
    %c0_10 = arith.constant 0 : index
    %20 = vector.load %arg3[%c0_9, %c0_10] : memref<8x1xf32, #tpu.memory_space<vmem>>, vector<8x1xf32>
    %21 = vector.broadcast %20 : vector<8x1xf32> to vector<8x512xf32>
    %22 = arith.mulf %19, %21 : vector<8x512xf32>
    %c0_11 = arith.constant 0 : index
    %c0_12 = arith.constant 0 : index
    %23 = vector.load %arg4[%c0_11, %c0_12] : memref<8x1xf32, #tpu.memory_space<vmem>>, vector<8x1xf32>
    %24 = vector.broadcast %23 : vector<8x1xf32> to vector<8x512xf32>
    %25 = arith.addf %22, %24 : vector<8x512xf32>
    %cst_13 = arith.constant 0.000000e+00 : f32
    %26 = vector.broadcast %cst_13 : f32 to vector<8x512xf32>
    %27 = arith.cmpf oge, %25, %26 : vector<8x512xf32>
    %cst_14 = arith.constant 0.00999999977 : f32
    %28 = vector.broadcast %cst_14 : f32 to vector<8x512xf32>
    %29 = arith.mulf %28, %25 : vector<8x512xf32>
    %30 = arith.select %27, %25, %29 : vector<8x512xi1>, vector<8x512xf32>
    %c0_15 = arith.constant 0 : index
    %c0_16 = arith.constant 0 : index
    %c0_17 = arith.constant 0 : index
    %31 = vector.load %arg5[%c0_15, %c0_16, %c0_17] : memref<1x8x512xf32, #tpu.memory_space<vmem>>, vector<1x8x512xf32>
    %32 = vector.shape_cast %31 : vector<1x8x512xf32> to vector<8x512xf32>
    %33 = vector.shape_cast %30 : vector<8x512xf32> to vector<1x8x512xf32>
    tpu.vector_store %arg5[%c0_15, %c0_16, %c0_17], %33 {strides = array<i32>} : memref<1x8x512xf32, #tpu.memory_space<vmem>>, vector<1x8x512xf32>,
    return
  }
  func.func @transform_0(%arg0: i32) -> (i32, i32, i32) {
    %c0_i32 = arith.constant 0 : i32
    %c0_i32_0 = arith.constant 0 : i32
    %c0_i32_1 = arith.constant 0 : i32
    return %arg0, %c0_i32, %c0_i32_0 : i32, i32, i32
  }
  func.func @transform_1(%arg0: i32) -> (i32, i32) {
    %c0_i32 = arith.constant 0 : i32
    %c0_i32_0 = arith.constant 0 : i32
    %c0_i32_1 = arith.constant 0 : i32
    return %c0_i32, %c0_i32_0 : i32, i32
  }
  func.func @transform_2(%arg0: i32) -> (i32, i32) {
    %c0_i32 = arith.constant 0 : i32
    %c0_i32_0 = arith.constant 0 : i32
    %c0_i32_1 = arith.constant 0 : i32
    return %c0_i32, %c0_i32_0 : i32, i32
  }
  func.func @transform_3(%arg0: i32) -> (i32, i32) {
    %c0_i32 = arith.constant 0 : i32
    %c0_i32_0 = arith.constant 0 : i32
    %c0_i32_1 = arith.constant 0 : i32
    return %c0_i32, %c0_i32_0 : i32, i32
  }
  func.func @transform_4(%arg0: i32) -> (i32, i32, i32) {
    %c0_i32 = arith.constant 0 : i32
    %c0_i32_0 = arith.constant 0 : i32
    %c0_i32_1 = arith.constant 0 : i32
    return %arg0, %c0_i32, %c0_i32_0 : i32, i32, i32
  }
}

module attributes {stable_mosaic.version = 11 : i64} {
  func.func @_fused_conv_in_lrelu_kernel(%arg0: i32, %arg1: memref<1x768x512xf32, #tpu.memory_space<vmem>>, %arg2: memref<8x768xf32, #tpu.memory_space<vmem>>, %arg3: memref<8x1xf32, #tpu.memory_space<vmem>>, %arg4: memref<8x1xf32, #tpu.memory_space<vmem>>, %arg5: memref<1x8x512xf32, #tpu.memory_space<vmem>>) attributes {dimension_semantics = [#tpu.dimension_semantics<parallel>], iteration_bounds = array<i64: 2>, scalar_prefetch = 0 : i64, scratch_operands = 0 : i64, tpu.core_type = #tpu.core_type<tc>, window_params = [{transform_indices = @transform_0, window_bounds = array<i64: 1, 768, 512>}, {pipeline_mode = #tpu.pipeline_mode<synchronous>, transform_indices = @transform_1, window_bounds = array<i64: 8, 768>}, {pipeline_mode = #tpu.pipeline_mode<synchronous>, transform_indices = @transform_2, window_bounds = array<i64: 8, 1>}, {pipeline_mode = #tpu.pipeline_mode<synchronous>, transform_indices = @transform_3, window_bounds = array<i64: 8, 1>}, {transform_indices = @transform_4, window_bounds = array<i64: 1, 8, 512>}]} {
    %c0 = arith.constant 0 : index
    %c0_0 = arith.constant 0 : index
    %c0_1 = arith.constant 0 : index
    %0 = vector.load %arg1[%c0, %c0_0, %c0_1] : memref<1x768x512xf32, #tpu.memory_space<vmem>>, vector<1x768x512xf32>
    %1 = vector.shape_cast %0 : vector<1x768x512xf32> to vector<768x512xf32>
    %c0_2 = arith.constant 0 : index
    %c0_3 = arith.constant 0 : index
    %2 = vector.load %arg2[%c0_2, %c0_3] : memref<8x768xf32, #tpu.memory_space<vmem>>, vector<8x768xf32>
    %cst = arith.constant dense<0.000000e+00> : vector<8x512xf32>
    %3 = tpu.matmul %2, %1, %cst {dimension_numbers = #tpu.dot_dimension_numbers<[1], [0], [0], [1], [0, 0, 1, 1], [], []>} : vector<8x768xf32>, vector<768x512xf32>, vector<8x512xf32> -> vector<8x512xf32>
    %cst_4 = arith.constant dense<0.000000e+00> : vector<8xf32>
    %4 = vector.multi_reduction <add>, %3, %cst_4 [1] : vector<8x512xf32> to vector<8xf32>
    %5 = vector.shape_cast %4 : vector<8xf32> to vector<8x1xf32>
    %cst_5 = arith.constant 5.120000e+02 : f32
    %6 = vector.broadcast %cst_5 : f32 to vector<8x1xf32>
    %7 = arith.divf %5, %6 : vector<8x1xf32>
    %8 = vector.broadcast %7 : vector<8x1xf32> to vector<8x512xf32>
    %9 = arith.subf %3, %8 : vector<8x512xf32>
    %10 = arith.mulf %9, %9 : vector<8x512xf32>
    %cst_6 = arith.constant dense<0.000000e+00> : vector<8xf32>
    %11 = vector.multi_reduction <add>, %10, %cst_6 [1] : vector<8x512xf32> to vector<8xf32>
    %12 = vector.shape_cast %11 : vector<8xf32> to vector<8x1xf32>
    %cst_7 = arith.constant 5.120000e+02 : f32
    %13 = vector.broadcast %cst_7 : f32 to vector<8x1xf32>
    %14 = arith.divf %12, %13 : vector<8x1xf32>
    %cst_8 = arith.constant 9.99999974E-6 : f32
    %15 = vector.broadcast %cst_8 : f32 to vector<8x1xf32>
    %16 = arith.addf %14, %15 : vector<8x1xf32>
    %17 = math.rsqrt %16 : vector<8x1xf32>
    %18 = vector.broadcast %17 : vector<8x1xf32> to vector<8x512xf32>
    %19 = arith.mulf %9, %18 : vector<8x512xf32>
    %c0_9 = arith.constant 0 : index
    %c0_10 = arith.constant 0 : index
    %20 = vector.load %arg3[%c0_9, %c0_10] : memref<8x1xf32, #tpu.memory_space<vmem>>, vector<8x1xf32>
    %21 = vector.broadcast %20 : vector<8x1xf32> to vector<8x512xf32>
    %22 = arith.mulf %19, %21 : vector<8x512xf32>
    %c0_11 = arith.constant 0 : index
    %c0_12 = arith.constant 0 : index
    %23 = vector.load %arg4[%c0_11, %c0_12] : memref<8x1xf32, #tpu.memory_space<vmem>>, vector<8x1xf32>
    %24 = vector.broadcast %23 : vector<8x1xf32> to vector<8x512xf32>
    %25 = arith.addf %22, %24 : vector<8x512xf32>
    %cst_13 = arith.constant 0.000000e+00 : f32
    %26 = vector.broadcast %cst_13 : f32 to vector<8x512xf32>
    %27 = arith.cmpf oge, %25, %26 : vector<8x512xf32>
    %cst_14 = arith.constant 0.00999999977 : f32
    %28 = vector.broadcast %cst_14 : f32 to vector<8x512xf32>
    %29 = arith.mulf %28, %25 : vector<8x512xf32>
    %30 = arith.select %27, %25, %29 : vector<8x512xi1>, vector<8x512xf32>
    %c0_15 = arith.constant 0 : index
    %c0_16 = arith.constant 0 : index
    %c0_17 = arith.constant 0 : index
    %31 = vector.load %arg5[%c0_15, %c0_16, %c0_17] : memref<1x8x512xf32, #tpu.memory_space<vmem>>, vector<1x8x512xf32>
    %32 = vector.shape_cast %31 : vector<1x8x512xf32> to vector<8x512xf32>
    %33 = vector.shape_cast %30 : vector<8x512xf32> to vector<1x8x512xf32>
    tpu.vector_store %arg5[%c0_15, %c0_16, %c0_17], %33 {strides = array<i32>} : memref<1x8x512xf32, #tpu.memory_space<vmem>>, vector<1x8x512xf32>,
    return
  }
  func.func @transform_0(%arg0: i32) -> (i32, i32, i32) {
    %c0_i32 = arith.constant 0 : i32
    %c0_i32_0 = arith.constant 0 : i32
    %c0_i32_1 = arith.constant 0 : i32
    return %arg0, %c0_i32, %c0_i32_0 : i32, i32, i32
  }
  func.func @transform_1(%arg0: i32) -> (i32, i32) {
    %c0_i32 = arith.constant 0 : i32
    %c0_i32_0 = arith.constant 0 : i32
    %c0_i32_1 = arith.constant 0 : i32
    return %c0_i32, %c0_i32_0 : i32, i32
  }
  func.func @transform_2(%arg0: i32) -> (i32, i32) {
    %c0_i32 = arith.constant 0 : i32
    %c0_i32_0 = arith.constant 0 : i32
    %c0_i32_1 = arith.constant 0 : i32
    return %c0_i32, %c0_i32_0 : i32, i32
  }
  func.func @transform_3(%arg0: i32) -> (i32, i32) {
    %c0_i32 = arith.constant 0 : i32
    %c0_i32_0 = arith.constant 0 : i32
    %c0_i32_1 = arith.constant 0 : i32
    return %c0_i32, %c0_i32_0 : i32, i32
  }
  func.func @transform_4(%arg0: i32) -> (i32, i32, i32) {
    %c0_i32 = arith.constant 0 : i32
    %c0_i32_0 = arith.constant 0 : i32
    %c0_i32_1 = arith.constant 0 : i32
    return %arg0, %c0_i32, %c0_i32_0 : i32, i32, i32
  }
}

module attributes {stable_mosaic.version = 11 : i64} {
  func.func @_fused_conv_in_lrelu_kernel(%arg0: i32, %arg1: memref<1x128x512xf32, #tpu.memory_space<vmem>>, %arg2: memref<8x128xf32, #tpu.memory_space<vmem>>, %arg3: memref<8x1xf32, #tpu.memory_space<vmem>>, %arg4: memref<8x1xf32, #tpu.memory_space<vmem>>, %arg5: memref<1x8x512xf32, #tpu.memory_space<vmem>>) attributes {dimension_semantics = [#tpu.dimension_semantics<parallel>], iteration_bounds = array<i64: 2>, scalar_prefetch = 0 : i64, scratch_operands = 0 : i64, tpu.core_type = #tpu.core_type<tc>, window_params = [{transform_indices = @transform_0, window_bounds = array<i64: 1, 128, 512>}, {pipeline_mode = #tpu.pipeline_mode<synchronous>, transform_indices = @transform_1, window_bounds = array<i64: 8, 128>}, {pipeline_mode = #tpu.pipeline_mode<synchronous>, transform_indices = @transform_2, window_bounds = array<i64: 8, 1>}, {pipeline_mode = #tpu.pipeline_mode<synchronous>, transform_indices = @transform_3, window_bounds = array<i64: 8, 1>}, {transform_indices = @transform_4, window_bounds = array<i64: 1, 8, 512>}]} {
    %c0 = arith.constant 0 : index
    %c0_0 = arith.constant 0 : index
    %c0_1 = arith.constant 0 : index
    %0 = vector.load %arg1[%c0, %c0_0, %c0_1] : memref<1x128x512xf32, #tpu.memory_space<vmem>>, vector<1x128x512xf32>
    %1 = vector.shape_cast %0 : vector<1x128x512xf32> to vector<128x512xf32>
    %c0_2 = arith.constant 0 : index
    %c0_3 = arith.constant 0 : index
    %2 = vector.load %arg2[%c0_2, %c0_3] : memref<8x128xf32, #tpu.memory_space<vmem>>, vector<8x128xf32>
    %cst = arith.constant dense<0.000000e+00> : vector<8x512xf32>
    %3 = tpu.matmul %2, %1, %cst {dimension_numbers = #tpu.dot_dimension_numbers<[1], [0], [0], [1], [0, 0, 1, 1], [], []>} : vector<8x128xf32>, vector<128x512xf32>, vector<8x512xf32> -> vector<8x512xf32>
    %cst_4 = arith.constant dense<0.000000e+00> : vector<8xf32>
    %4 = vector.multi_reduction <add>, %3, %cst_4 [1] : vector<8x512xf32> to vector<8xf32>
    %5 = vector.shape_cast %4 : vector<8xf32> to vector<8x1xf32>
    %cst_5 = arith.constant 5.120000e+02 : f32
    %6 = vector.broadcast %cst_5 : f32 to vector<8x1xf32>
    %7 = arith.divf %5, %6 : vector<8x1xf32>
    %8 = vector.broadcast %7 : vector<8x1xf32> to vector<8x512xf32>
    %9 = arith.subf %3, %8 : vector<8x512xf32>
    %10 = arith.mulf %9, %9 : vector<8x512xf32>
    %cst_6 = arith.constant dense<0.000000e+00> : vector<8xf32>
    %11 = vector.multi_reduction <add>, %10, %cst_6 [1] : vector<8x512xf32> to vector<8xf32>
    %12 = vector.shape_cast %11 : vector<8xf32> to vector<8x1xf32>
    %cst_7 = arith.constant 5.120000e+02 : f32
    %13 = vector.broadcast %cst_7 : f32 to vector<8x1xf32>
    %14 = arith.divf %12, %13 : vector<8x1xf32>
    %cst_8 = arith.constant 9.99999974E-6 : f32
    %15 = vector.broadcast %cst_8 : f32 to vector<8x1xf32>
    %16 = arith.addf %14, %15 : vector<8x1xf32>
    %17 = math.rsqrt %16 : vector<8x1xf32>
    %18 = vector.broadcast %17 : vector<8x1xf32> to vector<8x512xf32>
    %19 = arith.mulf %9, %18 : vector<8x512xf32>
    %c0_9 = arith.constant 0 : index
    %c0_10 = arith.constant 0 : index
    %20 = vector.load %arg3[%c0_9, %c0_10] : memref<8x1xf32, #tpu.memory_space<vmem>>, vector<8x1xf32>
    %21 = vector.broadcast %20 : vector<8x1xf32> to vector<8x512xf32>
    %22 = arith.mulf %19, %21 : vector<8x512xf32>
    %c0_11 = arith.constant 0 : index
    %c0_12 = arith.constant 0 : index
    %23 = vector.load %arg4[%c0_11, %c0_12] : memref<8x1xf32, #tpu.memory_space<vmem>>, vector<8x1xf32>
    %24 = vector.broadcast %23 : vector<8x1xf32> to vector<8x512xf32>
    %25 = arith.addf %22, %24 : vector<8x512xf32>
    %cst_13 = arith.constant 0.000000e+00 : f32
    %26 = vector.broadcast %cst_13 : f32 to vector<8x512xf32>
    %27 = arith.cmpf oge, %25, %26 : vector<8x512xf32>
    %cst_14 = arith.constant 0.00999999977 : f32
    %28 = vector.broadcast %cst_14 : f32 to vector<8x512xf32>
    %29 = arith.mulf %28, %25 : vector<8x512xf32>
    %30 = arith.select %27, %25, %29 : vector<8x512xi1>, vector<8x512xf32>
    %c0_15 = arith.constant 0 : index
    %c0_16 = arith.constant 0 : index
    %c0_17 = arith.constant 0 : index
    %31 = vector.load %arg5[%c0_15, %c0_16, %c0_17] : memref<1x8x512xf32, #tpu.memory_space<vmem>>, vector<1x8x512xf32>
    %32 = vector.shape_cast %31 : vector<1x8x512xf32> to vector<8x512xf32>
    %33 = vector.shape_cast %30 : vector<8x512xf32> to vector<1x8x512xf32>
    tpu.vector_store %arg5[%c0_15, %c0_16, %c0_17], %33 {strides = array<i32>} : memref<1x8x512xf32, #tpu.memory_space<vmem>>, vector<1x8x512xf32>,
    return
  }
  func.func @transform_0(%arg0: i32) -> (i32, i32, i32) {
    %c0_i32 = arith.constant 0 : i32
    %c0_i32_0 = arith.constant 0 : i32
    %c0_i32_1 = arith.constant 0 : i32
    return %arg0, %c0_i32, %c0_i32_0 : i32, i32, i32
  }
  func.func @transform_1(%arg0: i32) -> (i32, i32) {
    %c0_i32 = arith.constant 0 : i32
    %c0_i32_0 = arith.constant 0 : i32
    %c0_i32_1 = arith.constant 0 : i32
    return %c0_i32, %c0_i32_0 : i32, i32
  }
  func.func @transform_2(%arg0: i32) -> (i32, i32) {
    %c0_i32 = arith.constant 0 : i32
    %c0_i32_0 = arith.constant 0 : i32
    %c0_i32_1 = arith.constant 0 : i32
    return %c0_i32, %c0_i32_0 : i32, i32
  }
  func.func @transform_3(%arg0: i32) -> (i32, i32) {
    %c0_i32 = arith.constant 0 : i32
    %c0_i32_0 = arith.constant 0 : i32
    %c0_i32_1 = arith.constant 0 : i32
    return %c0_i32, %c0_i32_0 : i32, i32
  }
  func.func @transform_4(%arg0: i32) -> (i32, i32, i32) {
    %c0_i32 = arith.constant 0 : i32
    %c0_i32_0 = arith.constant 0 : i32
    %c0_i32_1 = arith.constant 0 : i32
    return %arg0, %c0_i32, %c0_i32_0 : i32, i32, i32
  }
}

</mosaic_0001>

<llo_original>
// kernel: _lambda_.9
$region0: #{_lambda_.9}
  #allocation0 [shape = 'u32[]', space=smem, size = 0x4, offset = 0x4, fixed_abs, tag = 'smem constant byte address 0x4 - core index']
  #allocation1 [shape = 'u32[72,128]{1,0:T(1,128)}', space=vmem, size = 0x9000, scoped, tag = 'internal scratch']
  %s0 = inlined_call_operand.vmem [shape: f32[2,128,512], index: 0, kind: input, shape index: {}]
  %s1 = inlined_call_operand.vmem [shape: f32[4,128], index: 1, kind: input, shape index: {}]
  %s2 = inlined_call_operand.vmem [shape: f32[4,1], index: 2, kind: input, shape index: {}]
  %s3 = inlined_call_operand.vmem [shape: f32[4,1], index: 3, kind: input, shape index: {}]
  %s4 = inlined_call_operand.vmem [shape: f32[2,4,512], index: 4, kind: output, shape index: {}]
  %s5 = sld [smem:[#allocation0]]
  $region49: #{_lambda_.9} parent=0
    _
  %s7 = ssub.s32 1, %s5
  %s8 = scalar_select 0, %s7, %s5
  loop: start=0, step=1, limit=4
  $region2: #{_lambda_.9} parent=0 // loop_pre_header
    _
  $region3: #{_lambda_.9} parent=0 // loop_header
    %s10 = sphi 0, %s14
    %p11 = scmp.ge.s32.totalorder %s10, 4
    %s20 = sphi 0, %s22
    %s23 = sphi 0, %s20
    %s24 = sphi 0, %s23
    %s40 = sphi 0, %s24
    %s44 = sphi 0, %s44
    %s46 = sphi 0, %s44
    %s47 = sphi 0, %s46
    %s61 = sphi 0, %s47
    %s65 = sphi 0, %s65
    %s67 = sphi 0, %s65
    %s68 = sphi 0, %s67
    %s82 = sphi 0, %s68
    %s86 = sphi 0, %s86
    %s88 = sphi 0, %s86
    %s89 = sphi 0, %s88
    %s103 = sphi 0, %s89
    %s109 = sphi 0, %s111
    %s112 = sphi 0, %s109
    %s113 = sphi 0, %s112
    %s129 = sphi 0, %s113
  $region4: #{_lambda_.9} parent=0 // loop_header_branch
    %13 = sbr.rel (%p11) target = $region8
  $region5: #{_lambda_.9} parent=0 // loop_body
    %s15 = ssub.s32 %s10, 1
    %s16 = ssub.s32 %s10, 2
    %s17 = sadd.s32 %s10, 1
    %s18 = ssub.s32 %s10, %s17
    %p19 = scmp.eq.s32.totalorder %s18, 0
    %s21 = sadd.s32 %s20, 1
    %s22 = scalar_select %p19, %s20, %s21
    %p25 = pneg %p19
    %p26 = scmp.eq.s32.totalorder %s10, 1
    %p27 = por %p25, %p26
    %p28 = scmp.ne.s32.totalorder %s20, %s23
    %p29 = scmp.eq.s32.totalorder %s10, 0
    %p30 = por %p28, %p29
    %p31 = scmp.ne.s32.totalorder %s20, %s23
    %p32 = scmp.eq.s32.totalorder %s15, 1
    %p33 = por %p31, %p32
    %p34 = scmp.ne.s32.totalorder %s23, %s24
    %p35 = scmp.eq.s32.totalorder %s15, 0
    %p36 = por %p34, %p35
    %p37 = scmp.ne.s32.totalorder %s23, %s24
    %p38 = scmp.eq.s32.totalorder %s16, 1
    %p39 = por %p37, %p38
    %p41 = scmp.ne.s32.totalorder %s24, %s40
    %p42 = scmp.eq.s32.totalorder %s16, 0
    %p43 = por %p41, %p42
    %s45 = sadd.s32 %s44, 1
    %p48 = scmp.eq.s32.totalorder %s10, 1
    %p49 = scmp.ne.s32.totalorder %s44, %s46
    %p50 = scmp.eq.s32.totalorder %s10, 0
    %p51 = por %p49, %p50
    %p52 = scmp.ne.s32.totalorder %s44, %s46
    %p53 = scmp.eq.s32.totalorder %s15, 1
    %p54 = por %p52, %p53
    %p55 = scmp.ne.s32.totalorder %s46, %s47
    %p56 = scmp.eq.s32.totalorder %s15, 0
    %p57 = por %p55, %p56
    %p58 = scmp.ne.s32.totalorder %s46, %s47
    %p59 = scmp.eq.s32.totalorder %s16, 1
    %p60 = por %p58, %p59
    %p62 = scmp.ne.s32.totalorder %s47, %s61
    %p63 = scmp.eq.s32.totalorder %s16, 0
    %p64 = por %p62, %p63
    %s66 = sadd.s32 %s65, 1
    %p69 = scmp.eq.s32.totalorder %s10, 1
    %p70 = scmp.ne.s32.totalorder %s65, %s67
    %p71 = scmp.eq.s32.totalorder %s10, 0
    %p72 = por %p70, %p71
    %p73 = scmp.ne.s32.totalorder %s65, %s67
    %p74 = scmp.eq.s32.totalorder %s15, 1
    %p75 = por %p73, %p74
    %p76 = scmp.ne.s32.totalorder %s67, %s68
    %p77 = scmp.eq.s32.totalorder %s15, 0
    %p78 = por %p76, %p77
    %p79 = scmp.ne.s32.totalorder %s67, %s68
    %p80 = scmp.eq.s32.totalorder %s16, 1
    %p81 = por %p79, %p80
    %p83 = scmp.ne.s32.totalorder %s68, %s82
    %p84 = scmp.eq.s32.totalorder %s16, 0
    %p85 = por %p83, %p84
    %s87 = sadd.s32 %s86, 1
    %p90 = scmp.eq.s32.totalorder %s10, 1
    %p91 = scmp.ne.s32.totalorder %s86, %s88
    %p92 = scmp.eq.s32.totalorder %s10, 0
    %p93 = por %p91, %p92
    %p94 = scmp.ne.s32.totalorder %s86, %s88
    %p95 = scmp.eq.s32.totalorder %s15, 1
    %p96 = por %p94, %p95
    %p97 = scmp.ne.s32.totalorder %s88, %s89
    %p98 = scmp.eq.s32.totalorder %s15, 0
    %p99 = por %p97, %p98
    %p100 = scmp.ne.s32.totalorder %s88, %s89
    %p101 = scmp.eq.s32.totalorder %s16, 1
    %p102 = por %p100, %p101
    %p104 = scmp.ne.s32.totalorder %s89, %s103
    %p105 = scmp.eq.s32.totalorder %s16, 0
    %p106 = por %p104, %p105
    %s107 = ssub.s32 %s10, %s17
    %p108 = scmp.eq.s32.totalorder %s107, 0
    %s110 = sadd.s32 %s109, 1
    %s111 = scalar_select %p108, %s109, %s110
    %p114 = pneg %p108
    %p115 = scmp.eq.s32.totalorder %s10, 1
    %p116 = por %p114, %p115
    %p117 = scmp.ne.s32.totalorder %s109, %s112
    %p118 = scmp.eq.s32.totalorder %s10, 0
    %p119 = por %p117, %p118
    %p120 = scmp.ne.s32.totalorder %s109, %s112
    %p121 = scmp.eq.s32.totalorder %s15, 1
    %p122 = por %p120, %p121
    %p123 = scmp.ne.s32.totalorder %s112, %s113
    %p124 = scmp.eq.s32.totalorder %s15, 0
    %p125 = por %p123, %p124
    %p126 = scmp.ne.s32.totalorder %s112, %s113
    %p127 = scmp.eq.s32.totalorder %s16, 1
    %p128 = por %p126, %p127
    %p130 = scmp.ne.s32.totalorder %s113, %s129
    %p131 = scmp.eq.s32.totalorder %s16, 0
    %p132 = por %p130, %p131
    %p133 = scmp.le.s32.totalorder 1, %s10
    %p134 = scmp.lt.s32.totalorder %s10, 3
    %p135 = pnand %p133, %p134
    %p136 = pneg %p135
    // Predicated region
    $region9: #{_lambda_.9} parent=5 // pred_check
      _
    $region10: #{_lambda_.9} parent=5 // pred_check_branch
      %138 = sbr.rel (%p135) target = $region12
    $region11: #{_lambda_.9} parent=5 // pred_region
      %s139 = ssub.s32 %s10, 1
      // Predicated region
      $region13: #{_lambda_.9} parent=11 // pred_check
        %p140 = pneg %p57
      $region14: #{_lambda_.9} parent=11 // pred_check_branch
        %142 = sbr.rel (%p140) target = $region16
      $region15: #{_lambda_.9} parent=11 // pred_region
        _
      $region16: #{_lambda_.9} parent=11 // pred_fallthru
        _
      // Predicated region
      $region17: #{_lambda_.9} parent=11 // pred_check
        %p143 = pneg %p78
      $region18: #{_lambda_.9} parent=11 // pred_check_branch
        %145 = sbr.rel (%p143) target = $region20
      $region19: #{_lambda_.9} parent=11 // pred_region
        _
      $region20: #{_lambda_.9} parent=11 // pred_fallthru
        _
      // Predicated region
      $region21: #{_lambda_.9} parent=11 // pred_check
        %p146 = pneg %p99
      $region22: #{_lambda_.9} parent=11 // pred_check_branch
        %148 = sbr.rel (%p146) target = $region24
      $region23: #{_lambda_.9} parent=11 // pred_region
        _
      $region24: #{_lambda_.9} parent=11 // pred_fallthru
        _
    $region12: #{_lambda_.9} parent=5 // pred_fallthru
      _
    %p149 = scmp.lt.s32.totalorder %s10, 2
    // Predicated region
    $region25: #{_lambda_.9} parent=5 // pred_check
      %p150 = pneg %p149
    $region26: #{_lambda_.9} parent=5 // pred_check_branch
      %152 = sbr.rel (%p150) target = $region28
    $region27: #{_lambda_.9} parent=5 // pred_region
      // Predicated region
      $region29: #{_lambda_.9} parent=27 // pred_check
        %p153 = pneg %p30
      $region30: #{_lambda_.9} parent=27 // pred_check_branch
        %155 = sbr.rel (%p153) target = $region32
      $region31: #{_lambda_.9} parent=27 // pred_region
        %p156 = scmp.lt.s32.totalorder %s10, 1
        %s157 = scalar_select %p156, %s10, 1
        %s158 = smul.addr %s157, 64
        %s159 = smul.addr %s158, 8
        %s160 = scalar_lea.vmem %s0, %s159
      $region32: #{_lambda_.9} parent=27 // pred_fallthru
        _
    $region28: #{_lambda_.9} parent=5 // pred_fallthru
      _
    %p161 = scmp.le.s32.totalorder 1, %s10
    %p162 = scmp.lt.s32.totalorder %s10, 3
    %p163 = pnand %p161, %p162
    %p164 = pneg %p163
    // Predicated region
    $region33: #{_lambda_.9} parent=5 // pred_check
      _
    $region34: #{_lambda_.9} parent=5 // pred_check_branch
      %166 = sbr.rel (%p163) target = $region36
    $region35: #{_lambda_.9} parent=5 // pred_region
      %s167 = ssub.s32 %s10, 1
      %p168 = scmp.lt.s32.totalorder %s15, 1
      %s169 = scalar_select %p168, %s15, 1
      %s170 = smul.addr %s169, 64
      %s171 = smul.addr %s170, 8
      %s172 = scalar_lea.vmem %s0, %s171
      %p173 = pneg %p36
      %p174 = pneg %p33
      %p175 = pneg %p57
      %p176 = pneg %p54
      %p177 = pneg %p78
      %p178 = pneg %p75
      %p179 = pneg %p99
      %p180 = pneg %p96
      %p181 = pneg %p125
      %p182 = pneg %p122
      %p183 = scmp.lt.s32.totalorder %s15, 1
      %s184 = scalar_select %p183, %s15, 1
      %s185 = smul.addr %s184, 4
      %s186 = smul.addr %s185, 4
      %s187 = scalar_lea.vmem %s4, %s186
      %p188 = scmp.lt.s32.totalorder %s15, 1
      %s189 = scalar_select %p188, %s15, 1
      %s190 = smul.addr %s189, 64
      %s191 = smul.addr %s190, 8
      %s192 = scalar_lea.vmem %s0, %s191
      %p193 = scmp.lt.s32.totalorder %s15, 1
      %s194 = scalar_select %p193, %s15, 1
      %s195 = smul.addr %s194, 4
      %s196 = smul.addr %s195, 4
      %s197 = scalar_lea.vmem %s4, %s196
      %v198 = vld [vmem:[%s192] sm:$0xff]
      %v199 = vld [vmem:[%s192 + $0x8] sm:$0xff]
      %v200 = vld [vmem:[%s192 + $0x10] sm:$0xff]
      %v201 = vld [vmem:[%s192 + $0x18] sm:$0xff]
      %v202 = vld [vmem:[%s192 + $0x20] sm:$0xff]
      %v203 = vld [vmem:[%s192 + $0x28] sm:$0xff]
      %v204 = vld [vmem:[%s192 + $0x30] sm:$0xff]
      %v205 = vld [vmem:[%s192 + $0x38] sm:$0xff]
      %v206 = vld [vmem:[%s192 + $0x40] sm:$0xff]
      %v207 = vld [vmem:[%s192 + $0x48] sm:$0xff]
      %v208 = vld [vmem:[%s192 + $0x50] sm:$0xff]
      %v209 = vld [vmem:[%s192 + $0x58] sm:$0xff]
      %v210 = vld [vmem:[%s192 + $0x60] sm:$0xff]
      %v211 = vld [vmem:[%s192 + $0x68] sm:$0xff]
      %v212 = vld [vmem:[%s192 + $0x70] sm:$0xff]
      %v213 = vld [vmem:[%s192 + $0x78] sm:$0xff]
      %v214 = vld [vmem:[%s192 + $0x80] sm:$0xff]
      %v215 = vld [vmem:[%s192 + $0x88] sm:$0xff]
      %v216 = vld [vmem:[%s192 + $0x90] sm:$0xff]
      %v217 = vld [vmem:[%s192 + $0x98] sm:$0xff]
      %v218 = vld [vmem:[%s192 + $0xa0] sm:$0xff]
      %v219 = vld [vmem:[%s192 + $0xa8] sm:$0xff]
      %v220 = vld [vmem:[%s192 + $0xb0] sm:$0xff]
      %v221 = vld [vmem:[%s192 + $0xb8] sm:$0xff]
      %v222 = vld [vmem:[%s192 + $0xc0] sm:$0xff]
      %v223 = vld [vmem:[%s192 + $0xc8] sm:$0xff]
      %v224 = vld [vmem:[%s192 + $0xd0] sm:$0xff]
      %v225 = vld [vmem:[%s192 + $0xd8] sm:$0xff]
      %v226 = vld [vmem:[%s192 + $0xe0] sm:$0xff]
      %v227 = vld [vmem:[%s192 + $0xe8] sm:$0xff]
      %v228 = vld [vmem:[%s192 + $0xf0] sm:$0xff]
      %v229 = vld [vmem:[%s192 + $0xf8] sm:$0xff]
      %v230 = vld [vmem:[%s192 + $0x100] sm:$0xff]
      %v231 = vld [vmem:[%s192 + $0x108] sm:$0xff]
      %v232 = vld [vmem:[%s192 + $0x110] sm:$0xff]
      %v233 = vld [vmem:[%s192 + $0x118] sm:$0xff]
      %v234 = vld [vmem:[%s192 + $0x120] sm:$0xff]
      %v235 = vld [vmem:[%s192 + $0x128] sm:$0xff]
      %v236 = vld [vmem:[%s192 + $0x130] sm:$0xff]
      %v237 = vld [vmem:[%s192 + $0x138] sm:$0xff]
      %v238 = vld [vmem:[%s192 + $0x140] sm:$0xff]
      %v239 = vld [vmem:[%s192 + $0x148] sm:$0xff]
      %v240 = vld [vmem:[%s192 + $0x150] sm:$0xff]
      %v241 = vld [vmem:[%s192 + $0x158] sm:$0xff]
      %v242 = vld [vmem:[%s192 + $0x160] sm:$0xff]
      %v243 = vld [vmem:[%s192 + $0x168] sm:$0xff]
      %v244 = vld [vmem:[%s192 + $0x170] sm:$0xff]
      %v245 = vld [vmem:[%s192 + $0x178] sm:$0xff]
      %v246 = vld [vmem:[%s192 + $0x180] sm:$0xff]
      %v247 = vld [vmem:[%s192 + $0x188] sm:$0xff]
      %v248 = vld [vmem:[%s192 + $0x190] sm:$0xff]
      %v249 = vld [vmem:[%s192 + $0x198] sm:$0xff]
      %v250 = vld [vmem:[%s192 + $0x1a0] sm:$0xff]
      %v251 = vld [vmem:[%s192 + $0x1a8] sm:$0xff]
      %v252 = vld [vmem:[%s192 + $0x1b0] sm:$0xff]
      %v253 = vld [vmem:[%s192 + $0x1b8] sm:$0xff]
      %v254 = vld [vmem:[%s192 + $0x1c0] sm:$0xff]
      %v255 = vld [vmem:[%s192 + $0x1c8] sm:$0xff]
      %v256 = vld [vmem:[%s192 + $0x1d0] sm:$0xff]
      %v257 = vld [vmem:[%s192 + $0x1d8] sm:$0xff]
      %v258 = vld [vmem:[%s192 + $0x1e0] sm:$0xff]
      %v259 = vld [vmem:[%s192 + $0x1e8] sm:$0xff]
      %v260 = vld [vmem:[%s192 + $0x1f0] sm:$0xff]
      %v261 = vld [vmem:[%s192 + $0x1f8] sm:$0xff]
      %v262 = vld [vmem:[%s1] sm:$0xf]
      %263 = vmatpush.msra.mxu0 %v258
      %264 = vmatpush.msra.mxu0 %v254
      %265 = vmatpush.msra.mxu0 %v250
      %266 = vmatpush.msra.mxu0 %v246
      %267 = vmatpush.msra.mxu0 %v242
      %268 = vmatpush.msra.mxu0 %v238
      %269 = vmatpush.msra.mxu0 %v234
      %270 = vmatpush.msra.mxu0 %v230
      %271 = vmatpush.msra.mxu0 %v226
      %272 = vmatpush.msra.mxu0 %v222
      %273 = vmatpush.msra.mxu0 %v218
      %274 = vmatpush.msra.mxu0 %v214
      %275 = vmatpush.msra.mxu0 %v210
      %276 = vmatpush.msra.mxu0 %v206
      %277 = vmatpush.msra.mxu0 %v202
      %278 = vmatpush.msra.mxu0 %v198
      %279 = vmatmul.f32.gmra.mxu0 %v262
      %v280 = vpop.f32.mrf.mxu0
      %v281 = vadd.f32 0.0, %v280
      %282 = vdwg.mxu0
      %283 = vmatpush.msra.mxu0 %v259
      %284 = vmatpush.msra.mxu0 %v255
      %285 = vmatpush.msra.mxu0 %v251
      %286 = vmatpush.msra.mxu0 %v247
      %287 = vmatpush.msra.mxu0 %v243
      %288 = vmatpush.msra.mxu0 %v239
      %289 = vmatpush.msra.mxu0 %v235
      %290 = vmatpush.msra.mxu0 %v231
      %291 = vmatpush.msra.mxu0 %v227
      %292 = vmatpush.msra.mxu0 %v223
      %293 = vmatpush.msra.mxu0 %v219
      %294 = vmatpush.msra.mxu0 %v215
      %295 = vmatpush.msra.mxu0 %v211
      %296 = vmatpush.msra.mxu0 %v207
      %297 = vmatpush.msra.mxu0 %v203
      %298 = vmatpush.msra.mxu0 %v199
      %299 = vmatmul.f32.gmra.mxu0 %v262
      %v300 = vpop.f32.mrf.mxu0
      %v301 = vadd.f32 0.0, %v300
      %302 = vdwg.mxu0
      %303 = vmatpush.msra.mxu0 %v260
      %304 = vmatpush.msra.mxu0 %v256
      %305 = vmatpush.msra.mxu0 %v252
      %306 = vmatpush.msra.mxu0 %v248
      %307 = vmatpush.msra.mxu0 %v244
      %308 = vmatpush.msra.mxu0 %v240
      %309 = vmatpush.msra.mxu0 %v236
      %310 = vmatpush.msra.mxu0 %v232
      %311 = vmatpush.msra.mxu0 %v228
      %312 = vmatpush.msra.mxu0 %v224
      %313 = vmatpush.msra.mxu0 %v220
      %314 = vmatpush.msra.mxu0 %v216
      %315 = vmatpush.msra.mxu0 %v212
      %316 = vmatpush.msra.mxu0 %v208
      %317 = vmatpush.msra.mxu0 %v204
      %318 = vmatpush.msra.mxu0 %v200
      %319 = vmatmul.f32.gmra.mxu0 %v262
      %v320 = vpop.f32.mrf.mxu0
      %v321 = vadd.f32 0.0, %v320
      %322 = vdwg.mxu0
      %323 = vmatpush.msra.mxu0 %v261
      %324 = vmatpush.msra.mxu0 %v257
      %325 = vmatpush.msra.mxu0 %v253
      %326 = vmatpush.msra.mxu0 %v249
      %327 = vmatpush.msra.mxu0 %v245
      %328 = vmatpush.msra.mxu0 %v241
      %329 = vmatpush.msra.mxu0 %v237
      %330 = vmatpush.msra.mxu0 %v233
      %331 = vmatpush.msra.mxu0 %v229
      %332 = vmatpush.msra.mxu0 %v225
      %333 = vmatpush.msra.mxu0 %v221
      %334 = vmatpush.msra.mxu0 %v217
      %335 = vmatpush.msra.mxu0 %v213
      %336 = vmatpush.msra.mxu0 %v209
      %337 = vmatpush.msra.mxu0 %v205
      %338 = vmatpush.msra.mxu0 %v201
      %339 = vmatmul.f32.gmra.mxu0 %v262
      %v340 = vpop.f32.mrf.mxu0
      %v341 = vadd.f32 0.0, %v340
      %342 = vdwg.mxu0
      %vm343 = vcmask 1043456
      %v344 = vsel %vm343, %v281, 0.0
      %v345 = vsel %vm343, %v301, 0.0
      %v346 = vadd.f32 %v344, %v345
      %v347 = vsel %vm343, %v321, 0.0
      %v348 = vadd.f32 %v346, %v347
      %v349 = vsel %vm343, %v341, 0.0
      %v350 = vadd.f32 %v348, %v349
      %351 = vadd.xlane.f32.xlu0 %v350
      %v352 = vpop.xlane.xlu0 %351
      %v353 = vrcp.pop 512.0
      %v354 = vmul.f32 512.0, %v353
      %v355 = vsub.f32 1.0, %v354
      %v356 = vmul.f32 %v353, %v355
      %v357 = vadd.f32 %v353, %v356
      %vm358 = vweird.f32 %v353
      %v359 = vsel %vm358, %v353, %v357
      %v360 = vmul.f32 %v352, %v359
      %v361 = vsub.f32 %v281, %v360
      %v362 = vsub.f32 %v301, %v360
      %v363 = vsub.f32 %v321, %v360
      %v364 = vsub.f32 %v341, %v360
      %v365 = vmul.f32 %v361, %v361
      %v366 = vmul.f32 %v362, %v362
      %v367 = vmul.f32 %v363, %v363
      %v368 = vmul.f32 %v364, %v364
      %v369 = vsel %vm343, %v365, 0.0
      %v370 = vsel %vm343, %v366, 0.0
      %v371 = vadd.f32 %v369, %v370
      %v372 = vsel %vm343, %v367, 0.0
      %v373 = vadd.f32 %v371, %v372
      %v374 = vsel %vm343, %v368, 0.0
      %v375 = vadd.f32 %v373, %v374
      %376 = vadd.xlane.f32.xlu0 %v375
      %v377 = vpop.xlane.xlu0 %376
      %v378 = vmul.f32 %v377, %v359
      %v379 = vadd.f32 %v378, 1e-05
      %v380 = vrsqrt.pop %v379
      %v381 = vmul.f32 %v380, %v379
      %v382 = vmul.f32 %v381, %v380
      %v383 = vmul.f32 0.5, %v382
      %v384 = vsub.f32 1.5, %v383
      %v385 = vmul.f32 %v380, %v384
      %vm386 = vweird.f32 %v379
      %vm387 = vweird.f32 %v380
      %vm388 = vmor %vm386, %vm387
      %v389 = vsel %vm388, %v380, %v385
      %v390 = vmul.f32 %v361, %v389
      %v391 = vmul.f32 %v362, %v389
      %v392 = vmul.f32 %v363, %v389
      %v393 = vmul.f32 %v364, %v389
      %v394 = vld [vmem:[%s2] sm:$0xf]
      %396 = vset.pattern.permute.xlu0 0
      %397 = vperm.xlu0 %396, %v394
      %v398 = vpop.permute.xlu0 %397
      %v400 = vmul.f32 %v390, %v398
      %v401 = vmul.f32 %v391, %v398
      %v402 = vmul.f32 %v392, %v398
      %v403 = vmul.f32 %v393, %v398
      %v404 = vld [vmem:[%s3] sm:$0xf]
      %406 = vset.pattern.permute.xlu0 0
      %407 = vperm.xlu0 %406, %v404
      %v408 = vpop.permute.xlu0 %407
      %v410 = vadd.f32 %v400, %v408
      %v411 = vadd.f32 %v401, %v408
      %v412 = vadd.f32 %v402, %v408
      %v413 = vadd.f32 %v403, %v408
      %vm414 = vcmp.ge.f32.partialorder %v410, 0.0
      %vm415 = vcmp.ge.f32.partialorder %v411, 0.0
      %vm416 = vcmp.ge.f32.partialorder %v412, 0.0
      %vm417 = vcmp.ge.f32.partialorder %v413, 0.0
      %v418 = vmul.f32 %v410, 0.01
      %v419 = vmul.f32 %v411, 0.01
      %v420 = vmul.f32 %v412, 0.01
      %v421 = vmul.f32 %v413, 0.01
      %v422 = vsel %vm414, %v410, %v418
      %v423 = vsel %vm415, %v411, %v419
      %v424 = vsel %vm416, %v412, %v420
      %v425 = vsel %vm417, %v413, %v421
      %v430 = vrot.slane %v423, 4
      %v431 = vrot.slane %v425, 4
      %v432 = vsel %vm343, %v422, %v430
      %v433 = vsel %vm343, %v424, %v431
      %436 = vst [vmem:[%s197] sm:$0xff] %v432
      %437 = vst [vmem:[%s197 + $0x8] sm:$0xff] %v433
      %p438 = scmp.lt.s32.totalorder %s15, 1
      %s439 = scalar_select %p438, %s15, 1
      %s440 = smul.addr %s439, 4
      %s441 = smul.addr %s440, 4
      %s442 = scalar_lea.vmem %s4, %s441
      // Predicated region
      $region37: #{_lambda_.9} parent=35 // pred_check
        %p443 = pneg %p122
      $region38: #{_lambda_.9} parent=35 // pred_check_branch
        %445 = sbr.rel (%p443) target = $region40
      $region39: #{_lambda_.9} parent=35 // pred_region
        _
      $region40: #{_lambda_.9} parent=35 // pred_fallthru
        _
    $region36: #{_lambda_.9} parent=5 // pred_fallthru
      _
    %p446 = scmp.le.s32.totalorder 2, %s10
    // Predicated region
    $region41: #{_lambda_.9} parent=5 // pred_check
      %p447 = pneg %p446
    $region42: #{_lambda_.9} parent=5 // pred_check_branch
      %449 = sbr.rel (%p447) target = $region44
    $region43: #{_lambda_.9} parent=5 // pred_region
      %s450 = ssub.s32 %s10, 2
      // Predicated region
      $region45: #{_lambda_.9} parent=43 // pred_check
        %p451 = pneg %p128
      $region46: #{_lambda_.9} parent=43 // pred_check_branch
        %453 = sbr.rel (%p451) target = $region48
      $region47: #{_lambda_.9} parent=43 // pred_region
        %p454 = scmp.lt.s32.totalorder %s16, 1
        %s455 = scalar_select %p454, %s16, 1
        %s456 = smul.addr %s455, 4
        %s457 = smul.addr %s456, 4
        %s458 = scalar_lea.vmem %s4, %s457
      $region48: #{_lambda_.9} parent=43 // pred_fallthru
        _
    $region44: #{_lambda_.9} parent=5 // pred_fallthru
      _
  $region6: #{_lambda_.9} parent=0 // loop_footer
    %s14 = sadd.s32 1, %s10
  $region7: #{_lambda_.9} parent=0 // loop_footer_branch
    %9 = sbr.rel target = $region3
  $region8: #{_lambda_.9} parent=0 // loop_exit
    _

// kernel: _lambda_.10
$region0: #{_lambda_.10}
  #allocation0 [shape = 'u32[]', space=smem, size = 0x4, offset = 0x4, fixed_abs, tag = 'smem constant byte address 0x4 - core index']
  #allocation1 [shape = 'u32[72,128]{1,0:T(1,128)}', space=vmem, size = 0x9000, scoped, tag = 'internal scratch']
  %s0 = inlined_call_operand.vmem [shape: f32[2,256,512], index: 0, kind: input, shape index: {}]
  %s1 = inlined_call_operand.vmem [shape: f32[4,256], index: 1, kind: input, shape index: {}]
  %s2 = inlined_call_operand.vmem [shape: f32[4,1], index: 2, kind: input, shape index: {}]
  %s3 = inlined_call_operand.vmem [shape: f32[4,1], index: 3, kind: input, shape index: {}]
  %s4 = inlined_call_operand.vmem [shape: f32[2,4,512], index: 4, kind: output, shape index: {}]
  %s5 = sld [smem:[#allocation0]]
  $region49: #{_lambda_.10} parent=0
    _
  %s7 = ssub.s32 1, %s5
  %s8 = scalar_select 0, %s7, %s5
  loop: start=0, step=1, limit=4
  $region2: #{_lambda_.10} parent=0 // loop_pre_header
    _
  $region3: #{_lambda_.10} parent=0 // loop_header
    %s10 = sphi 0, %s14
    %p11 = scmp.ge.s32.totalorder %s10, 4
    %s20 = sphi 0, %s22
    %s23 = sphi 0, %s20
    %s24 = sphi 0, %s23
    %s40 = sphi 0, %s24
    %s44 = sphi 0, %s44
    %s46 = sphi 0, %s44
    %s47 = sphi 0, %s46
    %s61 = sphi 0, %s47
    %s65 = sphi 0, %s65
    %s67 = sphi 0, %s65
    %s68 = sphi 0, %s67
    %s82 = sphi 0, %s68
    %s86 = sphi 0, %s86
    %s88 = sphi 0, %s86
    %s89 = sphi 0, %s88
    %s103 = sphi 0, %s89
    %s109 = sphi 0, %s111
    %s112 = sphi 0, %s109
    %s113 = sphi 0, %s112
    %s129 = sphi 0, %s113
  $region4: #{_lambda_.10} parent=0 // loop_header_branch
    %13 = sbr.rel (%p11) target = $region8
  $region5: #{_lambda_.10} parent=0 // loop_body
    %s15 = ssub.s32 %s10, 1
    %s16 = ssub.s32 %s10, 2
    %s17 = sadd.s32 %s10, 1
    %s18 = ssub.s32 %s10, %s17
    %p19 = scmp.eq.s32.totalorder %s18, 0
    %s21 = sadd.s32 %s20, 1
    %s22 = scalar_select %p19, %s20, %s21
    %p25 = pneg %p19
    %p26 = scmp.eq.s32.totalorder %s10, 1
    %p27 = por %p25, %p26
    %p28 = scmp.ne.s32.totalorder %s20, %s23
    %p29 = scmp.eq.s32.totalorder %s10, 0
    %p30 = por %p28, %p29
    %p31 = scmp.ne.s32.totalorder %s20, %s23
    %p32 = scmp.eq.s32.totalorder %s15, 1
    %p33 = por %p31, %p32
    %p34 = scmp.ne.s32.totalorder %s23, %s24
    %p35 = scmp.eq.s32.totalorder %s15, 0
    %p36 = por %p34, %p35
    %p37 = scmp.ne.s32.totalorder %s23, %s24
    %p38 = scmp.eq.s32.totalorder %s16, 1
    %p39 = por %p37, %p38
    %p41 = scmp.ne.s32.totalorder %s24, %s40
    %p42 = scmp.eq.s32.totalorder %s16, 0
    %p43 = por %p41, %p42
    %s45 = sadd.s32 %s44, 1
    %p48 = scmp.eq.s32.totalorder %s10, 1
    %p49 = scmp.ne.s32.totalorder %s44, %s46
    %p50 = scmp.eq.s32.totalorder %s10, 0
    %p51 = por %p49, %p50
    %p52 = scmp.ne.s32.totalorder %s44, %s46
    %p53 = scmp.eq.s32.totalorder %s15, 1
    %p54 = por %p52, %p53
    %p55 = scmp.ne.s32.totalorder %s46, %s47
    %p56 = scmp.eq.s32.totalorder %s15, 0
    %p57 = por %p55, %p56
    %p58 = scmp.ne.s32.totalorder %s46, %s47
    %p59 = scmp.eq.s32.totalorder %s16, 1
    %p60 = por %p58, %p59
    %p62 = scmp.ne.s32.totalorder %s47, %s61
    %p63 = scmp.eq.s32.totalorder %s16, 0
    %p64 = por %p62, %p63
    %s66 = sadd.s32 %s65, 1
    %p69 = scmp.eq.s32.totalorder %s10, 1
    %p70 = scmp.ne.s32.totalorder %s65, %s67
    %p71 = scmp.eq.s32.totalorder %s10, 0
    %p72 = por %p70, %p71
    %p73 = scmp.ne.s32.totalorder %s65, %s67
    %p74 = scmp.eq.s32.totalorder %s15, 1
    %p75 = por %p73, %p74
    %p76 = scmp.ne.s32.totalorder %s67, %s68
    %p77 = scmp.eq.s32.totalorder %s15, 0
    %p78 = por %p76, %p77
    %p79 = scmp.ne.s32.totalorder %s67, %s68
    %p80 = scmp.eq.s32.totalorder %s16, 1
    %p81 = por %p79, %p80
    %p83 = scmp.ne.s32.totalorder %s68, %s82
    %p84 = scmp.eq.s32.totalorder %s16, 0
    %p85 = por %p83, %p84
    %s87 = sadd.s32 %s86, 1
    %p90 = scmp.eq.s32.totalorder %s10, 1
    %p91 = scmp.ne.s32.totalorder %s86, %s88
    %p92 = scmp.eq.s32.totalorder %s10, 0
    %p93 = por %p91, %p92
    %p94 = scmp.ne.s32.totalorder %s86, %s88
    %p95 = scmp.eq.s32.totalorder %s15, 1
    %p96 = por %p94, %p95
    %p97 = scmp.ne.s32.totalorder %s88, %s89
    %p98 = scmp.eq.s32.totalorder %s15, 0
    %p99 = por %p97, %p98
    %p100 = scmp.ne.s32.totalorder %s88, %s89
    %p101 = scmp.eq.s32.totalorder %s16, 1
    %p102 = por %p100, %p101
    %p104 = scmp.ne.s32.totalorder %s89, %s103
    %p105 = scmp.eq.s32.totalorder %s16, 0
    %p106 = por %p104, %p105
    %s107 = ssub.s32 %s10, %s17
    %p108 = scmp.eq.s32.totalorder %s107, 0
    %s110 = sadd.s32 %s109, 1
    %s111 = scalar_select %p108, %s109, %s110
    %p114 = pneg %p108
    %p115 = scmp.eq.s32.totalorder %s10, 1
    %p116 = por %p114, %p115
    %p117 = scmp.ne.s32.totalorder %s109, %s112
    %p118 = scmp.eq.s32.totalorder %s10, 0
    %p119 = por %p117, %p118
    %p120 = scmp.ne.s32.totalorder %s109, %s112
    %p121 = scmp.eq.s32.totalorder %s15, 1
    %p122 = por %p120, %p121
    %p123 = scmp.ne.s32.totalorder %s112, %s113
    %p124 = scmp.eq.s32.totalorder %s15, 0
    %p125 = por %p123, %p124
    %p126 = scmp.ne.s32.totalorder %s112, %s113
    %p127 = scmp.eq.s32.totalorder %s16, 1
    %p128 = por %p126, %p127
    %p130 = scmp.ne.s32.totalorder %s113, %s129
    %p131 = scmp.eq.s32.totalorder %s16, 0
    %p132 = por %p130, %p131
    %p133 = scmp.le.s32.totalorder 1, %s10
    %p134 = scmp.lt.s32.totalorder %s10, 3
    %p135 = pnand %p133, %p134
    %p136 = pneg %p135
    // Predicated region
    $region9: #{_lambda_.10} parent=5 // pred_check
      _
    $region10: #{_lambda_.10} parent=5 // pred_check_branch
      %138 = sbr.rel (%p135) target = $region12
    $region11: #{_lambda_.10} parent=5 // pred_region
      %s139 = ssub.s32 %s10, 1
      // Predicated region
      $region13: #{_lambda_.10} parent=11 // pred_check
        %p140 = pneg %p57
      $region14: #{_lambda_.10} parent=11 // pred_check_branch
        %142 = sbr.rel (%p140) target = $region16
      $region15: #{_lambda_.10} parent=11 // pred_region
        _
      $region16: #{_lambda_.10} parent=11 // pred_fallthru
        _
      // Predicated region
      $region17: #{_lambda_.10} parent=11 // pred_check
        %p143 = pneg %p78
      $region18: #{_lambda_.10} parent=11 // pred_check_branch
        %145 = sbr.rel (%p143) target = $region20
      $region19: #{_lambda_.10} parent=11 // pred_region
        _
      $region20: #{_lambda_.10} parent=11 // pred_fallthru
        _
      // Predicated region
      $region21: #{_lambda_.10} parent=11 // pred_check
        %p146 = pneg %p99
      $region22: #{_lambda_.10} parent=11 // pred_check_branch
        %148 = sbr.rel (%p146) target = $region24
      $region23: #{_lambda_.10} parent=11 // pred_region
        _
      $region24: #{_lambda_.10} parent=11 // pred_fallthru
        _
    $region12: #{_lambda_.10} parent=5 // pred_fallthru
      _
    %p149 = scmp.lt.s32.totalorder %s10, 2
    // Predicated region
    $region25: #{_lambda_.10} parent=5 // pred_check
      %p150 = pneg %p149
    $region26: #{_lambda_.10} parent=5 // pred_check_branch
      %152 = sbr.rel (%p150) target = $region28
    $region27: #{_lambda_.10} parent=5 // pred_region
      // Predicated region
      $region29: #{_lambda_.10} parent=27 // pred_check
        %p153 = pneg %p30
      $region30: #{_lambda_.10} parent=27 // pred_check_branch
        %155 = sbr.rel (%p153) target = $region32
      $region31: #{_lambda_.10} parent=27 // pred_region
        %p156 = scmp.lt.s32.totalorder %s10, 1
        %s157 = scalar_select %p156, %s10, 1
        %s158 = smul.addr %s157, 128
        %s159 = smul.addr %s158, 8
        %s160 = scalar_lea.vmem %s0, %s159
      $region32: #{_lambda_.10} parent=27 // pred_fallthru
        _
    $region28: #{_lambda_.10} parent=5 // pred_fallthru
      _
    %p161 = scmp.le.s32.totalorder 1, %s10
    %p162 = scmp.lt.s32.totalorder %s10, 3
    %p163 = pnand %p161, %p162
    %p164 = pneg %p163
    // Predicated region
    $region33: #{_lambda_.10} parent=5 // pred_check
      _
    $region34: #{_lambda_.10} parent=5 // pred_check_branch
      %166 = sbr.rel (%p163) target = $region36
    $region35: #{_lambda_.10} parent=5 // pred_region
      %s167 = ssub.s32 %s10, 1
      %p168 = scmp.lt.s32.totalorder %s15, 1
      %s169 = scalar_select %p168, %s15, 1
      %s170 = smul.addr %s169, 128
      %s171 = smul.addr %s170, 8
      %s172 = scalar_lea.vmem %s0, %s171
      %p173 = pneg %p36
      %p174 = pneg %p33
      %p175 = pneg %p57
      %p176 = pneg %p54
      %p177 = pneg %p78
      %p178 = pneg %p75
      %p179 = pneg %p99
      %p180 = pneg %p96
      %p181 = pneg %p125
      %p182 = pneg %p122
      %p183 = scmp.lt.s32.totalorder %s15, 1
      %s184 = scalar_select %p183, %s15, 1
      %s185 = smul.addr %s184, 4
      %s186 = smul.addr %s185, 4
      %s187 = scalar_lea.vmem %s4, %s186
      %p188 = scmp.lt.s32.totalorder %s15, 1
      %s189 = scalar_select %p188, %s15, 1
      %s190 = smul.addr %s189, 128
      %s191 = smul.addr %s190, 8
      %s192 = scalar_lea.vmem %s0, %s191
      %p193 = scmp.lt.s32.totalorder %s15, 1
      %s194 = scalar_select %p193, %s15, 1
      %s195 = smul.addr %s194, 4
      %s196 = smul.addr %s195, 4
      %s197 = scalar_lea.vmem %s4, %s196
      %v198 = vld [vmem:[%s192] sm:$0xff]
      %v199 = vld [vmem:[%s192 + $0x8] sm:$0xff]
      %v200 = vld [vmem:[%s192 + $0x10] sm:$0xff]
      %v201 = vld [vmem:[%s192 + $0x18] sm:$0xff]
      %v202 = vld [vmem:[%s192 + $0x20] sm:$0xff]
      %v203 = vld [vmem:[%s192 + $0x28] sm:$0xff]
      %v204 = vld [vmem:[%s192 + $0x30] sm:$0xff]
      %v205 = vld [vmem:[%s192 + $0x38] sm:$0xff]
      %v206 = vld [vmem:[%s192 + $0x40] sm:$0xff]
      %v207 = vld [vmem:[%s192 + $0x48] sm:$0xff]
      %v208 = vld [vmem:[%s192 + $0x50] sm:$0xff]
      %v209 = vld [vmem:[%s192 + $0x58] sm:$0xff]
      %v210 = vld [vmem:[%s192 + $0x60] sm:$0xff]
      %v211 = vld [vmem:[%s192 + $0x68] sm:$0xff]
      %v212 = vld [vmem:[%s192 + $0x70] sm:$0xff]
      %v213 = vld [vmem:[%s192 + $0x78] sm:$0xff]
      %v214 = vld [vmem:[%s192 + $0x80] sm:$0xff]
      %v215 = vld [vmem:[%s192 + $0x88] sm:$0xff]
      %v216 = vld [vmem:[%s192 + $0x90] sm:$0xff]
      %v217 = vld [vmem:[%s192 + $0x98] sm:$0xff]
      %v218 = vld [vmem:[%s192 + $0xa0] sm:$0xff]
      %v219 = vld [vmem:[%s192 + $0xa8] sm:$0xff]
      %v220 = vld [vmem:[%s192 + $0xb0] sm:$0xff]
      %v221 = vld [vmem:[%s192 + $0xb8] sm:$0xff]
      %v222 = vld [vmem:[%s192 + $0xc0] sm:$0xff]
      %v223 = vld [vmem:[%s192 + $0xc8] sm:$0xff]
      %v224 = vld [vmem:[%s192 + $0xd0] sm:$0xff]
      %v225 = vld [vmem:[%s192 + $0xd8] sm:$0xff]
      %v226 = vld [vmem:[%s192 + $0xe0] sm:$0xff]
      %v227 = vld [vmem:[%s192 + $0xe8] sm:$0xff]
      %v228 = vld [vmem:[%s192 + $0xf0] sm:$0xff]
      %v229 = vld [vmem:[%s192 + $0xf8] sm:$0xff]
      %v230 = vld [vmem:[%s192 + $0x100] sm:$0xff]
      %v231 = vld [vmem:[%s192 + $0x108] sm:$0xff]
      %v232 = vld [vmem:[%s192 + $0x110] sm:$0xff]
      %v233 = vld [vmem:[%s192 + $0x118] sm:$0xff]
      %v234 = vld [vmem:[%s192 + $0x120] sm:$0xff]
      %v235 = vld [vmem:[%s192 + $0x128] sm:$0xff]
      %v236 = vld [vmem:[%s192 + $0x130] sm:$0xff]
      %v237 = vld [vmem:[%s192 + $0x138] sm:$0xff]
      %v238 = vld [vmem:[%s192 + $0x140] sm:$0xff]
      %v239 = vld [vmem:[%s192 + $0x148] sm:$0xff]
      %v240 = vld [vmem:[%s192 + $0x150] sm:$0xff]
      %v241 = vld [vmem:[%s192 + $0x158] sm:$0xff]
      %v242 = vld [vmem:[%s192 + $0x160] sm:$0xff]
      %v243 = vld [vmem:[%s192 + $0x168] sm:$0xff]
      %v244 = vld [vmem:[%s192 + $0x170] sm:$0xff]
      %v245 = vld [vmem:[%s192 + $0x178] sm:$0xff]
      %v246 = vld [vmem:[%s192 + $0x180] sm:$0xff]
      %v247 = vld [vmem:[%s192 + $0x188] sm:$0xff]
      %v248 = vld [vmem:[%s192 + $0x190] sm:$0xff]
      %v249 = vld [vmem:[%s192 + $0x198] sm:$0xff]
      %v250 = vld [vmem:[%s192 + $0x1a0] sm:$0xff]
      %v251 = vld [vmem:[%s192 + $0x1a8] sm:$0xff]
      %v252 = vld [vmem:[%s192 + $0x1b0] sm:$0xff]
      %v253 = vld [vmem:[%s192 + $0x1b8] sm:$0xff]
      %v254 = vld [vmem:[%s192 + $0x1c0] sm:$0xff]
      %v255 = vld [vmem:[%s192 + $0x1c8] sm:$0xff]
      %v256 = vld [vmem:[%s192 + $0x1d0] sm:$0xff]
      %v257 = vld [vmem:[%s192 + $0x1d8] sm:$0xff]
      %v258 = vld [vmem:[%s192 + $0x1e0] sm:$0xff]
      %v259 = vld [vmem:[%s192 + $0x1e8] sm:$0xff]
      %v260 = vld [vmem:[%s192 + $0x1f0] sm:$0xff]
      %v261 = vld [vmem:[%s192 + $0x1f8] sm:$0xff]
      %v262 = vld [vmem:[%s192 + $0x200] sm:$0xff]
      %v263 = vld [vmem:[%s192 + $0x208] sm:$0xff]
      %v264 = vld [vmem:[%s192 + $0x210] sm:$0xff]
      %v265 = vld [vmem:[%s192 + $0x218] sm:$0xff]
      %v266 = vld [vmem:[%s192 + $0x220] sm:$0xff]
      %v267 = vld [vmem:[%s192 + $0x228] sm:$0xff]
      %v268 = vld [vmem:[%s192 + $0x230] sm:$0xff]
      %v269 = vld [vmem:[%s192 + $0x238] sm:$0xff]
      %v270 = vld [vmem:[%s192 + $0x240] sm:$0xff]
      %v271 = vld [vmem:[%s192 + $0x248] sm:$0xff]
      %v272 = vld [vmem:[%s192 + $0x250] sm:$0xff]
      %v273 = vld [vmem:[%s192 + $0x258] sm:$0xff]
      %v274 = vld [vmem:[%s192 + $0x260] sm:$0xff]
      %v275 = vld [vmem:[%s192 + $0x268] sm:$0xff]
      %v276 = vld [vmem:[%s192 + $0x270] sm:$0xff]
      %v277 = vld [vmem:[%s192 + $0x278] sm:$0xff]
      %v278 = vld [vmem:[%s192 + $0x280] sm:$0xff]
      %v279 = vld [vmem:[%s192 + $0x288] sm:$0xff]
      %v280 = vld [vmem:[%s192 + $0x290] sm:$0xff]
      %v281 = vld [vmem:[%s192 + $0x298] sm:$0xff]
      %v282 = vld [vmem:[%s192 + $0x2a0] sm:$0xff]
      %v283 = vld [vmem:[%s192 + $0x2a8] sm:$0xff]
      %v284 = vld [vmem:[%s192 + $0x2b0] sm:$0xff]
      %v285 = vld [vmem:[%s192 + $0x2b8] sm:$0xff]
      %v286 = vld [vmem:[%s192 + $0x2c0] sm:$0xff]
      %v287 = vld [vmem:[%s192 + $0x2c8] sm:$0xff]
      %v288 = vld [vmem:[%s192 + $0x2d0] sm:$0xff]
      %v289 = vld [vmem:[%s192 + $0x2d8] sm:$0xff]
      %v290 = vld [vmem:[%s192 + $0x2e0] sm:$0xff]
      %v291 = vld [vmem:[%s192 + $0x2e8] sm:$0xff]
      %v292 = vld [vmem:[%s192 + $0x2f0] sm:$0xff]
      %v293 = vld [vmem:[%s192 + $0x2f8] sm:$0xff]
      %v294 = vld [vmem:[%s192 + $0x300] sm:$0xff]
      %v295 = vld [vmem:[%s192 + $0x308] sm:$0xff]
      %v296 = vld [vmem:[%s192 + $0x310] sm:$0xff]
      %v297 = vld [vmem:[%s192 + $0x318] sm:$0xff]
      %v298 = vld [vmem:[%s192 + $0x320] sm:$0xff]
      %v299 = vld [vmem:[%s192 + $0x328] sm:$0xff]
      %v300 = vld [vmem:[%s192 + $0x330] sm:$0xff]
      %v301 = vld [vmem:[%s192 + $0x338] sm:$0xff]
      %v302 = vld [vmem:[%s192 + $0x340] sm:$0xff]
      %v303 = vld [vmem:[%s192 + $0x348] sm:$0xff]
      %v304 = vld [vmem:[%s192 + $0x350] sm:$0xff]
      %v305 = vld [vmem:[%s192 + $0x358] sm:$0xff]
      %v306 = vld [vmem:[%s192 + $0x360] sm:$0xff]
      %v307 = vld [vmem:[%s192 + $0x368] sm:$0xff]
      %v308 = vld [vmem:[%s192 + $0x370] sm:$0xff]
      %v309 = vld [vmem:[%s192 + $0x378] sm:$0xff]
      %v310 = vld [vmem:[%s192 + $0x380] sm:$0xff]
      %v311 = vld [vmem:[%s192 + $0x388] sm:$0xff]
      %v312 = vld [vmem:[%s192 + $0x390] sm:$0xff]
      %v313 = vld [vmem:[%s192 + $0x398] sm:$0xff]
      %v314 = vld [vmem:[%s192 + $0x3a0] sm:$0xff]
      %v315 = vld [vmem:[%s192 + $0x3a8] sm:$0xff]
      %v316 = vld [vmem:[%s192 + $0x3b0] sm:$0xff]
      %v317 = vld [vmem:[%s192 + $0x3b8] sm:$0xff]
      %v318 = vld [vmem:[%s192 + $0x3c0] sm:$0xff]
      %v319 = vld [vmem:[%s192 + $0x3c8] sm:$0xff]
      %v320 = vld [vmem:[%s192 + $0x3d0] sm:$0xff]
      %v321 = vld [vmem:[%s192 + $0x3d8] sm:$0xff]
      %v322 = vld [vmem:[%s192 + $0x3e0] sm:$0xff]
      %v323 = vld [vmem:[%s192 + $0x3e8] sm:$0xff]
      %v324 = vld [vmem:[%s192 + $0x3f0] sm:$0xff]
      %v325 = vld [vmem:[%s192 + $0x3f8] sm:$0xff]
      %v326 = vld [vmem:[%s1] sm:$0xff]
      %328 = vst [vmem:[#allocation1] ss:$2 sm:$0xff] %v326
      %v329 = vld.sshfl [vmem:[#allocation1] sm:$0xff pattern:$0x75316420]
      %v330 = vld.sshfl [vmem:[#allocation1 + $0x8] sm:$0xff pattern:$0x75316420]
      %333 = vmatpush.msra.mxu0 %v258
      %334 = vmatpush.msra.mxu0 %v254
      %335 = vmatpush.msra.mxu0 %v250
      %336 = vmatpush.msra.mxu0 %v246
      %337 = vmatpush.msra.mxu0 %v242
      %338 = vmatpush.msra.mxu0 %v238
      %339 = vmatpush.msra.mxu0 %v234
      %340 = vmatpush.msra.mxu0 %v230
      %341 = vmatpush.msra.mxu0 %v226
      %342 = vmatpush.msra.mxu0 %v222
      %343 = vmatpush.msra.mxu0 %v218
      %344 = vmatpush.msra.mxu0 %v214
      %345 = vmatpush.msra.mxu0 %v210
      %346 = vmatpush.msra.mxu0 %v206
      %347 = vmatpush.msra.mxu0 %v202
      %348 = vmatpush.msra.mxu0 %v198
      %349 = vmatmul.f32.gmra.mxu0 %v329
      %v350 = vpop.f32.mrf.mxu0
      %v351 = vadd.f32 0.0, %v350
      %352 = vdwg.mxu0
      %353 = vmatpush.msra.mxu0 %v322
      %354 = vmatpush.msra.mxu0 %v318
      %355 = vmatpush.msra.mxu0 %v314
      %356 = vmatpush.msra.mxu0 %v310
      %357 = vmatpush.msra.mxu0 %v306
      %358 = vmatpush.msra.mxu0 %v302
      %359 = vmatpush.msra.mxu0 %v298
      %360 = vmatpush.msra.mxu0 %v294
      %361 = vmatpush.msra.mxu0 %v290
      %362 = vmatpush.msra.mxu0 %v286
      %363 = vmatpush.msra.mxu0 %v282
      %364 = vmatpush.msra.mxu0 %v278
      %365 = vmatpush.msra.mxu0 %v274
      %366 = vmatpush.msra.mxu0 %v270
      %367 = vmatpush.msra.mxu0 %v266
      %368 = vmatpush.msra.mxu0 %v262
      %369 = vmatmul.f32.gmra.mxu0 %v330
      %v370 = vpop.f32.mrf.mxu0
      %v371 = vadd.f32 %v351, %v370
      %372 = vdwg.mxu0
      %373 = vmatpush.msra.mxu0 %v259
      %374 = vmatpush.msra.mxu0 %v255
      %375 = vmatpush.msra.mxu0 %v251
      %376 = vmatpush.msra.mxu0 %v247
      %377 = vmatpush.msra.mxu0 %v243
      %378 = vmatpush.msra.mxu0 %v239
      %379 = vmatpush.msra.mxu0 %v235
      %380 = vmatpush.msra.mxu0 %v231
      %381 = vmatpush.msra.mxu0 %v227
      %382 = vmatpush.msra.mxu0 %v223
      %383 = vmatpush.msra.mxu0 %v219
      %384 = vmatpush.msra.mxu0 %v215
      %385 = vmatpush.msra.mxu0 %v211
      %386 = vmatpush.msra.mxu0 %v207
      %387 = vmatpush.msra.mxu0 %v203
      %388 = vmatpush.msra.mxu0 %v199
      %389 = vmatmul.f32.gmra.mxu0 %v329
      %v390 = vpop.f32.mrf.mxu0
      %v391 = vadd.f32 0.0, %v390
      %392 = vdwg.mxu0
      %393 = vmatpush.msra.mxu0 %v323
      %394 = vmatpush.msra.mxu0 %v319
      %395 = vmatpush.msra.mxu0 %v315
      %396 = vmatpush.msra.mxu0 %v311
      %397 = vmatpush.msra.mxu0 %v307
      %398 = vmatpush.msra.mxu0 %v303
      %399 = vmatpush.msra.mxu0 %v299
      %400 = vmatpush.msra.mxu0 %v295
      %401 = vmatpush.msra.mxu0 %v291
      %402 = vmatpush.msra.mxu0 %v287
      %403 = vmatpush.msra.mxu0 %v283
      %404 = vmatpush.msra.mxu0 %v279
      %405 = vmatpush.msra.mxu0 %v275
      %406 = vmatpush.msra.mxu0 %v271
      %407 = vmatpush.msra.mxu0 %v267
      %408 = vmatpush.msra.mxu0 %v263
      %409 = vmatmul.f32.gmra.mxu0 %v330
      %v410 = vpop.f32.mrf.mxu0
      %v411 = vadd.f32 %v391, %v410
      %412 = vdwg.mxu0
      %413 = vmatpush.msra.mxu0 %v260
      %414 = vmatpush.msra.mxu0 %v256
      %415 = vmatpush.msra.mxu0 %v252
      %416 = vmatpush.msra.mxu0 %v248
      %417 = vmatpush.msra.mxu0 %v244
      %418 = vmatpush.msra.mxu0 %v240
      %419 = vmatpush.msra.mxu0 %v236
      %420 = vmatpush.msra.mxu0 %v232
      %421 = vmatpush.msra.mxu0 %v228
      %422 = vmatpush.msra.mxu0 %v224
      %423 = vmatpush.msra.mxu0 %v220
      %424 = vmatpush.msra.mxu0 %v216
      %425 = vmatpush.msra.mxu0 %v212
      %426 = vmatpush.msra.mxu0 %v208
      %427 = vmatpush.msra.mxu0 %v204
      %428 = vmatpush.msra.mxu0 %v200
      %429 = vmatmul.f32.gmra.mxu0 %v329
      %v430 = vpop.f32.mrf.mxu0
      %v431 = vadd.f32 0.0, %v430
      %432 = vdwg.mxu0
      %433 = vmatpush.msra.mxu0 %v324
      %434 = vmatpush.msra.mxu0 %v320
      %435 = vmatpush.msra.mxu0 %v316
      %436 = vmatpush.msra.mxu0 %v312
      %437 = vmatpush.msra.mxu0 %v308
      %438 = vmatpush.msra.mxu0 %v304
      %439 = vmatpush.msra.mxu0 %v300
      %440 = vmatpush.msra.mxu0 %v296
      %441 = vmatpush.msra.mxu0 %v292
      %442 = vmatpush.msra.mxu0 %v288
      %443 = vmatpush.msra.mxu0 %v284
      %444 = vmatpush.msra.mxu0 %v280
      %445 = vmatpush.msra.mxu0 %v276
      %446 = vmatpush.msra.mxu0 %v272
      %447 = vmatpush.msra.mxu0 %v268
      %448 = vmatpush.msra.mxu0 %v264
      %449 = vmatmul.f32.gmra.mxu0 %v330
      %v450 = vpop.f32.mrf.mxu0
      %v451 = vadd.f32 %v431, %v450
      %452 = vdwg.mxu0
      %453 = vmatpush.msra.mxu0 %v261
      %454 = vmatpush.msra.mxu0 %v257
      %455 = vmatpush.msra.mxu0 %v253
      %456 = vmatpush.msra.mxu0 %v249
      %457 = vmatpush.msra.mxu0 %v245
      %458 = vmatpush.msra.mxu0 %v241
      %459 = vmatpush.msra.mxu0 %v237
      %460 = vmatpush.msra.mxu0 %v233
      %461 = vmatpush.msra.mxu0 %v229
      %462 = vmatpush.msra.mxu0 %v225
      %463 = vmatpush.msra.mxu0 %v221
      %464 = vmatpush.msra.mxu0 %v217
      %465 = vmatpush.msra.mxu0 %v213
      %466 = vmatpush.msra.mxu0 %v209
      %467 = vmatpush.msra.mxu0 %v205
      %468 = vmatpush.msra.mxu0 %v201
      %469 = vmatmul.f32.gmra.mxu0 %v329
      %v470 = vpop.f32.mrf.mxu0
      %v471 = vadd.f32 0.0, %v470
      %472 = vdwg.mxu0
      %473 = vmatpush.msra.mxu0 %v325
      %474 = vmatpush.msra.mxu0 %v321
      %475 = vmatpush.msra.mxu0 %v317
      %476 = vmatpush.msra.mxu0 %v313
      %477 = vmatpush.msra.mxu0 %v309
      %478 = vmatpush.msra.mxu0 %v305
      %479 = vmatpush.msra.mxu0 %v301
      %480 = vmatpush.msra.mxu0 %v297
      %481 = vmatpush.msra.mxu0 %v293
      %482 = vmatpush.msra.mxu0 %v289
      %483 = vmatpush.msra.mxu0 %v285
      %484 = vmatpush.msra.mxu0 %v281
      %485 = vmatpush.msra.mxu0 %v277
      %486 = vmatpush.msra.mxu0 %v273
      %487 = vmatpush.msra.mxu0 %v269
      %488 = vmatpush.msra.mxu0 %v265
      %489 = vmatmul.f32.gmra.mxu0 %v330
      %v490 = vpop.f32.mrf.mxu0
      %v491 = vadd.f32 %v471, %v490
      %492 = vdwg.mxu0
      %vm493 = vcmask 1043456
      %v494 = vsel %vm493, %v371, 0.0
      %v495 = vsel %vm493, %v411, 0.0
      %v496 = vadd.f32 %v494, %v495
      %v497 = vsel %vm493, %v451, 0.0
      %v498 = vadd.f32 %v496, %v497
      %v499 = vsel %vm493, %v491, 0.0
      %v500 = vadd.f32 %v498, %v499
      %501 = vadd.xlane.f32.xlu0 %v500
      %v502 = vpop.xlane.xlu0 %501
      %v503 = vrcp.pop 512.0
      %v504 = vmul.f32 512.0, %v503
      %v505 = vsub.f32 1.0, %v504
      %v506 = vmul.f32 %v503, %v505
      %v507 = vadd.f32 %v503, %v506
      %vm508 = vweird.f32 %v503
      %v509 = vsel %vm508, %v503, %v507
      %v510 = vmul.f32 %v502, %v509
      %v511 = vsub.f32 %v371, %v510
      %v512 = vsub.f32 %v411, %v510
      %v513 = vsub.f32 %v451, %v510
      %v514 = vsub.f32 %v491, %v510
      %v515 = vmul.f32 %v511, %v511
      %v516 = vmul.f32 %v512, %v512
      %v517 = vmul.f32 %v513, %v513
      %v518 = vmul.f32 %v514, %v514
      %v519 = vsel %vm493, %v515, 0.0
      %v520 = vsel %vm493, %v516, 0.0
      %v521 = vadd.f32 %v519, %v520
      %v522 = vsel %vm493, %v517, 0.0
      %v523 = vadd.f32 %v521, %v522
      %v524 = vsel %vm493, %v518, 0.0
      %v525 = vadd.f32 %v523, %v524
      %526 = vadd.xlane.f32.xlu0 %v525
      %v527 = vpop.xlane.xlu0 %526
      %v528 = vmul.f32 %v527, %v509
      %v529 = vadd.f32 %v528, 1e-05
      %v530 = vrsqrt.pop %v529
      %v531 = vmul.f32 %v530, %v529
      %v532 = vmul.f32 %v531, %v530
      %v533 = vmul.f32 0.5, %v532
      %v534 = vsub.f32 1.5, %v533
      %v535 = vmul.f32 %v530, %v534
      %vm536 = vweird.f32 %v529
      %vm537 = vweird.f32 %v530
      %vm538 = vmor %vm536, %vm537
      %v539 = vsel %vm538, %v530, %v535
      %v540 = vmul.f32 %v511, %v539
      %v541 = vmul.f32 %v512, %v539
      %v542 = vmul.f32 %v513, %v539
      %v543 = vmul.f32 %v514, %v539
      %v544 = vld [vmem:[%s2] sm:$0xf]
      %546 = vset.pattern.permute.xlu0 0
      %547 = vperm.xlu0 %546, %v544
      %v548 = vpop.permute.xlu0 %547
      %v550 = vmul.f32 %v540, %v548
      %v551 = vmul.f32 %v541, %v548
      %v552 = vmul.f32 %v542, %v548
      %v553 = vmul.f32 %v543, %v548
      %v554 = vld [vmem:[%s3] sm:$0xf]
      %556 = vset.pattern.permute.xlu0 0
      %557 = vperm.xlu0 %556, %v554
      %v558 = vpop.permute.xlu0 %557
      %v560 = vadd.f32 %v550, %v558
      %v561 = vadd.f32 %v551, %v558
      %v562 = vadd.f32 %v552, %v558
      %v563 = vadd.f32 %v553, %v558
      %vm564 = vcmp.ge.f32.partialorder %v560, 0.0
      %vm565 = vcmp.ge.f32.partialorder %v561, 0.0
      %vm566 = vcmp.ge.f32.partialorder %v562, 0.0
      %vm567 = vcmp.ge.f32.partialorder %v563, 0.0
      %v568 = vmul.f32 %v560, 0.01
      %v569 = vmul.f32 %v561, 0.01
      %v570 = vmul.f32 %v562, 0.01
      %v571 = vmul.f32 %v563, 0.01
      %v572 = vsel %vm564, %v560, %v568
      %v573 = vsel %vm565, %v561, %v569
      %v574 = vsel %vm566, %v562, %v570
      %v575 = vsel %vm567, %v563, %v571
      %v580 = vrot.slane %v573, 4
      %v581 = vrot.slane %v575, 4
      %v582 = vsel %vm493, %v572, %v580
      %v583 = vsel %vm493, %v574, %v581
      %586 = vst [vmem:[%s197] sm:$0xff] %v582
      %587 = vst [vmem:[%s197 + $0x8] sm:$0xff] %v583
      %p588 = scmp.lt.s32.totalorder %s15, 1
      %s589 = scalar_select %p588, %s15, 1
      %s590 = smul.addr %s589, 4
      %s591 = smul.addr %s590, 4
      %s592 = scalar_lea.vmem %s4, %s591
      // Predicated region
      $region37: #{_lambda_.10} parent=35 // pred_check
        %p593 = pneg %p122
      $region38: #{_lambda_.10} parent=35 // pred_check_branch
        %595 = sbr.rel (%p593) target = $region40
      $region39: #{_lambda_.10} parent=35 // pred_region
        _
      $region40: #{_lambda_.10} parent=35 // pred_fallthru
        _
    $region36: #{_lambda_.10} parent=5 // pred_fallthru
      _
    %p596 = scmp.le.s32.totalorder 2, %s10
    // Predicated region
    $region41: #{_lambda_.10} parent=5 // pred_check
      %p597 = pneg %p596
    $region42: #{_lambda_.10} parent=5 // pred_check_branch
      %599 = sbr.rel (%p597) target = $region44
    $region43: #{_lambda_.10} parent=5 // pred_region
      %s600 = ssub.s32 %s10, 2
      // Predicated region
      $region45: #{_lambda_.10} parent=43 // pred_check
        %p601 = pneg %p128
      $region46: #{_lambda_.10} parent=43 // pred_check_branch
        %603 = sbr.rel (%p601) target = $region48
      $region47: #{_lambda_.10} parent=43 // pred_region
        %p604 = scmp.lt.s32.totalorder %s16, 1
        %s605 = scalar_select %p604, %s16, 1
        %s606 = smul.addr %s605, 4
        %s607 = smul.addr %s606, 4
        %s608 = scalar_lea.vmem %s4, %s607
      $region48: #{_lambda_.10} parent=43 // pred_fallthru
        _
    $region44: #{_lambda_.10} parent=5 // pred_fallthru
      _
  $region6: #{_lambda_.10} parent=0 // loop_footer
    %s14 = sadd.s32 1, %s10
  $region7: #{_lambda_.10} parent=0 // loop_footer_branch
    %9 = sbr.rel target = $region3
  $region8: #{_lambda_.10} parent=0 // loop_exit
    _

// kernel: _lambda_.11
$region0: #{_lambda_.11}
  #allocation0 [shape = 'u32[]', space=smem, size = 0x4, offset = 0x4, fixed_abs, tag = 'smem constant byte address 0x4 - core index']
  #allocation1 [shape = 'u32[72,128]{1,0:T(1,128)}', space=vmem, size = 0x9000, scoped, tag = 'internal scratch']
  %s0 = inlined_call_operand.vmem [shape: f32[2,384,512], index: 0, kind: input, shape index: {}]
  %s1 = inlined_call_operand.vmem [shape: f32[4,384], index: 1, kind: input, shape index: {}]
  %s2 = inlined_call_operand.vmem [shape: f32[4,1], index: 2, kind: input, shape index: {}]
  %s3 = inlined_call_operand.vmem [shape: f32[4,1], index: 3, kind: input, shape index: {}]
  %s4 = inlined_call_operand.vmem [shape: f32[2,4,512], index: 4, kind: output, shape index: {}]
  %s5 = sld [smem:[#allocation0]]
  $region49: #{_lambda_.11} parent=0
    _
  %s7 = ssub.s32 1, %s5
  %s8 = scalar_select 0, %s7, %s5
  loop: start=0, step=1, limit=4
  $region2: #{_lambda_.11} parent=0 // loop_pre_header
    _
  $region3: #{_lambda_.11} parent=0 // loop_header
    %s10 = sphi 0, %s14
    %p11 = scmp.ge.s32.totalorder %s10, 4
    %s20 = sphi 0, %s22
    %s23 = sphi 0, %s20
    %s24 = sphi 0, %s23
    %s40 = sphi 0, %s24
    %s44 = sphi 0, %s44
    %s46 = sphi 0, %s44
    %s47 = sphi 0, %s46
    %s61 = sphi 0, %s47
    %s65 = sphi 0, %s65
    %s67 = sphi 0, %s65
    %s68 = sphi 0, %s67
    %s82 = sphi 0, %s68
    %s86 = sphi 0, %s86
    %s88 = sphi 0, %s86
    %s89 = sphi 0, %s88
    %s103 = sphi 0, %s89
    %s109 = sphi 0, %s111
    %s112 = sphi 0, %s109
    %s113 = sphi 0, %s112
    %s129 = sphi 0, %s113
  $region4: #{_lambda_.11} parent=0 // loop_header_branch
    %13 = sbr.rel (%p11) target = $region8
  $region5: #{_lambda_.11} parent=0 // loop_body
    %s15 = ssub.s32 %s10, 1
    %s16 = ssub.s32 %s10, 2
    %s17 = sadd.s32 %s10, 1
    %s18 = ssub.s32 %s10, %s17
    %p19 = scmp.eq.s32.totalorder %s18, 0
    %s21 = sadd.s32 %s20, 1
    %s22 = scalar_select %p19, %s20, %s21
    %p25 = pneg %p19
    %p26 = scmp.eq.s32.totalorder %s10, 1
    %p27 = por %p25, %p26
    %p28 = scmp.ne.s32.totalorder %s20, %s23
    %p29 = scmp.eq.s32.totalorder %s10, 0
    %p30 = por %p28, %p29
    %p31 = scmp.ne.s32.totalorder %s20, %s23
    %p32 = scmp.eq.s32.totalorder %s15, 1
    %p33 = por %p31, %p32
    %p34 = scmp.ne.s32.totalorder %s23, %s24
    %p35 = scmp.eq.s32.totalorder %s15, 0
    %p36 = por %p34, %p35
    %p37 = scmp.ne.s32.totalorder %s23, %s24
    %p38 = scmp.eq.s32.totalorder %s16, 1
    %p39 = por %p37, %p38
    %p41 = scmp.ne.s32.totalorder %s24, %s40
    %p42 = scmp.eq.s32.totalorder %s16, 0
    %p43 = por %p41, %p42
    %s45 = sadd.s32 %s44, 1
    %p48 = scmp.eq.s32.totalorder %s10, 1
    %p49 = scmp.ne.s32.totalorder %s44, %s46
    %p50 = scmp.eq.s32.totalorder %s10, 0
    %p51 = por %p49, %p50
    %p52 = scmp.ne.s32.totalorder %s44, %s46
    %p53 = scmp.eq.s32.totalorder %s15, 1
    %p54 = por %p52, %p53
    %p55 = scmp.ne.s32.totalorder %s46, %s47
    %p56 = scmp.eq.s32.totalorder %s15, 0
    %p57 = por %p55, %p56
    %p58 = scmp.ne.s32.totalorder %s46, %s47
    %p59 = scmp.eq.s32.totalorder %s16, 1
    %p60 = por %p58, %p59
    %p62 = scmp.ne.s32.totalorder %s47, %s61
    %p63 = scmp.eq.s32.totalorder %s16, 0
    %p64 = por %p62, %p63
    %s66 = sadd.s32 %s65, 1
    %p69 = scmp.eq.s32.totalorder %s10, 1
    %p70 = scmp.ne.s32.totalorder %s65, %s67
    %p71 = scmp.eq.s32.totalorder %s10, 0
    %p72 = por %p70, %p71
    %p73 = scmp.ne.s32.totalorder %s65, %s67
    %p74 = scmp.eq.s32.totalorder %s15, 1
    %p75 = por %p73, %p74
    %p76 = scmp.ne.s32.totalorder %s67, %s68
    %p77 = scmp.eq.s32.totalorder %s15, 0
    %p78 = por %p76, %p77
    %p79 = scmp.ne.s32.totalorder %s67, %s68
    %p80 = scmp.eq.s32.totalorder %s16, 1
    %p81 = por %p79, %p80
    %p83 = scmp.ne.s32.totalorder %s68, %s82
    %p84 = scmp.eq.s32.totalorder %s16, 0
    %p85 = por %p83, %p84
    %s87 = sadd.s32 %s86, 1
    %p90 = scmp.eq.s32.totalorder %s10, 1
    %p91 = scmp.ne.s32.totalorder %s86, %s88
    %p92 = scmp.eq.s32.totalorder %s10, 0
    %p93 = por %p91, %p92
    %p94 = scmp.ne.s32.totalorder %s86, %s88
    %p95 = scmp.eq.s32.totalorder %s15, 1
    %p96 = por %p94, %p95
    %p97 = scmp.ne.s32.totalorder %s88, %s89
    %p98 = scmp.eq.s32.totalorder %s15, 0
    %p99 = por %p97, %p98
    %p100 = scmp.ne.s32.totalorder %s88, %s89
    %p101 = scmp.eq.s32.totalorder %s16, 1
    %p102 = por %p100, %p101
    %p104 = scmp.ne.s32.totalorder %s89, %s103
    %p105 = scmp.eq.s32.totalorder %s16, 0
    %p106 = por %p104, %p105
    %s107 = ssub.s32 %s10, %s17
    %p108 = scmp.eq.s32.totalorder %s107, 0
    %s110 = sadd.s32 %s109, 1
    %s111 = scalar_select %p108, %s109, %s110
    %p114 = pneg %p108
    %p115 = scmp.eq.s32.totalorder %s10, 1
    %p116 = por %p114, %p115
    %p117 = scmp.ne.s32.totalorder %s109, %s112
    %p118 = scmp.eq.s32.totalorder %s10, 0
    %p119 = por %p117, %p118
    %p120 = scmp.ne.s32.totalorder %s109, %s112
    %p121 = scmp.eq.s32.totalorder %s15, 1
    %p122 = por %p120, %p121
    %p123 = scmp.ne.s32.totalorder %s112, %s113
    %p124 = scmp.eq.s32.totalorder %s15, 0
    %p125 = por %p123, %p124
    %p126 = scmp.ne.s32.totalorder %s112, %s113
    %p127 = scmp.eq.s32.totalorder %s16, 1
    %p128 = por %p126, %p127
    %p130 = scmp.ne.s32.totalorder %s113, %s129
    %p131 = scmp.eq.s32.totalorder %s16, 0
    %p132 = por %p130, %p131
    %p133 = scmp.le.s32.totalorder 1, %s10
    %p134 = scmp.lt.s32.totalorder %s10, 3
    %p135 = pnand %p133, %p134
    %p136 = pneg %p135
    // Predicated region
    $region9: #{_lambda_.11} parent=5 // pred_check
      _
    $region10: #{_lambda_.11} parent=5 // pred_check_branch
      %138 = sbr.rel (%p135) target = $region12
    $region11: #{_lambda_.11} parent=5 // pred_region
      %s139 = ssub.s32 %s10, 1
      // Predicated region
      $region13: #{_lambda_.11} parent=11 // pred_check
        %p140 = pneg %p57
      $region14: #{_lambda_.11} parent=11 // pred_check_branch
        %142 = sbr.rel (%p140) target = $region16
      $region15: #{_lambda_.11} parent=11 // pred_region
        _
      $region16: #{_lambda_.11} parent=11 // pred_fallthru
        _
      // Predicated region
      $region17: #{_lambda_.11} parent=11 // pred_check
        %p143 = pneg %p78
      $region18: #{_lambda_.11} parent=11 // pred_check_branch
        %145 = sbr.rel (%p143) target = $region20
      $region19: #{_lambda_.11} parent=11 // pred_region
        _
      $region20: #{_lambda_.11} parent=11 // pred_fallthru
        _
      // Predicated region
      $region21: #{_lambda_.11} parent=11 // pred_check
        %p146 = pneg %p99
      $region22: #{_lambda_.11} parent=11 // pred_check_branch
        %148 = sbr.rel (%p146) target = $region24
      $region23: #{_lambda_.11} parent=11 // pred_region
        _
      $region24: #{_lambda_.11} parent=11 // pred_fallthru
        _
    $region12: #{_lambda_.11} parent=5 // pred_fallthru
      _
    %p149 = scmp.lt.s32.totalorder %s10, 2
    // Predicated region
    $region25: #{_lambda_.11} parent=5 // pred_check
      %p150 = pneg %p149
    $region26: #{_lambda_.11} parent=5 // pred_check_branch
      %152 = sbr.rel (%p150) target = $region28
    $region27: #{_lambda_.11} parent=5 // pred_region
      // Predicated region
      $region29: #{_lambda_.11} parent=27 // pred_check
        %p153 = pneg %p30
      $region30: #{_lambda_.11} parent=27 // pred_check_branch
        %155 = sbr.rel (%p153) target = $region32
      $region31: #{_lambda_.11} parent=27 // pred_region
        %p156 = scmp.lt.s32.totalorder %s10, 1
        %s157 = scalar_select %p156, %s10, 1
        %s158 = smul.addr %s157, 192
        %s159 = smul.addr %s158, 8
        %s160 = scalar_lea.vmem %s0, %s159
      $region32: #{_lambda_.11} parent=27 // pred_fallthru
        _
    $region28: #{_lambda_.11} parent=5 // pred_fallthru
      _
    %p161 = scmp.le.s32.totalorder 1, %s10
    %p162 = scmp.lt.s32.totalorder %s10, 3
    %p163 = pnand %p161, %p162
    %p164 = pneg %p163
    // Predicated region
    $region33: #{_lambda_.11} parent=5 // pred_check
      _
    $region34: #{_lambda_.11} parent=5 // pred_check_branch
      %166 = sbr.rel (%p163) target = $region36
    $region35: #{_lambda_.11} parent=5 // pred_region
      %s167 = ssub.s32 %s10, 1
      %p168 = scmp.lt.s32.totalorder %s15, 1
      %s169 = scalar_select %p168, %s15, 1
      %s170 = smul.addr %s169, 192
      %s171 = smul.addr %s170, 8
      %s172 = scalar_lea.vmem %s0, %s171
      %p173 = pneg %p36
      %p174 = pneg %p33
      %p175 = pneg %p57
      %p176 = pneg %p54
      %p177 = pneg %p78
      %p178 = pneg %p75
      %p179 = pneg %p99
      %p180 = pneg %p96
      %p181 = pneg %p125
      %p182 = pneg %p122
      %p183 = scmp.lt.s32.totalorder %s15, 1
      %s184 = scalar_select %p183, %s15, 1
      %s185 = smul.addr %s184, 4
      %s186 = smul.addr %s185, 4
      %s187 = scalar_lea.vmem %s4, %s186
      %p188 = scmp.lt.s32.totalorder %s15, 1
      %s189 = scalar_select %p188, %s15, 1
      %s190 = smul.addr %s189, 192
      %s191 = smul.addr %s190, 8
      %s192 = scalar_lea.vmem %s0, %s191
      %p193 = scmp.lt.s32.totalorder %s15, 1
      %s194 = scalar_select %p193, %s15, 1
      %s195 = smul.addr %s194, 4
      %s196 = smul.addr %s195, 4
      %s197 = scalar_lea.vmem %s4, %s196
      %v198 = vld [vmem:[%s192] sm:$0xff]
      %v199 = vld [vmem:[%s192 + $0x8] sm:$0xff]
      %v200 = vld [vmem:[%s192 + $0x10] sm:$0xff]
      %v201 = vld [vmem:[%s192 + $0x18] sm:$0xff]
      %v202 = vld [vmem:[%s192 + $0x20] sm:$0xff]
      %v203 = vld [vmem:[%s192 + $0x28] sm:$0xff]
      %v204 = vld [vmem:[%s192 + $0x30] sm:$0xff]
      %v205 = vld [vmem:[%s192 + $0x38] sm:$0xff]
      %v206 = vld [vmem:[%s192 + $0x40] sm:$0xff]
      %v207 = vld [vmem:[%s192 + $0x48] sm:$0xff]
      %v208 = vld [vmem:[%s192 + $0x50] sm:$0xff]
      %v209 = vld [vmem:[%s192 + $0x58] sm:$0xff]
      %v210 = vld [vmem:[%s192 + $0x60] sm:$0xff]
      %v211 = vld [vmem:[%s192 + $0x68] sm:$0xff]
      %v212 = vld [vmem:[%s192 + $0x70] sm:$0xff]
      %v213 = vld [vmem:[%s192 + $0x78] sm:$0xff]
      %v214 = vld [vmem:[%s192 + $0x80] sm:$0xff]
      %v215 = vld [vmem:[%s192 + $0x88] sm:$0xff]
      %v216 = vld [vmem:[%s192 + $0x90] sm:$0xff]
      %v217 = vld [vmem:[%s192 + $0x98] sm:$0xff]
      %v218 = vld [vmem:[%s192 + $0xa0] sm:$0xff]
      %v219 = vld [vmem:[%s192 + $0xa8] sm:$0xff]
      %v220 = vld [vmem:[%s192 + $0xb0] sm:$0xff]
      %v221 = vld [vmem:[%s192 + $0xb8] sm:$0xff]
      %v222 = vld [vmem:[%s192 + $0xc0] sm:$0xff]
      %v223 = vld [vmem:[%s192 + $0xc8] sm:$0xff]
      %v224 = vld [vmem:[%s192 + $0xd0] sm:$0xff]
      %v225 = vld [vmem:[%s192 + $0xd8] sm:$0xff]
      %v226 = vld [vmem:[%s192 + $0xe0] sm:$0xff]
      %v227 = vld [vmem:[%s192 + $0xe8] sm:$0xff]
      %v228 = vld [vmem:[%s192 + $0xf0] sm:$0xff]
      %v229 = vld [vmem:[%s192 + $0xf8] sm:$0xff]
      %v230 = vld [vmem:[%s192 + $0x100] sm:$0xff]
      %v231 = vld [vmem:[%s192 + $0x108] sm:$0xff]
      %v232 = vld [vmem:[%s192 + $0x110] sm:$0xff]
      %v233 = vld [vmem:[%s192 + $0x118] sm:$0xff]
      %v234 = vld [vmem:[%s192 + $0x120] sm:$0xff]
      %v235 = vld [vmem:[%s192 + $0x128] sm:$0xff]
      %v236 = vld [vmem:[%s192 + $0x130] sm:$0xff]
      %v237 = vld [vmem:[%s192 + $0x138] sm:$0xff]
      %v238 = vld [vmem:[%s192 + $0x140] sm:$0xff]
      %v239 = vld [vmem:[%s192 + $0x148] sm:$0xff]
      %v240 = vld [vmem:[%s192 + $0x150] sm:$0xff]
      %v241 = vld [vmem:[%s192 + $0x158] sm:$0xff]
      %v242 = vld [vmem:[%s192 + $0x160] sm:$0xff]
      %v243 = vld [vmem:[%s192 + $0x168] sm:$0xff]
      %v244 = vld [vmem:[%s192 + $0x170] sm:$0xff]
      %v245 = vld [vmem:[%s192 + $0x178] sm:$0xff]
      %v246 = vld [vmem:[%s192 + $0x180] sm:$0xff]
      %v247 = vld [vmem:[%s192 + $0x188] sm:$0xff]
      %v248 = vld [vmem:[%s192 + $0x190] sm:$0xff]
      %v249 = vld [vmem:[%s192 + $0x198] sm:$0xff]
      %v250 = vld [vmem:[%s192 + $0x1a0] sm:$0xff]
      %v251 = vld [vmem:[%s192 + $0x1a8] sm:$0xff]
      %v252 = vld [vmem:[%s192 + $0x1b0] sm:$0xff]
      %v253 = vld [vmem:[%s192 + $0x1b8] sm:$0xff]
      %v254 = vld [vmem:[%s192 + $0x1c0] sm:$0xff]
      %v255 = vld [vmem:[%s192 + $0x1c8] sm:$0xff]
      %v256 = vld [vmem:[%s192 + $0x1d0] sm:$0xff]
      %v257 = vld [vmem:[%s192 + $0x1d8] sm:$0xff]
      %v258 = vld [vmem:[%s192 + $0x1e0] sm:$0xff]
      %v259 = vld [vmem:[%s192 + $0x1e8] sm:$0xff]
      %v260 = vld [vmem:[%s192 + $0x1f0] sm:$0xff]
      %v261 = vld [vmem:[%s192 + $0x1f8] sm:$0xff]
      %v262 = vld [vmem:[%s192 + $0x200] sm:$0xff]
      %v263 = vld [vmem:[%s192 + $0x208] sm:$0xff]
      %v264 = vld [vmem:[%s192 + $0x210] sm:$0xff]
      %v265 = vld [vmem:[%s192 + $0x218] sm:$0xff]
      %v266 = vld [vmem:[%s192 + $0x220] sm:$0xff]
      %v267 = vld [vmem:[%s192 + $0x228] sm:$0xff]
      %v268 = vld [vmem:[%s192 + $0x230] sm:$0xff]
      %v269 = vld [vmem:[%s192 + $0x238] sm:$0xff]
      %v270 = vld [vmem:[%s192 + $0x240] sm:$0xff]
      %v271 = vld [vmem:[%s192 + $0x248] sm:$0xff]
      %v272 = vld [vmem:[%s192 + $0x250] sm:$0xff]
      %v273 = vld [vmem:[%s192 + $0x258] sm:$0xff]
      %v274 = vld [vmem:[%s192 + $0x260] sm:$0xff]
      %v275 = vld [vmem:[%s192 + $0x268] sm:$0xff]
      %v276 = vld [vmem:[%s192 + $0x270] sm:$0xff]
      %v277 = vld [vmem:[%s192 + $0x278] sm:$0xff]
      %v278 = vld [vmem:[%s192 + $0x280] sm:$0xff]
      %v279 = vld [vmem:[%s192 + $0x288] sm:$0xff]
      %v280 = vld [vmem:[%s192 + $0x290] sm:$0xff]
      %v281 = vld [vmem:[%s192 + $0x298] sm:$0xff]
      %v282 = vld [vmem:[%s192 + $0x2a0] sm:$0xff]
      %v283 = vld [vmem:[%s192 + $0x2a8] sm:$0xff]
      %v284 = vld [vmem:[%s192 + $0x2b0] sm:$0xff]
      %v285 = vld [vmem:[%s192 + $0x2b8] sm:$0xff]
      %v286 = vld [vmem:[%s192 + $0x2c0] sm:$0xff]
      %v287 = vld [vmem:[%s192 + $0x2c8] sm:$0xff]
      %v288 = vld [vmem:[%s192 + $0x2d0] sm:$0xff]
      %v289 = vld [vmem:[%s192 + $0x2d8] sm:$0xff]
      %v290 = vld [vmem:[%s192 + $0x2e0] sm:$0xff]
      %v291 = vld [vmem:[%s192 + $0x2e8] sm:$0xff]
      %v292 = vld [vmem:[%s192 + $0x2f0] sm:$0xff]
      %v293 = vld [vmem:[%s192 + $0x2f8] sm:$0xff]
      %v294 = vld [vmem:[%s192 + $0x300] sm:$0xff]
      %v295 = vld [vmem:[%s192 + $0x308] sm:$0xff]
      %v296 = vld [vmem:[%s192 + $0x310] sm:$0xff]
      %v297 = vld [vmem:[%s192 + $0x318] sm:$0xff]
      %v298 = vld [vmem:[%s192 + $0x320] sm:$0xff]
      %v299 = vld [vmem:[%s192 + $0x328] sm:$0xff]
      %v300 = vld [vmem:[%s192 + $0x330] sm:$0xff]
      %v301 = vld [vmem:[%s192 + $0x338] sm:$0xff]
      %v302 = vld [vmem:[%s192 + $0x340] sm:$0xff]
      %v303 = vld [vmem:[%s192 + $0x348] sm:$0xff]
      %v304 = vld [vmem:[%s192 + $0x350] sm:$0xff]
      %v305 = vld [vmem:[%s192 + $0x358] sm:$0xff]
      %v306 = vld [vmem:[%s192 + $0x360] sm:$0xff]
      %v307 = vld [vmem:[%s192 + $0x368] sm:$0xff]
      %v308 = vld [vmem:[%s192 + $0x370] sm:$0xff]
      %v309 = vld [vmem:[%s192 + $0x378] sm:$0xff]
      %v310 = vld [vmem:[%s192 + $0x380] sm:$0xff]
      %v311 = vld [vmem:[%s192 + $0x388] sm:$0xff]
      %v312 = vld [vmem:[%s192 + $0x390] sm:$0xff]
      %v313 = vld [vmem:[%s192 + $0x398] sm:$0xff]
      %v314 = vld [vmem:[%s192 + $0x3a0] sm:$0xff]
      %v315 = vld [vmem:[%s192 + $0x3a8] sm:$0xff]
      %v316 = vld [vmem:[%s192 + $0x3b0] sm:$0xff]
      %v317 = vld [vmem:[%s192 + $0x3b8] sm:$0xff]
      %v318 = vld [vmem:[%s192 + $0x3c0] sm:$0xff]
      %v319 = vld [vmem:[%s192 + $0x3c8] sm:$0xff]
      %v320 = vld [vmem:[%s192 + $0x3d0] sm:$0xff]
      %v321 = vld [vmem:[%s192 + $0x3d8] sm:$0xff]
      %v322 = vld [vmem:[%s192 + $0x3e0] sm:$0xff]
      %v323 = vld [vmem:[%s192 + $0x3e8] sm:$0xff]
      %v324 = vld [vmem:[%s192 + $0x3f0] sm:$0xff]
      %v325 = vld [vmem:[%s192 + $0x3f8] sm:$0xff]
      %v326 = vld [vmem:[%s192 + $0x400] sm:$0xff]
      %v327 = vld [vmem:[%s192 + $0x408] sm:$0xff]
      %v328 = vld [vmem:[%s192 + $0x410] sm:$0xff]
      %v329 = vld [vmem:[%s192 + $0x418] sm:$0xff]
      %v330 = vld [vmem:[%s192 + $0x420] sm:$0xff]
      %v331 = vld [vmem:[%s192 + $0x428] sm:$0xff]
      %v332 = vld [vmem:[%s192 + $0x430] sm:$0xff]
      %v333 = vld [vmem:[%s192 + $0x438] sm:$0xff]
      %v334 = vld [vmem:[%s192 + $0x440] sm:$0xff]
      %v335 = vld [vmem:[%s192 + $0x448] sm:$0xff]
      %v336 = vld [vmem:[%s192 + $0x450] sm:$0xff]
      %v337 = vld [vmem:[%s192 + $0x458] sm:$0xff]
      %v338 = vld [vmem:[%s192 + $0x460] sm:$0xff]
      %v339 = vld [vmem:[%s192 + $0x468] sm:$0xff]
      %v340 = vld [vmem:[%s192 + $0x470] sm:$0xff]
      %v341 = vld [vmem:[%s192 + $0x478] sm:$0xff]
      %v342 = vld [vmem:[%s192 + $0x480] sm:$0xff]
      %v343 = vld [vmem:[%s192 + $0x488] sm:$0xff]
      %v344 = vld [vmem:[%s192 + $0x490] sm:$0xff]
      %v345 = vld [vmem:[%s192 + $0x498] sm:$0xff]
      %v346 = vld [vmem:[%s192 + $0x4a0] sm:$0xff]
      %v347 = vld [vmem:[%s192 + $0x4a8] sm:$0xff]
      %v348 = vld [vmem:[%s192 + $0x4b0] sm:$0xff]
      %v349 = vld [vmem:[%s192 + $0x4b8] sm:$0xff]
      %v350 = vld [vmem:[%s192 + $0x4c0] sm:$0xff]
      %v351 = vld [vmem:[%s192 + $0x4c8] sm:$0xff]
      %v352 = vld [vmem:[%s192 + $0x4d0] sm:$0xff]
      %v353 = vld [vmem:[%s192 + $0x4d8] sm:$0xff]
      %v354 = vld [vmem:[%s192 + $0x4e0] sm:$0xff]
      %v355 = vld [vmem:[%s192 + $0x4e8] sm:$0xff]
      %v356 = vld [vmem:[%s192 + $0x4f0] sm:$0xff]
      %v357 = vld [vmem:[%s192 + $0x4f8] sm:$0xff]
      %v358 = vld [vmem:[%s192 + $0x500] sm:$0xff]
      %v359 = vld [vmem:[%s192 + $0x508] sm:$0xff]
      %v360 = vld [vmem:[%s192 + $0x510] sm:$0xff]
      %v361 = vld [vmem:[%s192 + $0x518] sm:$0xff]
      %v362 = vld [vmem:[%s192 + $0x520] sm:$0xff]
      %v363 = vld [vmem:[%s192 + $0x528] sm:$0xff]
      %v364 = vld [vmem:[%s192 + $0x530] sm:$0xff]
      %v365 = vld [vmem:[%s192 + $0x538] sm:$0xff]
      %v366 = vld [vmem:[%s192 + $0x540] sm:$0xff]
      %v367 = vld [vmem:[%s192 + $0x548] sm:$0xff]
      %v368 = vld [vmem:[%s192 + $0x550] sm:$0xff]
      %v369 = vld [vmem:[%s192 + $0x558] sm:$0xff]
      %v370 = vld [vmem:[%s192 + $0x560] sm:$0xff]
      %v371 = vld [vmem:[%s192 + $0x568] sm:$0xff]
      %v372 = vld [vmem:[%s192 + $0x570] sm:$0xff]
      %v373 = vld [vmem:[%s192 + $0x578] sm:$0xff]
      %v374 = vld [vmem:[%s192 + $0x580] sm:$0xff]
      %v375 = vld [vmem:[%s192 + $0x588] sm:$0xff]
      %v376 = vld [vmem:[%s192 + $0x590] sm:$0xff]
      %v377 = vld [vmem:[%s192 + $0x598] sm:$0xff]
      %v378 = vld [vmem:[%s192 + $0x5a0] sm:$0xff]
      %v379 = vld [vmem:[%s192 + $0x5a8] sm:$0xff]
      %v380 = vld [vmem:[%s192 + $0x5b0] sm:$0xff]
      %v381 = vld [vmem:[%s192 + $0x5b8] sm:$0xff]
      %v382 = vld [vmem:[%s192 + $0x5c0] sm:$0xff]
      %v383 = vld [vmem:[%s192 + $0x5c8] sm:$0xff]
      %v384 = vld [vmem:[%s192 + $0x5d0] sm:$0xff]
      %v385 = vld [vmem:[%s192 + $0x5d8] sm:$0xff]
      %v386 = vld [vmem:[%s192 + $0x5e0] sm:$0xff]
      %v387 = vld [vmem:[%s192 + $0x5e8] sm:$0xff]
      %v388 = vld [vmem:[%s192 + $0x5f0] sm:$0xff]
      %v389 = vld [vmem:[%s192 + $0x5f8] sm:$0xff]
      %v390 = vld [vmem:[%s1] sm:$0xff]
      %v391 = vld [vmem:[%s1 + $0x8] sm:$0xf]
      %394 = vst [vmem:[#allocation1] ss:$2 sm:$0xff] %v390
      %s395 = scalar_lea.vmem [#allocation1], 16
      %396 = vst [vmem:[%s395] ss:$2 sm:$0xff] %v391
      %v397 = vld.sshfl [vmem:[#allocation1] sm:$0xff pattern:$0x75316420]
      %v398 = vld.sshfl [vmem:[#allocation1 + $0x8] sm:$0xff pattern:$0x75316420]
      %v399 = vld.sshfl [vmem:[#allocation1 + $0x10] sm:$0xff pattern:$0x75316420]
      %403 = vmatpush.msra.mxu0 %v258
      %404 = vmatpush.msra.mxu0 %v254
      %405 = vmatpush.msra.mxu0 %v250
      %406 = vmatpush.msra.mxu0 %v246
      %407 = vmatpush.msra.mxu0 %v242
      %408 = vmatpush.msra.mxu0 %v238
      %409 = vmatpush.msra.mxu0 %v234
      %410 = vmatpush.msra.mxu0 %v230
      %411 = vmatpush.msra.mxu0 %v226
      %412 = vmatpush.msra.mxu0 %v222
      %413 = vmatpush.msra.mxu0 %v218
      %414 = vmatpush.msra.mxu0 %v214
      %415 = vmatpush.msra.mxu0 %v210
      %416 = vmatpush.msra.mxu0 %v206
      %417 = vmatpush.msra.mxu0 %v202
      %418 = vmatpush.msra.mxu0 %v198
      %419 = vmatmul.f32.gmra.mxu0 %v397
      %v420 = vpop.f32.mrf.mxu0
      %v421 = vadd.f32 0.0, %v420
      %422 = vdwg.mxu0
      %423 = vmatpush.msra.mxu0 %v322
      %424 = vmatpush.msra.mxu0 %v318
      %425 = vmatpush.msra.mxu0 %v314
      %426 = vmatpush.msra.mxu0 %v310
      %427 = vmatpush.msra.mxu0 %v306
      %428 = vmatpush.msra.mxu0 %v302
      %429 = vmatpush.msra.mxu0 %v298
      %430 = vmatpush.msra.mxu0 %v294
      %431 = vmatpush.msra.mxu0 %v290
      %432 = vmatpush.msra.mxu0 %v286
      %433 = vmatpush.msra.mxu0 %v282
      %434 = vmatpush.msra.mxu0 %v278
      %435 = vmatpush.msra.mxu0 %v274
      %436 = vmatpush.msra.mxu0 %v270
      %437 = vmatpush.msra.mxu0 %v266
      %438 = vmatpush.msra.mxu0 %v262
      %439 = vmatmul.f32.gmra.mxu0 %v398
      %v440 = vpop.f32.mrf.mxu0
      %v441 = vadd.f32 %v421, %v440
      %442 = vdwg.mxu0
      %443 = vmatpush.msra.mxu0 %v386
      %444 = vmatpush.msra.mxu0 %v382
      %445 = vmatpush.msra.mxu0 %v378
      %446 = vmatpush.msra.mxu0 %v374
      %447 = vmatpush.msra.mxu0 %v370
      %448 = vmatpush.msra.mxu0 %v366
      %449 = vmatpush.msra.mxu0 %v362
      %450 = vmatpush.msra.mxu0 %v358
      %451 = vmatpush.msra.mxu0 %v354
      %452 = vmatpush.msra.mxu0 %v350
      %453 = vmatpush.msra.mxu0 %v346
      %454 = vmatpush.msra.mxu0 %v342
      %455 = vmatpush.msra.mxu0 %v338
      %456 = vmatpush.msra.mxu0 %v334
      %457 = vmatpush.msra.mxu0 %v330
      %458 = vmatpush.msra.mxu0 %v326
      %459 = vmatmul.f32.gmra.mxu0 %v399
      %v460 = vpop.f32.mrf.mxu0
      %v461 = vadd.f32 %v441, %v460
      %462 = vdwg.mxu0
      %463 = vmatpush.msra.mxu0 %v259
      %464 = vmatpush.msra.mxu0 %v255
      %465 = vmatpush.msra.mxu0 %v251
      %466 = vmatpush.msra.mxu0 %v247
      %467 = vmatpush.msra.mxu0 %v243
      %468 = vmatpush.msra.mxu0 %v239
      %469 = vmatpush.msra.mxu0 %v235
      %470 = vmatpush.msra.mxu0 %v231
      %471 = vmatpush.msra.mxu0 %v227
      %472 = vmatpush.msra.mxu0 %v223
      %473 = vmatpush.msra.mxu0 %v219
      %474 = vmatpush.msra.mxu0 %v215
      %475 = vmatpush.msra.mxu0 %v211
      %476 = vmatpush.msra.mxu0 %v207
      %477 = vmatpush.msra.mxu0 %v203
      %478 = vmatpush.msra.mxu0 %v199
      %479 = vmatmul.f32.gmra.mxu0 %v397
      %v480 = vpop.f32.mrf.mxu0
      %v481 = vadd.f32 0.0, %v480
      %482 = vdwg.mxu0
      %483 = vmatpush.msra.mxu0 %v323
      %484 = vmatpush.msra.mxu0 %v319
      %485 = vmatpush.msra.mxu0 %v315
      %486 = vmatpush.msra.mxu0 %v311
      %487 = vmatpush.msra.mxu0 %v307
      %488 = vmatpush.msra.mxu0 %v303
      %489 = vmatpush.msra.mxu0 %v299
      %490 = vmatpush.msra.mxu0 %v295
      %491 = vmatpush.msra.mxu0 %v291
      %492 = vmatpush.msra.mxu0 %v287
      %493 = vmatpush.msra.mxu0 %v283
      %494 = vmatpush.msra.mxu0 %v279
      %495 = vmatpush.msra.mxu0 %v275
      %496 = vmatpush.msra.mxu0 %v271
      %497 = vmatpush.msra.mxu0 %v267
      %498 = vmatpush.msra.mxu0 %v263
      %499 = vmatmul.f32.gmra.mxu0 %v398
      %v500 = vpop.f32.mrf.mxu0
      %v501 = vadd.f32 %v481, %v500
      %502 = vdwg.mxu0
      %503 = vmatpush.msra.mxu0 %v387
      %504 = vmatpush.msra.mxu0 %v383
      %505 = vmatpush.msra.mxu0 %v379
      %506 = vmatpush.msra.mxu0 %v375
      %507 = vmatpush.msra.mxu0 %v371
      %508 = vmatpush.msra.mxu0 %v367
      %509 = vmatpush.msra.mxu0 %v363
      %510 = vmatpush.msra.mxu0 %v359
      %511 = vmatpush.msra.mxu0 %v355
      %512 = vmatpush.msra.mxu0 %v351
      %513 = vmatpush.msra.mxu0 %v347
      %514 = vmatpush.msra.mxu0 %v343
      %515 = vmatpush.msra.mxu0 %v339
      %516 = vmatpush.msra.mxu0 %v335
      %517 = vmatpush.msra.mxu0 %v331
      %518 = vmatpush.msra.mxu0 %v327
      %519 = vmatmul.f32.gmra.mxu0 %v399
      %v520 = vpop.f32.mrf.mxu0
      %v521 = vadd.f32 %v501, %v520
      %522 = vdwg.mxu0
      %523 = vmatpush.msra.mxu0 %v260
      %524 = vmatpush.msra.mxu0 %v256
      %525 = vmatpush.msra.mxu0 %v252
      %526 = vmatpush.msra.mxu0 %v248
      %527 = vmatpush.msra.mxu0 %v244
      %528 = vmatpush.msra.mxu0 %v240
      %529 = vmatpush.msra.mxu0 %v236
      %530 = vmatpush.msra.mxu0 %v232
      %531 = vmatpush.msra.mxu0 %v228
      %532 = vmatpush.msra.mxu0 %v224
      %533 = vmatpush.msra.mxu0 %v220
      %534 = vmatpush.msra.mxu0 %v216
      %535 = vmatpush.msra.mxu0 %v212
      %536 = vmatpush.msra.mxu0 %v208
      %537 = vmatpush.msra.mxu0 %v204
      %538 = vmatpush.msra.mxu0 %v200
      %539 = vmatmul.f32.gmra.mxu0 %v397
      %v540 = vpop.f32.mrf.mxu0
      %v541 = vadd.f32 0.0, %v540
      %542 = vdwg.mxu0
      %543 = vmatpush.msra.mxu0 %v324
      %544 = vmatpush.msra.mxu0 %v320
      %545 = vmatpush.msra.mxu0 %v316
      %546 = vmatpush.msra.mxu0 %v312
      %547 = vmatpush.msra.mxu0 %v308
      %548 = vmatpush.msra.mxu0 %v304
      %549 = vmatpush.msra.mxu0 %v300
      %550 = vmatpush.msra.mxu0 %v296
      %551 = vmatpush.msra.mxu0 %v292
      %552 = vmatpush.msra.mxu0 %v288
      %553 = vmatpush.msra.mxu0 %v284
      %554 = vmatpush.msra.mxu0 %v280
      %555 = vmatpush.msra.mxu0 %v276
      %556 = vmatpush.msra.mxu0 %v272
      %557 = vmatpush.msra.mxu0 %v268
      %558 = vmatpush.msra.mxu0 %v264
      %559 = vmatmul.f32.gmra.mxu0 %v398
      %v560 = vpop.f32.mrf.mxu0
      %v561 = vadd.f32 %v541, %v560
      %562 = vdwg.mxu0
      %563 = vmatpush.msra.mxu0 %v388
      %564 = vmatpush.msra.mxu0 %v384
      %565 = vmatpush.msra.mxu0 %v380
      %566 = vmatpush.msra.mxu0 %v376
      %567 = vmatpush.msra.mxu0 %v372
      %568 = vmatpush.msra.mxu0 %v368
      %569 = vmatpush.msra.mxu0 %v364
      %570 = vmatpush.msra.mxu0 %v360
      %571 = vmatpush.msra.mxu0 %v356
      %572 = vmatpush.msra.mxu0 %v352
      %573 = vmatpush.msra.mxu0 %v348
      %574 = vmatpush.msra.mxu0 %v344
      %575 = vmatpush.msra.mxu0 %v340
      %576 = vmatpush.msra.mxu0 %v336
      %577 = vmatpush.msra.mxu0 %v332
      %578 = vmatpush.msra.mxu0 %v328
      %579 = vmatmul.f32.gmra.mxu0 %v399
      %v580 = vpop.f32.mrf.mxu0
      %v581 = vadd.f32 %v561, %v580
      %582 = vdwg.mxu0
      %583 = vmatpush.msra.mxu0 %v261
      %584 = vmatpush.msra.mxu0 %v257
      %585 = vmatpush.msra.mxu0 %v253
      %586 = vmatpush.msra.mxu0 %v249
      %587 = vmatpush.msra.mxu0 %v245
      %588 = vmatpush.msra.mxu0 %v241
      %589 = vmatpush.msra.mxu0 %v237
      %590 = vmatpush.msra.mxu0 %v233
      %591 = vmatpush.msra.mxu0 %v229
      %592 = vmatpush.msra.mxu0 %v225
      %593 = vmatpush.msra.mxu0 %v221
      %594 = vmatpush.msra.mxu0 %v217
      %595 = vmatpush.msra.mxu0 %v213
      %596 = vmatpush.msra.mxu0 %v209
      %597 = vmatpush.msra.mxu0 %v205
      %598 = vmatpush.msra.mxu0 %v201
      %599 = vmatmul.f32.gmra.mxu0 %v397
      %v600 = vpop.f32.mrf.mxu0
      %v601 = vadd.f32 0.0, %v600
      %602 = vdwg.mxu0
      %603 = vmatpush.msra.mxu0 %v325
      %604 = vmatpush.msra.mxu0 %v321
      %605 = vmatpush.msra.mxu0 %v317
      %606 = vmatpush.msra.mxu0 %v313
      %607 = vmatpush.msra.mxu0 %v309
      %608 = vmatpush.msra.mxu0 %v305
      %609 = vmatpush.msra.mxu0 %v301
      %610 = vmatpush.msra.mxu0 %v297
      %611 = vmatpush.msra.mxu0 %v293
      %612 = vmatpush.msra.mxu0 %v289
      %613 = vmatpush.msra.mxu0 %v285
      %614 = vmatpush.msra.mxu0 %v281
      %615 = vmatpush.msra.mxu0 %v277
      %616 = vmatpush.msra.mxu0 %v273
      %617 = vmatpush.msra.mxu0 %v269
      %618 = vmatpush.msra.mxu0 %v265
      %619 = vmatmul.f32.gmra.mxu0 %v398
      %v620 = vpop.f32.mrf.mxu0
      %v621 = vadd.f32 %v601, %v620
      %622 = vdwg.mxu0
      %623 = vmatpush.msra.mxu0 %v389
      %624 = vmatpush.msra.mxu0 %v385
      %625 = vmatpush.msra.mxu0 %v381
      %626 = vmatpush.msra.mxu0 %v377
      %627 = vmatpush.msra.mxu0 %v373
      %628 = vmatpush.msra.mxu0 %v369
      %629 = vmatpush.msra.mxu0 %v365
      %630 = vmatpush.msra.mxu0 %v361
      %631 = vmatpush.msra.mxu0 %v357
      %632 = vmatpush.msra.mxu0 %v353
      %633 = vmatpush.msra.mxu0 %v349
      %634 = vmatpush.msra.mxu0 %v345
      %635 = vmatpush.msra.mxu0 %v341
      %636 = vmatpush.msra.mxu0 %v337
      %637 = vmatpush.msra.mxu0 %v333
      %638 = vmatpush.msra.mxu0 %v329
      %639 = vmatmul.f32.gmra.mxu0 %v399
      %v640 = vpop.f32.mrf.mxu0
      %v641 = vadd.f32 %v621, %v640
      %642 = vdwg.mxu0
      %vm643 = vcmask 1043456
      %v644 = vsel %vm643, %v461, 0.0
      %v645 = vsel %vm643, %v521, 0.0
      %v646 = vadd.f32 %v644, %v645
      %v647 = vsel %vm643, %v581, 0.0
      %v648 = vadd.f32 %v646, %v647
      %v649 = vsel %vm643, %v641, 0.0
      %v650 = vadd.f32 %v648, %v649
      %651 = vadd.xlane.f32.xlu0 %v650
      %v652 = vpop.xlane.xlu0 %651
      %v653 = vrcp.pop 512.0
      %v654 = vmul.f32 512.0, %v653
      %v655 = vsub.f32 1.0, %v654
      %v656 = vmul.f32 %v653, %v655
      %v657 = vadd.f32 %v653, %v656
      %vm658 = vweird.f32 %v653
      %v659 = vsel %vm658, %v653, %v657
      %v660 = vmul.f32 %v652, %v659
      %v661 = vsub.f32 %v461, %v660
      %v662 = vsub.f32 %v521, %v660
      %v663 = vsub.f32 %v581, %v660
      %v664 = vsub.f32 %v641, %v660
      %v665 = vmul.f32 %v661, %v661
      %v666 = vmul.f32 %v662, %v662
      %v667 = vmul.f32 %v663, %v663
      %v668 = vmul.f32 %v664, %v664
      %v669 = vsel %vm643, %v665, 0.0
      %v670 = vsel %vm643, %v666, 0.0
      %v671 = vadd.f32 %v669, %v670
      %v672 = vsel %vm643, %v667, 0.0
      %v673 = vadd.f32 %v671, %v672
      %v674 = vsel %vm643, %v668, 0.0
      %v675 = vadd.f32 %v673, %v674
      %676 = vadd.xlane.f32.xlu0 %v675
      %v677 = vpop.xlane.xlu0 %676
      %v678 = vmul.f32 %v677, %v659
      %v679 = vadd.f32 %v678, 1e-05
      %v680 = vrsqrt.pop %v679
      %v681 = vmul.f32 %v680, %v679
      %v682 = vmul.f32 %v681, %v680
      %v683 = vmul.f32 0.5, %v682
      %v684 = vsub.f32 1.5, %v683
      %v685 = vmul.f32 %v680, %v684
      %vm686 = vweird.f32 %v679
      %vm687 = vweird.f32 %v680
      %vm688 = vmor %vm686, %vm687
      %v689 = vsel %vm688, %v680, %v685
      %v690 = vmul.f32 %v661, %v689
      %v691 = vmul.f32 %v662, %v689
      %v692 = vmul.f32 %v663, %v689
      %v693 = vmul.f32 %v664, %v689
      %v694 = vld [vmem:[%s2] sm:$0xf]
      %696 = vset.pattern.permute.xlu0 0
      %697 = vperm.xlu0 %696, %v694
      %v698 = vpop.permute.xlu0 %697
      %v700 = vmul.f32 %v690, %v698
      %v701 = vmul.f32 %v691, %v698
      %v702 = vmul.f32 %v692, %v698
      %v703 = vmul.f32 %v693, %v698
      %v704 = vld [vmem:[%s3] sm:$0xf]
      %706 = vset.pattern.permute.xlu0 0
      %707 = vperm.xlu0 %706, %v704
      %v708 = vpop.permute.xlu0 %707
      %v710 = vadd.f32 %v700, %v708
      %v711 = vadd.f32 %v701, %v708
      %v712 = vadd.f32 %v702, %v708
      %v713 = vadd.f32 %v703, %v708
      %vm714 = vcmp.ge.f32.partialorder %v710, 0.0
      %vm715 = vcmp.ge.f32.partialorder %v711, 0.0
      %vm716 = vcmp.ge.f32.partialorder %v712, 0.0
      %vm717 = vcmp.ge.f32.partialorder %v713, 0.0
      %v718 = vmul.f32 %v710, 0.01
      %v719 = vmul.f32 %v711, 0.01
      %v720 = vmul.f32 %v712, 0.01
      %v721 = vmul.f32 %v713, 0.01
      %v722 = vsel %vm714, %v710, %v718
      %v723 = vsel %vm715, %v711, %v719
      %v724 = vsel %vm716, %v712, %v720
      %v725 = vsel %vm717, %v713, %v721
      %v730 = vrot.slane %v723, 4
      %v731 = vrot.slane %v725, 4
      %v732 = vsel %vm643, %v722, %v730
      %v733 = vsel %vm643, %v724, %v731
      %736 = vst [vmem:[%s197] sm:$0xff] %v732
      %737 = vst [vmem:[%s197 + $0x8] sm:$0xff] %v733
      %p738 = scmp.lt.s32.totalorder %s15, 1
      %s739 = scalar_select %p738, %s15, 1
      %s740 = smul.addr %s739, 4
      %s741 = smul.addr %s740, 4
      %s742 = scalar_lea.vmem %s4, %s741
      // Predicated region
      $region37: #{_lambda_.11} parent=35 // pred_check
        %p743 = pneg %p122
      $region38: #{_lambda_.11} parent=35 // pred_check_branch
        %745 = sbr.rel (%p743) target = $region40
      $region39: #{_lambda_.11} parent=35 // pred_region
        _
      $region40: #{_lambda_.11} parent=35 // pred_fallthru
        _
    $region36: #{_lambda_.11} parent=5 // pred_fallthru
      _
    %p746 = scmp.le.s32.totalorder 2, %s10
    // Predicated region
    $region41: #{_lambda_.11} parent=5 // pred_check
      %p747 = pneg %p746
    $region42: #{_lambda_.11} parent=5 // pred_check_branch
      %749 = sbr.rel (%p747) target = $region44
    $region43: #{_lambda_.11} parent=5 // pred_region
      %s750 = ssub.s32 %s10, 2
      // Predicated region
      $region45: #{_lambda_.11} parent=43 // pred_check
        %p751 = pneg %p128
      $region46: #{_lambda_.11} parent=43 // pred_check_branch
        %753 = sbr.rel (%p751) target = $region48
      $region47: #{_lambda_.11} parent=43 // pred_region
        %p754 = scmp.lt.s32.totalorder %s16, 1
        %s755 = scalar_select %p754, %s16, 1
        %s756 = smul.addr %s755, 4
        %s757 = smul.addr %s756, 4
        %s758 = scalar_lea.vmem %s4, %s757
      $region48: #{_lambda_.11} parent=43 // pred_fallthru
        _
    $region44: #{_lambda_.11} parent=5 // pred_fallthru
      _
  $region6: #{_lambda_.11} parent=0 // loop_footer
    %s14 = sadd.s32 1, %s10
  $region7: #{_lambda_.11} parent=0 // loop_footer_branch
    %9 = sbr.rel target = $region3
  $region8: #{_lambda_.11} parent=0 // loop_exit
    _

// kernel: _lambda_.13
$region0: #{_lambda_.13}
  #allocation0 [shape = 'u32[]', space=smem, size = 0x4, offset = 0x4, fixed_abs, tag = 'smem constant byte address 0x4 - core index']
  #allocation1 [shape = 'u32[72,128]{1,0:T(1,128)}', space=vmem, size = 0x9000, scoped, tag = 'internal scratch']
  %s0 = inlined_call_operand.vmem [shape: f32[2,256,512], index: 0, kind: input, shape index: {}]
  %s1 = inlined_call_operand.vmem [shape: f32[8,256], index: 1, kind: input, shape index: {}]
  %s2 = inlined_call_operand.vmem [shape: f32[8,1], index: 2, kind: input, shape index: {}]
  %s3 = inlined_call_operand.vmem [shape: f32[8,1], index: 3, kind: input, shape index: {}]
  %s4 = inlined_call_operand.vmem [shape: f32[2,8,512], index: 4, kind: output, shape index: {}]
  %s5 = sld [smem:[#allocation0]]
  $region49: #{_lambda_.13} parent=0
    _
  %s7 = ssub.s32 1, %s5
  %s8 = scalar_select 0, %s7, %s5
  loop: start=0, step=1, limit=4
  $region2: #{_lambda_.13} parent=0 // loop_pre_header
    _
  $region3: #{_lambda_.13} parent=0 // loop_header
    %s10 = sphi 0, %s14
    %p11 = scmp.ge.s32.totalorder %s10, 4
    %s20 = sphi 0, %s22
    %s23 = sphi 0, %s20
    %s24 = sphi 0, %s23
    %s40 = sphi 0, %s24
    %s44 = sphi 0, %s44
    %s46 = sphi 0, %s44
    %s47 = sphi 0, %s46
    %s61 = sphi 0, %s47
    %s65 = sphi 0, %s65
    %s67 = sphi 0, %s65
    %s68 = sphi 0, %s67
    %s82 = sphi 0, %s68
    %s86 = sphi 0, %s86
    %s88 = sphi 0, %s86
    %s89 = sphi 0, %s88
    %s103 = sphi 0, %s89
    %s109 = sphi 0, %s111
    %s112 = sphi 0, %s109
    %s113 = sphi 0, %s112
    %s129 = sphi 0, %s113
  $region4: #{_lambda_.13} parent=0 // loop_header_branch
    %13 = sbr.rel (%p11) target = $region8
  $region5: #{_lambda_.13} parent=0 // loop_body
    %s15 = ssub.s32 %s10, 1
    %s16 = ssub.s32 %s10, 2
    %s17 = sadd.s32 %s10, 1
    %s18 = ssub.s32 %s10, %s17
    %p19 = scmp.eq.s32.totalorder %s18, 0
    %s21 = sadd.s32 %s20, 1
    %s22 = scalar_select %p19, %s20, %s21
    %p25 = pneg %p19
    %p26 = scmp.eq.s32.totalorder %s10, 1
    %p27 = por %p25, %p26
    %p28 = scmp.ne.s32.totalorder %s20, %s23
    %p29 = scmp.eq.s32.totalorder %s10, 0
    %p30 = por %p28, %p29
    %p31 = scmp.ne.s32.totalorder %s20, %s23
    %p32 = scmp.eq.s32.totalorder %s15, 1
    %p33 = por %p31, %p32
    %p34 = scmp.ne.s32.totalorder %s23, %s24
    %p35 = scmp.eq.s32.totalorder %s15, 0
    %p36 = por %p34, %p35
    %p37 = scmp.ne.s32.totalorder %s23, %s24
    %p38 = scmp.eq.s32.totalorder %s16, 1
    %p39 = por %p37, %p38
    %p41 = scmp.ne.s32.totalorder %s24, %s40
    %p42 = scmp.eq.s32.totalorder %s16, 0
    %p43 = por %p41, %p42
    %s45 = sadd.s32 %s44, 1
    %p48 = scmp.eq.s32.totalorder %s10, 1
    %p49 = scmp.ne.s32.totalorder %s44, %s46
    %p50 = scmp.eq.s32.totalorder %s10, 0
    %p51 = por %p49, %p50
    %p52 = scmp.ne.s32.totalorder %s44, %s46
    %p53 = scmp.eq.s32.totalorder %s15, 1
    %p54 = por %p52, %p53
    %p55 = scmp.ne.s32.totalorder %s46, %s47
    %p56 = scmp.eq.s32.totalorder %s15, 0
    %p57 = por %p55, %p56
    %p58 = scmp.ne.s32.totalorder %s46, %s47
    %p59 = scmp.eq.s32.totalorder %s16, 1
    %p60 = por %p58, %p59
    %p62 = scmp.ne.s32.totalorder %s47, %s61
    %p63 = scmp.eq.s32.totalorder %s16, 0
    %p64 = por %p62, %p63
    %s66 = sadd.s32 %s65, 1
    %p69 = scmp.eq.s32.totalorder %s10, 1
    %p70 = scmp.ne.s32.totalorder %s65, %s67
    %p71 = scmp.eq.s32.totalorder %s10, 0
    %p72 = por %p70, %p71
    %p73 = scmp.ne.s32.totalorder %s65, %s67
    %p74 = scmp.eq.s32.totalorder %s15, 1
    %p75 = por %p73, %p74
    %p76 = scmp.ne.s32.totalorder %s67, %s68
    %p77 = scmp.eq.s32.totalorder %s15, 0
    %p78 = por %p76, %p77
    %p79 = scmp.ne.s32.totalorder %s67, %s68
    %p80 = scmp.eq.s32.totalorder %s16, 1
    %p81 = por %p79, %p80
    %p83 = scmp.ne.s32.totalorder %s68, %s82
    %p84 = scmp.eq.s32.totalorder %s16, 0
    %p85 = por %p83, %p84
    %s87 = sadd.s32 %s86, 1
    %p90 = scmp.eq.s32.totalorder %s10, 1
    %p91 = scmp.ne.s32.totalorder %s86, %s88
    %p92 = scmp.eq.s32.totalorder %s10, 0
    %p93 = por %p91, %p92
    %p94 = scmp.ne.s32.totalorder %s86, %s88
    %p95 = scmp.eq.s32.totalorder %s15, 1
    %p96 = por %p94, %p95
    %p97 = scmp.ne.s32.totalorder %s88, %s89
    %p98 = scmp.eq.s32.totalorder %s15, 0
    %p99 = por %p97, %p98
    %p100 = scmp.ne.s32.totalorder %s88, %s89
    %p101 = scmp.eq.s32.totalorder %s16, 1
    %p102 = por %p100, %p101
    %p104 = scmp.ne.s32.totalorder %s89, %s103
    %p105 = scmp.eq.s32.totalorder %s16, 0
    %p106 = por %p104, %p105
    %s107 = ssub.s32 %s10, %s17
    %p108 = scmp.eq.s32.totalorder %s107, 0
    %s110 = sadd.s32 %s109, 1
    %s111 = scalar_select %p108, %s109, %s110
    %p114 = pneg %p108
    %p115 = scmp.eq.s32.totalorder %s10, 1
    %p116 = por %p114, %p115
    %p117 = scmp.ne.s32.totalorder %s109, %s112
    %p118 = scmp.eq.s32.totalorder %s10, 0
    %p119 = por %p117, %p118
    %p120 = scmp.ne.s32.totalorder %s109, %s112
    %p121 = scmp.eq.s32.totalorder %s15, 1
    %p122 = por %p120, %p121
    %p123 = scmp.ne.s32.totalorder %s112, %s113
    %p124 = scmp.eq.s32.totalorder %s15, 0
    %p125 = por %p123, %p124
    %p126 = scmp.ne.s32.totalorder %s112, %s113
    %p127 = scmp.eq.s32.totalorder %s16, 1
    %p128 = por %p126, %p127
    %p130 = scmp.ne.s32.totalorder %s113, %s129
    %p131 = scmp.eq.s32.totalorder %s16, 0
    %p132 = por %p130, %p131
    %p133 = scmp.le.s32.totalorder 1, %s10
    %p134 = scmp.lt.s32.totalorder %s10, 3
    %p135 = pnand %p133, %p134
    %p136 = pneg %p135
    // Predicated region
    $region9: #{_lambda_.13} parent=5 // pred_check
      _
    $region10: #{_lambda_.13} parent=5 // pred_check_branch
      %138 = sbr.rel (%p135) target = $region12
    $region11: #{_lambda_.13} parent=5 // pred_region
      %s139 = ssub.s32 %s10, 1
      // Predicated region
      $region13: #{_lambda_.13} parent=11 // pred_check
        %p140 = pneg %p57
      $region14: #{_lambda_.13} parent=11 // pred_check_branch
        %142 = sbr.rel (%p140) target = $region16
      $region15: #{_lambda_.13} parent=11 // pred_region
        _
      $region16: #{_lambda_.13} parent=11 // pred_fallthru
        _
      // Predicated region
      $region17: #{_lambda_.13} parent=11 // pred_check
        %p143 = pneg %p78
      $region18: #{_lambda_.13} parent=11 // pred_check_branch
        %145 = sbr.rel (%p143) target = $region20
      $region19: #{_lambda_.13} parent=11 // pred_region
        _
      $region20: #{_lambda_.13} parent=11 // pred_fallthru
        _
      // Predicated region
      $region21: #{_lambda_.13} parent=11 // pred_check
        %p146 = pneg %p99
      $region22: #{_lambda_.13} parent=11 // pred_check_branch
        %148 = sbr.rel (%p146) target = $region24
      $region23: #{_lambda_.13} parent=11 // pred_region
        _
      $region24: #{_lambda_.13} parent=11 // pred_fallthru
        _
    $region12: #{_lambda_.13} parent=5 // pred_fallthru
      _
    %p149 = scmp.lt.s32.totalorder %s10, 2
    // Predicated region
    $region25: #{_lambda_.13} parent=5 // pred_check
      %p150 = pneg %p149
    $region26: #{_lambda_.13} parent=5 // pred_check_branch
      %152 = sbr.rel (%p150) target = $region28
    $region27: #{_lambda_.13} parent=5 // pred_region
      // Predicated region
      $region29: #{_lambda_.13} parent=27 // pred_check
        %p153 = pneg %p30
      $region30: #{_lambda_.13} parent=27 // pred_check_branch
        %155 = sbr.rel (%p153) target = $region32
      $region31: #{_lambda_.13} parent=27 // pred_region
        %p156 = scmp.lt.s32.totalorder %s10, 1
        %s157 = scalar_select %p156, %s10, 1
        %s158 = smul.addr %s157, 128
        %s159 = smul.addr %s158, 8
        %s160 = scalar_lea.vmem %s0, %s159
      $region32: #{_lambda_.13} parent=27 // pred_fallthru
        _
    $region28: #{_lambda_.13} parent=5 // pred_fallthru
      _
    %p161 = scmp.le.s32.totalorder 1, %s10
    %p162 = scmp.lt.s32.totalorder %s10, 3
    %p163 = pnand %p161, %p162
    %p164 = pneg %p163
    // Predicated region
    $region33: #{_lambda_.13} parent=5 // pred_check
      _
    $region34: #{_lambda_.13} parent=5 // pred_check_branch
      %166 = sbr.rel (%p163) target = $region36
    $region35: #{_lambda_.13} parent=5 // pred_region
      %s167 = ssub.s32 %s10, 1
      %p168 = scmp.lt.s32.totalorder %s15, 1
      %s169 = scalar_select %p168, %s15, 1
      %s170 = smul.addr %s169, 128
      %s171 = smul.addr %s170, 8
      %s172 = scalar_lea.vmem %s0, %s171
      %p173 = pneg %p36
      %p174 = pneg %p33
      %p175 = pneg %p57
      %p176 = pneg %p54
      %p177 = pneg %p78
      %p178 = pneg %p75
      %p179 = pneg %p99
      %p180 = pneg %p96
      %p181 = pneg %p125
      %p182 = pneg %p122
      %p183 = scmp.lt.s32.totalorder %s15, 1
      %s184 = scalar_select %p183, %s15, 1
      %s185 = smul.addr %s184, 4
      %s186 = smul.addr %s185, 8
      %s187 = scalar_lea.vmem %s4, %s186
      %p188 = scmp.lt.s32.totalorder %s15, 1
      %s189 = scalar_select %p188, %s15, 1
      %s190 = smul.addr %s189, 128
      %s191 = smul.addr %s190, 8
      %s192 = scalar_lea.vmem %s0, %s191
      %p193 = scmp.lt.s32.totalorder %s15, 1
      %s194 = scalar_select %p193, %s15, 1
      %s195 = smul.addr %s194, 4
      %s196 = smul.addr %s195, 8
      %s197 = scalar_lea.vmem %s4, %s196
      %v198 = vld [vmem:[%s192] sm:$0xff]
      %v199 = vld [vmem:[%s192 + $0x8] sm:$0xff]
      %v200 = vld [vmem:[%s192 + $0x10] sm:$0xff]
      %v201 = vld [vmem:[%s192 + $0x18] sm:$0xff]
      %v202 = vld [vmem:[%s192 + $0x20] sm:$0xff]
      %v203 = vld [vmem:[%s192 + $0x28] sm:$0xff]
      %v204 = vld [vmem:[%s192 + $0x30] sm:$0xff]
      %v205 = vld [vmem:[%s192 + $0x38] sm:$0xff]
      %v206 = vld [vmem:[%s192 + $0x40] sm:$0xff]
      %v207 = vld [vmem:[%s192 + $0x48] sm:$0xff]
      %v208 = vld [vmem:[%s192 + $0x50] sm:$0xff]
      %v209 = vld [vmem:[%s192 + $0x58] sm:$0xff]
      %v210 = vld [vmem:[%s192 + $0x60] sm:$0xff]
      %v211 = vld [vmem:[%s192 + $0x68] sm:$0xff]
      %v212 = vld [vmem:[%s192 + $0x70] sm:$0xff]
      %v213 = vld [vmem:[%s192 + $0x78] sm:$0xff]
      %v214 = vld [vmem:[%s192 + $0x80] sm:$0xff]
      %v215 = vld [vmem:[%s192 + $0x88] sm:$0xff]
      %v216 = vld [vmem:[%s192 + $0x90] sm:$0xff]
      %v217 = vld [vmem:[%s192 + $0x98] sm:$0xff]
      %v218 = vld [vmem:[%s192 + $0xa0] sm:$0xff]
      %v219 = vld [vmem:[%s192 + $0xa8] sm:$0xff]
      %v220 = vld [vmem:[%s192 + $0xb0] sm:$0xff]
      %v221 = vld [vmem:[%s192 + $0xb8] sm:$0xff]
      %v222 = vld [vmem:[%s192 + $0xc0] sm:$0xff]
      %v223 = vld [vmem:[%s192 + $0xc8] sm:$0xff]
      %v224 = vld [vmem:[%s192 + $0xd0] sm:$0xff]
      %v225 = vld [vmem:[%s192 + $0xd8] sm:$0xff]
      %v226 = vld [vmem:[%s192 + $0xe0] sm:$0xff]
      %v227 = vld [vmem:[%s192 + $0xe8] sm:$0xff]
      %v228 = vld [vmem:[%s192 + $0xf0] sm:$0xff]
      %v229 = vld [vmem:[%s192 + $0xf8] sm:$0xff]
      %v230 = vld [vmem:[%s192 + $0x100] sm:$0xff]
      %v231 = vld [vmem:[%s192 + $0x108] sm:$0xff]
      %v232 = vld [vmem:[%s192 + $0x110] sm:$0xff]
      %v233 = vld [vmem:[%s192 + $0x118] sm:$0xff]
      %v234 = vld [vmem:[%s192 + $0x120] sm:$0xff]
      %v235 = vld [vmem:[%s192 + $0x128] sm:$0xff]
      %v236 = vld [vmem:[%s192 + $0x130] sm:$0xff]
      %v237 = vld [vmem:[%s192 + $0x138] sm:$0xff]
      %v238 = vld [vmem:[%s192 + $0x140] sm:$0xff]
      %v239 = vld [vmem:[%s192 + $0x148] sm:$0xff]
      %v240 = vld [vmem:[%s192 + $0x150] sm:$0xff]
      %v241 = vld [vmem:[%s192 + $0x158] sm:$0xff]
      %v242 = vld [vmem:[%s192 + $0x160] sm:$0xff]
      %v243 = vld [vmem:[%s192 + $0x168] sm:$0xff]
      %v244 = vld [vmem:[%s192 + $0x170] sm:$0xff]
      %v245 = vld [vmem:[%s192 + $0x178] sm:$0xff]
      %v246 = vld [vmem:[%s192 + $0x180] sm:$0xff]
      %v247 = vld [vmem:[%s192 + $0x188] sm:$0xff]
      %v248 = vld [vmem:[%s192 + $0x190] sm:$0xff]
      %v249 = vld [vmem:[%s192 + $0x198] sm:$0xff]
      %v250 = vld [vmem:[%s192 + $0x1a0] sm:$0xff]
      %v251 = vld [vmem:[%s192 + $0x1a8] sm:$0xff]
      %v252 = vld [vmem:[%s192 + $0x1b0] sm:$0xff]
      %v253 = vld [vmem:[%s192 + $0x1b8] sm:$0xff]
      %v254 = vld [vmem:[%s192 + $0x1c0] sm:$0xff]
      %v255 = vld [vmem:[%s192 + $0x1c8] sm:$0xff]
      %v256 = vld [vmem:[%s192 + $0x1d0] sm:$0xff]
      %v257 = vld [vmem:[%s192 + $0x1d8] sm:$0xff]
      %v258 = vld [vmem:[%s192 + $0x1e0] sm:$0xff]
      %v259 = vld [vmem:[%s192 + $0x1e8] sm:$0xff]
      %v260 = vld [vmem:[%s192 + $0x1f0] sm:$0xff]
      %v261 = vld [vmem:[%s192 + $0x1f8] sm:$0xff]
      %v262 = vld [vmem:[%s192 + $0x200] sm:$0xff]
      %v263 = vld [vmem:[%s192 + $0x208] sm:$0xff]
      %v264 = vld [vmem:[%s192 + $0x210] sm:$0xff]
      %v265 = vld [vmem:[%s192 + $0x218] sm:$0xff]
      %v266 = vld [vmem:[%s192 + $0x220] sm:$0xff]
      %v267 = vld [vmem:[%s192 + $0x228] sm:$0xff]
      %v268 = vld [vmem:[%s192 + $0x230] sm:$0xff]
      %v269 = vld [vmem:[%s192 + $0x238] sm:$0xff]
      %v270 = vld [vmem:[%s192 + $0x240] sm:$0xff]
      %v271 = vld [vmem:[%s192 + $0x248] sm:$0xff]
      %v272 = vld [vmem:[%s192 + $0x250] sm:$0xff]
      %v273 = vld [vmem:[%s192 + $0x258] sm:$0xff]
      %v274 = vld [vmem:[%s192 + $0x260] sm:$0xff]
      %v275 = vld [vmem:[%s192 + $0x268] sm:$0xff]
      %v276 = vld [vmem:[%s192 + $0x270] sm:$0xff]
      %v277 = vld [vmem:[%s192 + $0x278] sm:$0xff]
      %v278 = vld [vmem:[%s192 + $0x280] sm:$0xff]
      %v279 = vld [vmem:[%s192 + $0x288] sm:$0xff]
      %v280 = vld [vmem:[%s192 + $0x290] sm:$0xff]
      %v281 = vld [vmem:[%s192 + $0x298] sm:$0xff]
      %v282 = vld [vmem:[%s192 + $0x2a0] sm:$0xff]
      %v283 = vld [vmem:[%s192 + $0x2a8] sm:$0xff]
      %v284 = vld [vmem:[%s192 + $0x2b0] sm:$0xff]
      %v285 = vld [vmem:[%s192 + $0x2b8] sm:$0xff]
      %v286 = vld [vmem:[%s192 + $0x2c0] sm:$0xff]
      %v287 = vld [vmem:[%s192 + $0x2c8] sm:$0xff]
      %v288 = vld [vmem:[%s192 + $0x2d0] sm:$0xff]
      %v289 = vld [vmem:[%s192 + $0x2d8] sm:$0xff]
      %v290 = vld [vmem:[%s192 + $0x2e0] sm:$0xff]
      %v291 = vld [vmem:[%s192 + $0x2e8] sm:$0xff]
      %v292 = vld [vmem:[%s192 + $0x2f0] sm:$0xff]
      %v293 = vld [vmem:[%s192 + $0x2f8] sm:$0xff]
      %v294 = vld [vmem:[%s192 + $0x300] sm:$0xff]
      %v295 = vld [vmem:[%s192 + $0x308] sm:$0xff]
      %v296 = vld [vmem:[%s192 + $0x310] sm:$0xff]
      %v297 = vld [vmem:[%s192 + $0x318] sm:$0xff]
      %v298 = vld [vmem:[%s192 + $0x320] sm:$0xff]
      %v299 = vld [vmem:[%s192 + $0x328] sm:$0xff]
      %v300 = vld [vmem:[%s192 + $0x330] sm:$0xff]
      %v301 = vld [vmem:[%s192 + $0x338] sm:$0xff]
      %v302 = vld [vmem:[%s192 + $0x340] sm:$0xff]
      %v303 = vld [vmem:[%s192 + $0x348] sm:$0xff]
      %v304 = vld [vmem:[%s192 + $0x350] sm:$0xff]
      %v305 = vld [vmem:[%s192 + $0x358] sm:$0xff]
      %v306 = vld [vmem:[%s192 + $0x360] sm:$0xff]
      %v307 = vld [vmem:[%s192 + $0x368] sm:$0xff]
      %v308 = vld [vmem:[%s192 + $0x370] sm:$0xff]
      %v309 = vld [vmem:[%s192 + $0x378] sm:$0xff]
      %v310 = vld [vmem:[%s192 + $0x380] sm:$0xff]
      %v311 = vld [vmem:[%s192 + $0x388] sm:$0xff]
      %v312 = vld [vmem:[%s192 + $0x390] sm:$0xff]
      %v313 = vld [vmem:[%s192 + $0x398] sm:$0xff]
      %v314 = vld [vmem:[%s192 + $0x3a0] sm:$0xff]
      %v315 = vld [vmem:[%s192 + $0x3a8] sm:$0xff]
      %v316 = vld [vmem:[%s192 + $0x3b0] sm:$0xff]
      %v317 = vld [vmem:[%s192 + $0x3b8] sm:$0xff]
      %v318 = vld [vmem:[%s192 + $0x3c0] sm:$0xff]
      %v319 = vld [vmem:[%s192 + $0x3c8] sm:$0xff]
      %v320 = vld [vmem:[%s192 + $0x3d0] sm:$0xff]
      %v321 = vld [vmem:[%s192 + $0x3d8] sm:$0xff]
      %v322 = vld [vmem:[%s192 + $0x3e0] sm:$0xff]
      %v323 = vld [vmem:[%s192 + $0x3e8] sm:$0xff]
      %v324 = vld [vmem:[%s192 + $0x3f0] sm:$0xff]
      %v325 = vld [vmem:[%s192 + $0x3f8] sm:$0xff]
      %v326 = vld [vmem:[%s1] sm:$0xff]
      %v327 = vld [vmem:[%s1 + $0x8] sm:$0xff]
      %328 = vmatpush.msra.mxu0 %v258
      %329 = vmatpush.msra.mxu0 %v254
      %330 = vmatpush.msra.mxu0 %v250
      %331 = vmatpush.msra.mxu0 %v246
      %332 = vmatpush.msra.mxu0 %v242
      %333 = vmatpush.msra.mxu0 %v238
      %334 = vmatpush.msra.mxu0 %v234
      %335 = vmatpush.msra.mxu0 %v230
      %336 = vmatpush.msra.mxu0 %v226
      %337 = vmatpush.msra.mxu0 %v222
      %338 = vmatpush.msra.mxu0 %v218
      %339 = vmatpush.msra.mxu0 %v214
      %340 = vmatpush.msra.mxu0 %v210
      %341 = vmatpush.msra.mxu0 %v206
      %342 = vmatpush.msra.mxu0 %v202
      %343 = vmatpush.msra.mxu0 %v198
      %344 = vmatmul.f32.gmra.mxu0 %v326
      %v345 = vpop.f32.mrf.mxu0
      %v346 = vadd.f32 0.0, %v345
      %347 = vdwg.mxu0
      %348 = vmatpush.msra.mxu0 %v322
      %349 = vmatpush.msra.mxu0 %v318
      %350 = vmatpush.msra.mxu0 %v314
      %351 = vmatpush.msra.mxu0 %v310
      %352 = vmatpush.msra.mxu0 %v306
      %353 = vmatpush.msra.mxu0 %v302
      %354 = vmatpush.msra.mxu0 %v298
      %355 = vmatpush.msra.mxu0 %v294
      %356 = vmatpush.msra.mxu0 %v290
      %357 = vmatpush.msra.mxu0 %v286
      %358 = vmatpush.msra.mxu0 %v282
      %359 = vmatpush.msra.mxu0 %v278
      %360 = vmatpush.msra.mxu0 %v274
      %361 = vmatpush.msra.mxu0 %v270
      %362 = vmatpush.msra.mxu0 %v266
      %363 = vmatpush.msra.mxu0 %v262
      %364 = vmatmul.f32.gmra.mxu0 %v327
      %v365 = vpop.f32.mrf.mxu0
      %v366 = vadd.f32 %v346, %v365
      %367 = vdwg.mxu0
      %368 = vmatpush.msra.mxu0 %v259
      %369 = vmatpush.msra.mxu0 %v255
      %370 = vmatpush.msra.mxu0 %v251
      %371 = vmatpush.msra.mxu0 %v247
      %372 = vmatpush.msra.mxu0 %v243
      %373 = vmatpush.msra.mxu0 %v239
      %374 = vmatpush.msra.mxu0 %v235
      %375 = vmatpush.msra.mxu0 %v231
      %376 = vmatpush.msra.mxu0 %v227
      %377 = vmatpush.msra.mxu0 %v223
      %378 = vmatpush.msra.mxu0 %v219
      %379 = vmatpush.msra.mxu0 %v215
      %380 = vmatpush.msra.mxu0 %v211
      %381 = vmatpush.msra.mxu0 %v207
      %382 = vmatpush.msra.mxu0 %v203
      %383 = vmatpush.msra.mxu0 %v199
      %384 = vmatmul.f32.gmra.mxu0 %v326
      %v385 = vpop.f32.mrf.mxu0
      %v386 = vadd.f32 0.0, %v385
      %387 = vdwg.mxu0
      %388 = vmatpush.msra.mxu0 %v323
      %389 = vmatpush.msra.mxu0 %v319
      %390 = vmatpush.msra.mxu0 %v315
      %391 = vmatpush.msra.mxu0 %v311
      %392 = vmatpush.msra.mxu0 %v307
      %393 = vmatpush.msra.mxu0 %v303
      %394 = vmatpush.msra.mxu0 %v299
      %395 = vmatpush.msra.mxu0 %v295
      %396 = vmatpush.msra.mxu0 %v291
      %397 = vmatpush.msra.mxu0 %v287
      %398 = vmatpush.msra.mxu0 %v283
      %399 = vmatpush.msra.mxu0 %v279
      %400 = vmatpush.msra.mxu0 %v275
      %401 = vmatpush.msra.mxu0 %v271
      %402 = vmatpush.msra.mxu0 %v267
      %403 = vmatpush.msra.mxu0 %v263
      %404 = vmatmul.f32.gmra.mxu0 %v327
      %v405 = vpop.f32.mrf.mxu0
      %v406 = vadd.f32 %v386, %v405
      %407 = vdwg.mxu0
      %408 = vmatpush.msra.mxu0 %v260
      %409 = vmatpush.msra.mxu0 %v256
      %410 = vmatpush.msra.mxu0 %v252
      %411 = vmatpush.msra.mxu0 %v248
      %412 = vmatpush.msra.mxu0 %v244
      %413 = vmatpush.msra.mxu0 %v240
      %414 = vmatpush.msra.mxu0 %v236
      %415 = vmatpush.msra.mxu0 %v232
      %416 = vmatpush.msra.mxu0 %v228
      %417 = vmatpush.msra.mxu0 %v224
      %418 = vmatpush.msra.mxu0 %v220
      %419 = vmatpush.msra.mxu0 %v216
      %420 = vmatpush.msra.mxu0 %v212
      %421 = vmatpush.msra.mxu0 %v208
      %422 = vmatpush.msra.mxu0 %v204
      %423 = vmatpush.msra.mxu0 %v200
      %424 = vmatmul.f32.gmra.mxu0 %v326
      %v425 = vpop.f32.mrf.mxu0
      %v426 = vadd.f32 0.0, %v425
      %427 = vdwg.mxu0
      %428 = vmatpush.msra.mxu0 %v324
      %429 = vmatpush.msra.mxu0 %v320
      %430 = vmatpush.msra.mxu0 %v316
      %431 = vmatpush.msra.mxu0 %v312
      %432 = vmatpush.msra.mxu0 %v308
      %433 = vmatpush.msra.mxu0 %v304
      %434 = vmatpush.msra.mxu0 %v300
      %435 = vmatpush.msra.mxu0 %v296
      %436 = vmatpush.msra.mxu0 %v292
      %437 = vmatpush.msra.mxu0 %v288
      %438 = vmatpush.msra.mxu0 %v284
      %439 = vmatpush.msra.mxu0 %v280
      %440 = vmatpush.msra.mxu0 %v276
      %441 = vmatpush.msra.mxu0 %v272
      %442 = vmatpush.msra.mxu0 %v268
      %443 = vmatpush.msra.mxu0 %v264
      %444 = vmatmul.f32.gmra.mxu0 %v327
      %v445 = vpop.f32.mrf.mxu0
      %v446 = vadd.f32 %v426, %v445
      %447 = vdwg.mxu0
      %448 = vmatpush.msra.mxu0 %v261
      %449 = vmatpush.msra.mxu0 %v257
      %450 = vmatpush.msra.mxu0 %v253
      %451 = vmatpush.msra.mxu0 %v249
      %452 = vmatpush.msra.mxu0 %v245
      %453 = vmatpush.msra.mxu0 %v241
      %454 = vmatpush.msra.mxu0 %v237
      %455 = vmatpush.msra.mxu0 %v233
      %456 = vmatpush.msra.mxu0 %v229
      %457 = vmatpush.msra.mxu0 %v225
      %458 = vmatpush.msra.mxu0 %v221
      %459 = vmatpush.msra.mxu0 %v217
      %460 = vmatpush.msra.mxu0 %v213
      %461 = vmatpush.msra.mxu0 %v209
      %462 = vmatpush.msra.mxu0 %v205
      %463 = vmatpush.msra.mxu0 %v201
      %464 = vmatmul.f32.gmra.mxu0 %v326
      %v465 = vpop.f32.mrf.mxu0
      %v466 = vadd.f32 0.0, %v465
      %467 = vdwg.mxu0
      %468 = vmatpush.msra.mxu0 %v325
      %469 = vmatpush.msra.mxu0 %v321
      %470 = vmatpush.msra.mxu0 %v317
      %471 = vmatpush.msra.mxu0 %v313
      %472 = vmatpush.msra.mxu0 %v309
      %473 = vmatpush.msra.mxu0 %v305
      %474 = vmatpush.msra.mxu0 %v301
      %475 = vmatpush.msra.mxu0 %v297
      %476 = vmatpush.msra.mxu0 %v293
      %477 = vmatpush.msra.mxu0 %v289
      %478 = vmatpush.msra.mxu0 %v285
      %479 = vmatpush.msra.mxu0 %v281
      %480 = vmatpush.msra.mxu0 %v277
      %481 = vmatpush.msra.mxu0 %v273
      %482 = vmatpush.msra.mxu0 %v269
      %483 = vmatpush.msra.mxu0 %v265
      %484 = vmatmul.f32.gmra.mxu0 %v327
      %v485 = vpop.f32.mrf.mxu0
      %v486 = vadd.f32 %v466, %v485
      %487 = vdwg.mxu0
      %v488 = vadd.f32 %v366, %v406
      %v489 = vadd.f32 %v488, %v446
      %v490 = vadd.f32 %v489, %v486
      %491 = vadd.xlane.f32.xlu0 %v490
      %v492 = vpop.xlane.xlu0 %491
      %v493 = vrcp.pop 512.0
      %v494 = vmul.f32 512.0, %v493
      %v495 = vsub.f32 1.0, %v494
      %v496 = vmul.f32 %v493, %v495
      %v497 = vadd.f32 %v493, %v496
      %vm498 = vweird.f32 %v493
      %v499 = vsel %vm498, %v493, %v497
      %v500 = vmul.f32 %v492, %v499
      %v501 = vsub.f32 %v366, %v500
      %v502 = vsub.f32 %v406, %v500
      %v503 = vsub.f32 %v446, %v500
      %v504 = vsub.f32 %v486, %v500
      %v505 = vmul.f32 %v501, %v501
      %v506 = vmul.f32 %v502, %v502
      %v507 = vmul.f32 %v503, %v503
      %v508 = vmul.f32 %v504, %v504
      %v509 = vadd.f32 %v505, %v506
      %v510 = vadd.f32 %v509, %v507
      %v511 = vadd.f32 %v510, %v508
      %512 = vadd.xlane.f32.xlu0 %v511
      %v513 = vpop.xlane.xlu0 %512
      %v514 = vmul.f32 %v513, %v499
      %v515 = vadd.f32 %v514, 1e-05
      %v516 = vrsqrt.pop %v515
      %v517 = vmul.f32 %v516, %v515
      %v518 = vmul.f32 %v517, %v516
      %v519 = vmul.f32 0.5, %v518
      %v520 = vsub.f32 1.5, %v519
      %v521 = vmul.f32 %v516, %v520
      %vm522 = vweird.f32 %v515
      %vm523 = vweird.f32 %v516
      %vm524 = vmor %vm522, %vm523
      %v525 = vsel %vm524, %v516, %v521
      %v526 = vmul.f32 %v501, %v525
      %v527 = vmul.f32 %v502, %v525
      %v528 = vmul.f32 %v503, %v525
      %v529 = vmul.f32 %v504, %v525
      %v530 = vld [vmem:[%s2] sm:$0xff]
      %532 = vset.pattern.permute.xlu0 0
      %533 = vperm.xlu0 %532, %v530
      %v534 = vpop.permute.xlu0 %533
      %v536 = vmul.f32 %v526, %v534
      %v537 = vmul.f32 %v527, %v534
      %v538 = vmul.f32 %v528, %v534
      %v539 = vmul.f32 %v529, %v534
      %v540 = vld [vmem:[%s3] sm:$0xff]
      %542 = vset.pattern.permute.xlu0 0
      %543 = vperm.xlu0 %542, %v540
      %v544 = vpop.permute.xlu0 %543
      %v546 = vadd.f32 %v536, %v544
      %v547 = vadd.f32 %v537, %v544
      %v548 = vadd.f32 %v538, %v544
      %v549 = vadd.f32 %v539, %v544
      %vm550 = vcmp.ge.f32.partialorder %v546, 0.0
      %vm551 = vcmp.ge.f32.partialorder %v547, 0.0
      %vm552 = vcmp.ge.f32.partialorder %v548, 0.0
      %vm553 = vcmp.ge.f32.partialorder %v549, 0.0
      %v554 = vmul.f32 %v546, 0.01
      %v555 = vmul.f32 %v547, 0.01
      %v556 = vmul.f32 %v548, 0.01
      %v557 = vmul.f32 %v549, 0.01
      %v558 = vsel %vm550, %v546, %v554
      %v559 = vsel %vm551, %v547, %v555
      %v560 = vsel %vm552, %v548, %v556
      %v561 = vsel %vm553, %v549, %v557
      %562 = vst [vmem:[%s197] sm:$0xff] %v558
      %563 = vst [vmem:[%s197 + $0x8] sm:$0xff] %v559
      %564 = vst [vmem:[%s197 + $0x10] sm:$0xff] %v560
      %565 = vst [vmem:[%s197 + $0x18] sm:$0xff] %v561
      %p566 = scmp.lt.s32.totalorder %s15, 1
      %s567 = scalar_select %p566, %s15, 1
      %s568 = smul.addr %s567, 4
      %s569 = smul.addr %s568, 8
      %s570 = scalar_lea.vmem %s4, %s569
      // Predicated region
      $region37: #{_lambda_.13} parent=35 // pred_check
        %p571 = pneg %p122
      $region38: #{_lambda_.13} parent=35 // pred_check_branch
        %573 = sbr.rel (%p571) target = $region40
      $region39: #{_lambda_.13} parent=35 // pred_region
        _
      $region40: #{_lambda_.13} parent=35 // pred_fallthru
        _
    $region36: #{_lambda_.13} parent=5 // pred_fallthru
      _
    %p574 = scmp.le.s32.totalorder 2, %s10
    // Predicated region
    $region41: #{_lambda_.13} parent=5 // pred_check
      %p575 = pneg %p574
    $region42: #{_lambda_.13} parent=5 // pred_check_branch
      %577 = sbr.rel (%p575) target = $region44
    $region43: #{_lambda_.13} parent=5 // pred_region
      %s578 = ssub.s32 %s10, 2
      // Predicated region
      $region45: #{_lambda_.13} parent=43 // pred_check
        %p579 = pneg %p128
      $region46: #{_lambda_.13} parent=43 // pred_check_branch
        %581 = sbr.rel (%p579) target = $region48
      $region47: #{_lambda_.13} parent=43 // pred_region
        %p582 = scmp.lt.s32.totalorder %s16, 1
        %s583 = scalar_select %p582, %s16, 1
        %s584 = smul.addr %s583, 4
        %s585 = smul.addr %s584, 8
        %s586 = scalar_lea.vmem %s4, %s585
      $region48: #{_lambda_.13} parent=43 // pred_fallthru
        _
    $region44: #{_lambda_.13} parent=5 // pred_fallthru
      _
  $region6: #{_lambda_.13} parent=0 // loop_footer
    %s14 = sadd.s32 1, %s10
  $region7: #{_lambda_.13} parent=0 // loop_footer_branch
    %9 = sbr.rel target = $region3
  $region8: #{_lambda_.13} parent=0 // loop_exit
    _

// kernel: _lambda_.14
$region0: #{_lambda_.14}
  #allocation0 [shape = 'u32[]', space=smem, size = 0x4, offset = 0x4, fixed_abs, tag = 'smem constant byte address 0x4 - core index']
  #allocation1 [shape = 'u32[72,128]{1,0:T(1,128)}', space=vmem, size = 0x9000, scoped, tag = 'internal scratch']
  %s0 = inlined_call_operand.vmem [shape: f32[2,512,512], index: 0, kind: input, shape index: {}]
  %s1 = inlined_call_operand.vmem [shape: f32[8,512], index: 1, kind: input, shape index: {}]
  %s2 = inlined_call_operand.vmem [shape: f32[8,1], index: 2, kind: input, shape index: {}]
  %s3 = inlined_call_operand.vmem [shape: f32[8,1], index: 3, kind: input, shape index: {}]
  %s4 = inlined_call_operand.vmem [shape: f32[2,8,512], index: 4, kind: output, shape index: {}]
  %s5 = sld [smem:[#allocation0]]
  $region49: #{_lambda_.14} parent=0
    _
  %s7 = ssub.s32 1, %s5
  %s8 = scalar_select 0, %s7, %s5
  loop: start=0, step=1, limit=4
  $region2: #{_lambda_.14} parent=0 // loop_pre_header
    _
  $region3: #{_lambda_.14} parent=0 // loop_header
    %s10 = sphi 0, %s14
    %p11 = scmp.ge.s32.totalorder %s10, 4
    %s20 = sphi 0, %s22
    %s23 = sphi 0, %s20
    %s24 = sphi 0, %s23
    %s40 = sphi 0, %s24
    %s44 = sphi 0, %s44
    %s46 = sphi 0, %s44
    %s47 = sphi 0, %s46
    %s61 = sphi 0, %s47
    %s65 = sphi 0, %s65
    %s67 = sphi 0, %s65
    %s68 = sphi 0, %s67
    %s82 = sphi 0, %s68
    %s86 = sphi 0, %s86
    %s88 = sphi 0, %s86
    %s89 = sphi 0, %s88
    %s103 = sphi 0, %s89
    %s109 = sphi 0, %s111
    %s112 = sphi 0, %s109
    %s113 = sphi 0, %s112
    %s129 = sphi 0, %s113
  $region4: #{_lambda_.14} parent=0 // loop_header_branch
    %13 = sbr.rel (%p11) target = $region8
  $region5: #{_lambda_.14} parent=0 // loop_body
    %s15 = ssub.s32 %s10, 1
    %s16 = ssub.s32 %s10, 2
    %s17 = sadd.s32 %s10, 1
    %s18 = ssub.s32 %s10, %s17
    %p19 = scmp.eq.s32.totalorder %s18, 0
    %s21 = sadd.s32 %s20, 1
    %s22 = scalar_select %p19, %s20, %s21
    %p25 = pneg %p19
    %p26 = scmp.eq.s32.totalorder %s10, 1
    %p27 = por %p25, %p26
    %p28 = scmp.ne.s32.totalorder %s20, %s23
    %p29 = scmp.eq.s32.totalorder %s10, 0
    %p30 = por %p28, %p29
    %p31 = scmp.ne.s32.totalorder %s20, %s23
    %p32 = scmp.eq.s32.totalorder %s15, 1
    %p33 = por %p31, %p32
    %p34 = scmp.ne.s32.totalorder %s23, %s24
    %p35 = scmp.eq.s32.totalorder %s15, 0
    %p36 = por %p34, %p35
    %p37 = scmp.ne.s32.totalorder %s23, %s24
    %p38 = scmp.eq.s32.totalorder %s16, 1
    %p39 = por %p37, %p38
    %p41 = scmp.ne.s32.totalorder %s24, %s40
    %p42 = scmp.eq.s32.totalorder %s16, 0
    %p43 = por %p41, %p42
    %s45 = sadd.s32 %s44, 1
    %p48 = scmp.eq.s32.totalorder %s10, 1
    %p49 = scmp.ne.s32.totalorder %s44, %s46
    %p50 = scmp.eq.s32.totalorder %s10, 0
    %p51 = por %p49, %p50
    %p52 = scmp.ne.s32.totalorder %s44, %s46
    %p53 = scmp.eq.s32.totalorder %s15, 1
    %p54 = por %p52, %p53
    %p55 = scmp.ne.s32.totalorder %s46, %s47
    %p56 = scmp.eq.s32.totalorder %s15, 0
    %p57 = por %p55, %p56
    %p58 = scmp.ne.s32.totalorder %s46, %s47
    %p59 = scmp.eq.s32.totalorder %s16, 1
    %p60 = por %p58, %p59
    %p62 = scmp.ne.s32.totalorder %s47, %s61
    %p63 = scmp.eq.s32.totalorder %s16, 0
    %p64 = por %p62, %p63
    %s66 = sadd.s32 %s65, 1
    %p69 = scmp.eq.s32.totalorder %s10, 1
    %p70 = scmp.ne.s32.totalorder %s65, %s67
    %p71 = scmp.eq.s32.totalorder %s10, 0
    %p72 = por %p70, %p71
    %p73 = scmp.ne.s32.totalorder %s65, %s67
    %p74 = scmp.eq.s32.totalorder %s15, 1
    %p75 = por %p73, %p74
    %p76 = scmp.ne.s32.totalorder %s67, %s68
    %p77 = scmp.eq.s32.totalorder %s15, 0
    %p78 = por %p76, %p77
    %p79 = scmp.ne.s32.totalorder %s67, %s68
    %p80 = scmp.eq.s32.totalorder %s16, 1
    %p81 = por %p79, %p80
    %p83 = scmp.ne.s32.totalorder %s68, %s82
    %p84 = scmp.eq.s32.totalorder %s16, 0
    %p85 = por %p83, %p84
    %s87 = sadd.s32 %s86, 1
    %p90 = scmp.eq.s32.totalorder %s10, 1
    %p91 = scmp.ne.s32.totalorder %s86, %s88
    %p92 = scmp.eq.s32.totalorder %s10, 0
    %p93 = por %p91, %p92
    %p94 = scmp.ne.s32.totalorder %s86, %s88
    %p95 = scmp.eq.s32.totalorder %s15, 1
    %p96 = por %p94, %p95
    %p97 = scmp.ne.s32.totalorder %s88, %s89
    %p98 = scmp.eq.s32.totalorder %s15, 0
    %p99 = por %p97, %p98
    %p100 = scmp.ne.s32.totalorder %s88, %s89
    %p101 = scmp.eq.s32.totalorder %s16, 1
    %p102 = por %p100, %p101
    %p104 = scmp.ne.s32.totalorder %s89, %s103
    %p105 = scmp.eq.s32.totalorder %s16, 0
    %p106 = por %p104, %p105
    %s107 = ssub.s32 %s10, %s17
    %p108 = scmp.eq.s32.totalorder %s107, 0
    %s110 = sadd.s32 %s109, 1
    %s111 = scalar_select %p108, %s109, %s110
    %p114 = pneg %p108
    %p115 = scmp.eq.s32.totalorder %s10, 1
    %p116 = por %p114, %p115
    %p117 = scmp.ne.s32.totalorder %s109, %s112
    %p118 = scmp.eq.s32.totalorder %s10, 0
    %p119 = por %p117, %p118
    %p120 = scmp.ne.s32.totalorder %s109, %s112
    %p121 = scmp.eq.s32.totalorder %s15, 1
    %p122 = por %p120, %p121
    %p123 = scmp.ne.s32.totalorder %s112, %s113
    %p124 = scmp.eq.s32.totalorder %s15, 0
    %p125 = por %p123, %p124
    %p126 = scmp.ne.s32.totalorder %s112, %s113
    %p127 = scmp.eq.s32.totalorder %s16, 1
    %p128 = por %p126, %p127
    %p130 = scmp.ne.s32.totalorder %s113, %s129
    %p131 = scmp.eq.s32.totalorder %s16, 0
    %p132 = por %p130, %p131
    %p133 = scmp.le.s32.totalorder 1, %s10
    %p134 = scmp.lt.s32.totalorder %s10, 3
    %p135 = pnand %p133, %p134
    %p136 = pneg %p135
    // Predicated region
    $region9: #{_lambda_.14} parent=5 // pred_check
      _
    $region10: #{_lambda_.14} parent=5 // pred_check_branch
      %138 = sbr.rel (%p135) target = $region12
    $region11: #{_lambda_.14} parent=5 // pred_region
      %s139 = ssub.s32 %s10, 1
      // Predicated region
      $region13: #{_lambda_.14} parent=11 // pred_check
        %p140 = pneg %p57
      $region14: #{_lambda_.14} parent=11 // pred_check_branch
        %142 = sbr.rel (%p140) target = $region16
      $region15: #{_lambda_.14} parent=11 // pred_region
        _
      $region16: #{_lambda_.14} parent=11 // pred_fallthru
        _
      // Predicated region
      $region17: #{_lambda_.14} parent=11 // pred_check
        %p143 = pneg %p78
      $region18: #{_lambda_.14} parent=11 // pred_check_branch
        %145 = sbr.rel (%p143) target = $region20
      $region19: #{_lambda_.14} parent=11 // pred_region
        _
      $region20: #{_lambda_.14} parent=11 // pred_fallthru
        _
      // Predicated region
      $region21: #{_lambda_.14} parent=11 // pred_check
        %p146 = pneg %p99
      $region22: #{_lambda_.14} parent=11 // pred_check_branch
        %148 = sbr.rel (%p146) target = $region24
      $region23: #{_lambda_.14} parent=11 // pred_region
        _
      $region24: #{_lambda_.14} parent=11 // pred_fallthru
        _
    $region12: #{_lambda_.14} parent=5 // pred_fallthru
      _
    %p149 = scmp.lt.s32.totalorder %s10, 2
    // Predicated region
    $region25: #{_lambda_.14} parent=5 // pred_check
      %p150 = pneg %p149
    $region26: #{_lambda_.14} parent=5 // pred_check_branch
      %152 = sbr.rel (%p150) target = $region28
    $region27: #{_lambda_.14} parent=5 // pred_region
      // Predicated region
      $region29: #{_lambda_.14} parent=27 // pred_check
        %p153 = pneg %p30
      $region30: #{_lambda_.14} parent=27 // pred_check_branch
        %155 = sbr.rel (%p153) target = $region32
      $region31: #{_lambda_.14} parent=27 // pred_region
        %p156 = scmp.lt.s32.totalorder %s10, 1
        %s157 = scalar_select %p156, %s10, 1
        %s158 = smul.addr %s157, 256
        %s159 = smul.addr %s158, 8
        %s160 = scalar_lea.vmem %s0, %s159
      $region32: #{_lambda_.14} parent=27 // pred_fallthru
        _
    $region28: #{_lambda_.14} parent=5 // pred_fallthru
      _
    %p161 = scmp.le.s32.totalorder 1, %s10
    %p162 = scmp.lt.s32.totalorder %s10, 3
    %p163 = pnand %p161, %p162
    %p164 = pneg %p163
    // Predicated region
    $region33: #{_lambda_.14} parent=5 // pred_check
      _
    $region34: #{_lambda_.14} parent=5 // pred_check_branch
      %166 = sbr.rel (%p163) target = $region36
    $region35: #{_lambda_.14} parent=5 // pred_region
      %s167 = ssub.s32 %s10, 1
      %p168 = scmp.lt.s32.totalorder %s15, 1
      %s169 = scalar_select %p168, %s15, 1
      %s170 = smul.addr %s169, 256
      %s171 = smul.addr %s170, 8
      %s172 = scalar_lea.vmem %s0, %s171
      %p173 = pneg %p36
      %p174 = pneg %p33
      %p175 = pneg %p57
      %p176 = pneg %p54
      %p177 = pneg %p78
      %p178 = pneg %p75
      %p179 = pneg %p99
      %p180 = pneg %p96
      %p181 = pneg %p125
      %p182 = pneg %p122
      %p183 = scmp.lt.s32.totalorder %s15, 1
      %s184 = scalar_select %p183, %s15, 1
      %s185 = smul.addr %s184, 4
      %s186 = smul.addr %s185, 8
      %s187 = scalar_lea.vmem %s4, %s186
      %p188 = scmp.lt.s32.totalorder %s15, 1
      %s189 = scalar_select %p188, %s15, 1
      %s190 = smul.addr %s189, 256
      %s191 = smul.addr %s190, 8
      %s192 = scalar_lea.vmem %s0, %s191
      %p193 = scmp.lt.s32.totalorder %s15, 1
      %s194 = scalar_select %p193, %s15, 1
      %s195 = smul.addr %s194, 4
      %s196 = smul.addr %s195, 8
      %s197 = scalar_lea.vmem %s4, %s196
      %v198 = vld [vmem:[%s192] sm:$0xff]
      %v199 = vld [vmem:[%s192 + $0x8] sm:$0xff]
      %v200 = vld [vmem:[%s192 + $0x10] sm:$0xff]
      %v201 = vld [vmem:[%s192 + $0x18] sm:$0xff]
      %v202 = vld [vmem:[%s192 + $0x20] sm:$0xff]
      %v203 = vld [vmem:[%s192 + $0x28] sm:$0xff]
      %v204 = vld [vmem:[%s192 + $0x30] sm:$0xff]
      %v205 = vld [vmem:[%s192 + $0x38] sm:$0xff]
      %v206 = vld [vmem:[%s192 + $0x40] sm:$0xff]
      %v207 = vld [vmem:[%s192 + $0x48] sm:$0xff]
      %v208 = vld [vmem:[%s192 + $0x50] sm:$0xff]
      %v209 = vld [vmem:[%s192 + $0x58] sm:$0xff]
      %v210 = vld [vmem:[%s192 + $0x60] sm:$0xff]
      %v211 = vld [vmem:[%s192 + $0x68] sm:$0xff]
      %v212 = vld [vmem:[%s192 + $0x70] sm:$0xff]
      %v213 = vld [vmem:[%s192 + $0x78] sm:$0xff]
      %v214 = vld [vmem:[%s192 + $0x80] sm:$0xff]
      %v215 = vld [vmem:[%s192 + $0x88] sm:$0xff]
      %v216 = vld [vmem:[%s192 + $0x90] sm:$0xff]
      %v217 = vld [vmem:[%s192 + $0x98] sm:$0xff]
      %v218 = vld [vmem:[%s192 + $0xa0] sm:$0xff]
      %v219 = vld [vmem:[%s192 + $0xa8] sm:$0xff]
      %v220 = vld [vmem:[%s192 + $0xb0] sm:$0xff]
      %v221 = vld [vmem:[%s192 + $0xb8] sm:$0xff]
      %v222 = vld [vmem:[%s192 + $0xc0] sm:$0xff]
      %v223 = vld [vmem:[%s192 + $0xc8] sm:$0xff]
      %v224 = vld [vmem:[%s192 + $0xd0] sm:$0xff]
      %v225 = vld [vmem:[%s192 + $0xd8] sm:$0xff]
      %v226 = vld [vmem:[%s192 + $0xe0] sm:$0xff]
      %v227 = vld [vmem:[%s192 + $0xe8] sm:$0xff]
      %v228 = vld [vmem:[%s192 + $0xf0] sm:$0xff]
      %v229 = vld [vmem:[%s192 + $0xf8] sm:$0xff]
      %v230 = vld [vmem:[%s192 + $0x100] sm:$0xff]
      %v231 = vld [vmem:[%s192 + $0x108] sm:$0xff]
      %v232 = vld [vmem:[%s192 + $0x110] sm:$0xff]
      %v233 = vld [vmem:[%s192 + $0x118] sm:$0xff]
      %v234 = vld [vmem:[%s192 + $0x120] sm:$0xff]
      %v235 = vld [vmem:[%s192 + $0x128] sm:$0xff]
      %v236 = vld [vmem:[%s192 + $0x130] sm:$0xff]
      %v237 = vld [vmem:[%s192 + $0x138] sm:$0xff]
      %v238 = vld [vmem:[%s192 + $0x140] sm:$0xff]
      %v239 = vld [vmem:[%s192 + $0x148] sm:$0xff]
      %v240 = vld [vmem:[%s192 + $0x150] sm:$0xff]
      %v241 = vld [vmem:[%s192 + $0x158] sm:$0xff]
      %v242 = vld [vmem:[%s192 + $0x160] sm:$0xff]
      %v243 = vld [vmem:[%s192 + $0x168] sm:$0xff]
      %v244 = vld [vmem:[%s192 + $0x170] sm:$0xff]
      %v245 = vld [vmem:[%s192 + $0x178] sm:$0xff]
      %v246 = vld [vmem:[%s192 + $0x180] sm:$0xff]
      %v247 = vld [vmem:[%s192 + $0x188] sm:$0xff]
      %v248 = vld [vmem:[%s192 + $0x190] sm:$0xff]
      %v249 = vld [vmem:[%s192 + $0x198] sm:$0xff]
      %v250 = vld [vmem:[%s192 + $0x1a0] sm:$0xff]
      %v251 = vld [vmem:[%s192 + $0x1a8] sm:$0xff]
      %v252 = vld [vmem:[%s192 + $0x1b0] sm:$0xff]
      %v253 = vld [vmem:[%s192 + $0x1b8] sm:$0xff]
      %v254 = vld [vmem:[%s192 + $0x1c0] sm:$0xff]
      %v255 = vld [vmem:[%s192 + $0x1c8] sm:$0xff]
      %v256 = vld [vmem:[%s192 + $0x1d0] sm:$0xff]
      %v257 = vld [vmem:[%s192 + $0x1d8] sm:$0xff]
      %v258 = vld [vmem:[%s192 + $0x1e0] sm:$0xff]
      %v259 = vld [vmem:[%s192 + $0x1e8] sm:$0xff]
      %v260 = vld [vmem:[%s192 + $0x1f0] sm:$0xff]
      %v261 = vld [vmem:[%s192 + $0x1f8] sm:$0xff]
      %v262 = vld [vmem:[%s192 + $0x200] sm:$0xff]
      %v263 = vld [vmem:[%s192 + $0x208] sm:$0xff]
      %v264 = vld [vmem:[%s192 + $0x210] sm:$0xff]
      %v265 = vld [vmem:[%s192 + $0x218] sm:$0xff]
      %v266 = vld [vmem:[%s192 + $0x220] sm:$0xff]
      %v267 = vld [vmem:[%s192 + $0x228] sm:$0xff]
      %v268 = vld [vmem:[%s192 + $0x230] sm:$0xff]
      %v269 = vld [vmem:[%s192 + $0x238] sm:$0xff]
      %v270 = vld [vmem:[%s192 + $0x240] sm:$0xff]
      %v271 = vld [vmem:[%s192 + $0x248] sm:$0xff]
      %v272 = vld [vmem:[%s192 + $0x250] sm:$0xff]
      %v273 = vld [vmem:[%s192 + $0x258] sm:$0xff]
      %v274 = vld [vmem:[%s192 + $0x260] sm:$0xff]
      %v275 = vld [vmem:[%s192 + $0x268] sm:$0xff]
      %v276 = vld [vmem:[%s192 + $0x270] sm:$0xff]
      %v277 = vld [vmem:[%s192 + $0x278] sm:$0xff]
      %v278 = vld [vmem:[%s192 + $0x280] sm:$0xff]
      %v279 = vld [vmem:[%s192 + $0x288] sm:$0xff]
      %v280 = vld [vmem:[%s192 + $0x290] sm:$0xff]
      %v281 = vld [vmem:[%s192 + $0x298] sm:$0xff]
      %v282 = vld [vmem:[%s192 + $0x2a0] sm:$0xff]
      %v283 = vld [vmem:[%s192 + $0x2a8] sm:$0xff]
      %v284 = vld [vmem:[%s192 + $0x2b0] sm:$0xff]
      %v285 = vld [vmem:[%s192 + $0x2b8] sm:$0xff]
      %v286 = vld [vmem:[%s192 + $0x2c0] sm:$0xff]
      %v287 = vld [vmem:[%s192 + $0x2c8] sm:$0xff]
      %v288 = vld [vmem:[%s192 + $0x2d0] sm:$0xff]
      %v289 = vld [vmem:[%s192 + $0x2d8] sm:$0xff]
      %v290 = vld [vmem:[%s192 + $0x2e0] sm:$0xff]
      %v291 = vld [vmem:[%s192 + $0x2e8] sm:$0xff]
      %v292 = vld [vmem:[%s192 + $0x2f0] sm:$0xff]
      %v293 = vld [vmem:[%s192 + $0x2f8] sm:$0xff]
      %v294 = vld [vmem:[%s192 + $0x300] sm:$0xff]
      %v295 = vld [vmem:[%s192 + $0x308] sm:$0xff]
      %v296 = vld [vmem:[%s192 + $0x310] sm:$0xff]
      %v297 = vld [vmem:[%s192 + $0x318] sm:$0xff]
      %v298 = vld [vmem:[%s192 + $0x320] sm:$0xff]
      %v299 = vld [vmem:[%s192 + $0x328] sm:$0xff]
      %v300 = vld [vmem:[%s192 + $0x330] sm:$0xff]
      %v301 = vld [vmem:[%s192 + $0x338] sm:$0xff]
      %v302 = vld [vmem:[%s192 + $0x340] sm:$0xff]
      %v303 = vld [vmem:[%s192 + $0x348] sm:$0xff]
      %v304 = vld [vmem:[%s192 + $0x350] sm:$0xff]
      %v305 = vld [vmem:[%s192 + $0x358] sm:$0xff]
      %v306 = vld [vmem:[%s192 + $0x360] sm:$0xff]
      %v307 = vld [vmem:[%s192 + $0x368] sm:$0xff]
      %v308 = vld [vmem:[%s192 + $0x370] sm:$0xff]
      %v309 = vld [vmem:[%s192 + $0x378] sm:$0xff]
      %v310 = vld [vmem:[%s192 + $0x380] sm:$0xff]
      %v311 = vld [vmem:[%s192 + $0x388] sm:$0xff]
      %v312 = vld [vmem:[%s192 + $0x390] sm:$0xff]
      %v313 = vld [vmem:[%s192 + $0x398] sm:$0xff]
      %v314 = vld [vmem:[%s192 + $0x3a0] sm:$0xff]
      %v315 = vld [vmem:[%s192 + $0x3a8] sm:$0xff]
      %v316 = vld [vmem:[%s192 + $0x3b0] sm:$0xff]
      %v317 = vld [vmem:[%s192 + $0x3b8] sm:$0xff]
      %v318 = vld [vmem:[%s192 + $0x3c0] sm:$0xff]
      %v319 = vld [vmem:[%s192 + $0x3c8] sm:$0xff]
      %v320 = vld [vmem:[%s192 + $0x3d0] sm:$0xff]
      %v321 = vld [vmem:[%s192 + $0x3d8] sm:$0xff]
      %v322 = vld [vmem:[%s192 + $0x3e0] sm:$0xff]
      %v323 = vld [vmem:[%s192 + $0x3e8] sm:$0xff]
      %v324 = vld [vmem:[%s192 + $0x3f0] sm:$0xff]
      %v325 = vld [vmem:[%s192 + $0x3f8] sm:$0xff]
      %v326 = vld [vmem:[%s192 + $0x400] sm:$0xff]
      %v327 = vld [vmem:[%s192 + $0x408] sm:$0xff]
      %v328 = vld [vmem:[%s192 + $0x410] sm:$0xff]
      %v329 = vld [vmem:[%s192 + $0x418] sm:$0xff]
      %v330 = vld [vmem:[%s192 + $0x420] sm:$0xff]
      %v331 = vld [vmem:[%s192 + $0x428] sm:$0xff]
      %v332 = vld [vmem:[%s192 + $0x430] sm:$0xff]
      %v333 = vld [vmem:[%s192 + $0x438] sm:$0xff]
      %v334 = vld [vmem:[%s192 + $0x440] sm:$0xff]
      %v335 = vld [vmem:[%s192 + $0x448] sm:$0xff]
      %v336 = vld [vmem:[%s192 + $0x450] sm:$0xff]
      %v337 = vld [vmem:[%s192 + $0x458] sm:$0xff]
      %v338 = vld [vmem:[%s192 + $0x460] sm:$0xff]
      %v339 = vld [vmem:[%s192 + $0x468] sm:$0xff]
      %v340 = vld [vmem:[%s192 + $0x470] sm:$0xff]
      %v341 = vld [vmem:[%s192 + $0x478] sm:$0xff]
      %v342 = vld [vmem:[%s192 + $0x480] sm:$0xff]
      %v343 = vld [vmem:[%s192 + $0x488] sm:$0xff]
      %v344 = vld [vmem:[%s192 + $0x490] sm:$0xff]
      %v345 = vld [vmem:[%s192 + $0x498] sm:$0xff]
      %v346 = vld [vmem:[%s192 + $0x4a0] sm:$0xff]
      %v347 = vld [vmem:[%s192 + $0x4a8] sm:$0xff]
      %v348 = vld [vmem:[%s192 + $0x4b0] sm:$0xff]
      %v349 = vld [vmem:[%s192 + $0x4b8] sm:$0xff]
      %v350 = vld [vmem:[%s192 + $0x4c0] sm:$0xff]
      %v351 = vld [vmem:[%s192 + $0x4c8] sm:$0xff]
      %v352 = vld [vmem:[%s192 + $0x4d0] sm:$0xff]
      %v353 = vld [vmem:[%s192 + $0x4d8] sm:$0xff]
      %v354 = vld [vmem:[%s192 + $0x4e0] sm:$0xff]
      %v355 = vld [vmem:[%s192 + $0x4e8] sm:$0xff]
      %v356 = vld [vmem:[%s192 + $0x4f0] sm:$0xff]
      %v357 = vld [vmem:[%s192 + $0x4f8] sm:$0xff]
      %v358 = vld [vmem:[%s192 + $0x500] sm:$0xff]
      %v359 = vld [vmem:[%s192 + $0x508] sm:$0xff]
      %v360 = vld [vmem:[%s192 + $0x510] sm:$0xff]
      %v361 = vld [vmem:[%s192 + $0x518] sm:$0xff]
      %v362 = vld [vmem:[%s192 + $0x520] sm:$0xff]
      %v363 = vld [vmem:[%s192 + $0x528] sm:$0xff]
      %v364 = vld [vmem:[%s192 + $0x530] sm:$0xff]
      %v365 = vld [vmem:[%s192 + $0x538] sm:$0xff]
      %v366 = vld [vmem:[%s192 + $0x540] sm:$0xff]
      %v367 = vld [vmem:[%s192 + $0x548] sm:$0xff]
      %v368 = vld [vmem:[%s192 + $0x550] sm:$0xff]
      %v369 = vld [vmem:[%s192 + $0x558] sm:$0xff]
      %v370 = vld [vmem:[%s192 + $0x560] sm:$0xff]
      %v371 = vld [vmem:[%s192 + $0x568] sm:$0xff]
      %v372 = vld [vmem:[%s192 + $0x570] sm:$0xff]
      %v373 = vld [vmem:[%s192 + $0x578] sm:$0xff]
      %v374 = vld [vmem:[%s192 + $0x580] sm:$0xff]
      %v375 = vld [vmem:[%s192 + $0x588] sm:$0xff]
      %v376 = vld [vmem:[%s192 + $0x590] sm:$0xff]
      %v377 = vld [vmem:[%s192 + $0x598] sm:$0xff]
      %v378 = vld [vmem:[%s192 + $0x5a0] sm:$0xff]
      %v379 = vld [vmem:[%s192 + $0x5a8] sm:$0xff]
      %v380 = vld [vmem:[%s192 + $0x5b0] sm:$0xff]
      %v381 = vld [vmem:[%s192 + $0x5b8] sm:$0xff]
      %v382 = vld [vmem:[%s192 + $0x5c0] sm:$0xff]
      %v383 = vld [vmem:[%s192 + $0x5c8] sm:$0xff]
      %v384 = vld [vmem:[%s192 + $0x5d0] sm:$0xff]
      %v385 = vld [vmem:[%s192 + $0x5d8] sm:$0xff]
      %v386 = vld [vmem:[%s192 + $0x5e0] sm:$0xff]
      %v387 = vld [vmem:[%s192 + $0x5e8] sm:$0xff]
      %v388 = vld [vmem:[%s192 + $0x5f0] sm:$0xff]
      %v389 = vld [vmem:[%s192 + $0x5f8] sm:$0xff]
      %v390 = vld [vmem:[%s192 + $0x600] sm:$0xff]
      %v391 = vld [vmem:[%s192 + $0x608] sm:$0xff]
      %v392 = vld [vmem:[%s192 + $0x610] sm:$0xff]
      %v393 = vld [vmem:[%s192 + $0x618] sm:$0xff]
      %v394 = vld [vmem:[%s192 + $0x620] sm:$0xff]
      %v395 = vld [vmem:[%s192 + $0x628] sm:$0xff]
      %v396 = vld [vmem:[%s192 + $0x630] sm:$0xff]
      %v397 = vld [vmem:[%s192 + $0x638] sm:$0xff]
      %v398 = vld [vmem:[%s192 + $0x640] sm:$0xff]
      %v399 = vld [vmem:[%s192 + $0x648] sm:$0xff]
      %v400 = vld [vmem:[%s192 + $0x650] sm:$0xff]
      %v401 = vld [vmem:[%s192 + $0x658] sm:$0xff]
      %v402 = vld [vmem:[%s192 + $0x660] sm:$0xff]
      %v403 = vld [vmem:[%s192 + $0x668] sm:$0xff]
      %v404 = vld [vmem:[%s192 + $0x670] sm:$0xff]
      %v405 = vld [vmem:[%s192 + $0x678] sm:$0xff]
      %v406 = vld [vmem:[%s192 + $0x680] sm:$0xff]
      %v407 = vld [vmem:[%s192 + $0x688] sm:$0xff]
      %v408 = vld [vmem:[%s192 + $0x690] sm:$0xff]
      %v409 = vld [vmem:[%s192 + $0x698] sm:$0xff]
      %v410 = vld [vmem:[%s192 + $0x6a0] sm:$0xff]
      %v411 = vld [vmem:[%s192 + $0x6a8] sm:$0xff]
      %v412 = vld [vmem:[%s192 + $0x6b0] sm:$0xff]
      %v413 = vld [vmem:[%s192 + $0x6b8] sm:$0xff]
      %v414 = vld [vmem:[%s192 + $0x6c0] sm:$0xff]
      %v415 = vld [vmem:[%s192 + $0x6c8] sm:$0xff]
      %v416 = vld [vmem:[%s192 + $0x6d0] sm:$0xff]
      %v417 = vld [vmem:[%s192 + $0x6d8] sm:$0xff]
      %v418 = vld [vmem:[%s192 + $0x6e0] sm:$0xff]
      %v419 = vld [vmem:[%s192 + $0x6e8] sm:$0xff]
      %v420 = vld [vmem:[%s192 + $0x6f0] sm:$0xff]
      %v421 = vld [vmem:[%s192 + $0x6f8] sm:$0xff]
      %v422 = vld [vmem:[%s192 + $0x700] sm:$0xff]
      %v423 = vld [vmem:[%s192 + $0x708] sm:$0xff]
      %v424 = vld [vmem:[%s192 + $0x710] sm:$0xff]
      %v425 = vld [vmem:[%s192 + $0x718] sm:$0xff]
      %v426 = vld [vmem:[%s192 + $0x720] sm:$0xff]
      %v427 = vld [vmem:[%s192 + $0x728] sm:$0xff]
      %v428 = vld [vmem:[%s192 + $0x730] sm:$0xff]
      %v429 = vld [vmem:[%s192 + $0x738] sm:$0xff]
      %v430 = vld [vmem:[%s192 + $0x740] sm:$0xff]
      %v431 = vld [vmem:[%s192 + $0x748] sm:$0xff]
      %v432 = vld [vmem:[%s192 + $0x750] sm:$0xff]
      %v433 = vld [vmem:[%s192 + $0x758] sm:$0xff]
      %v434 = vld [vmem:[%s192 + $0x760] sm:$0xff]
      %v435 = vld [vmem:[%s192 + $0x768] sm:$0xff]
      %v436 = vld [vmem:[%s192 + $0x770] sm:$0xff]
      %v437 = vld [vmem:[%s192 + $0x778] sm:$0xff]
      %v438 = vld [vmem:[%s192 + $0x780] sm:$0xff]
      %v439 = vld [vmem:[%s192 + $0x788] sm:$0xff]
      %v440 = vld [vmem:[%s192 + $0x790] sm:$0xff]
      %v441 = vld [vmem:[%s192 + $0x798] sm:$0xff]
      %v442 = vld [vmem:[%s192 + $0x7a0] sm:$0xff]
      %v443 = vld [vmem:[%s192 + $0x7a8] sm:$0xff]
      %v444 = vld [vmem:[%s192 + $0x7b0] sm:$0xff]
      %v445 = vld [vmem:[%s192 + $0x7b8] sm:$0xff]
      %v446 = vld [vmem:[%s192 + $0x7c0] sm:$0xff]
      %v447 = vld [vmem:[%s192 + $0x7c8] sm:$0xff]
      %v448 = vld [vmem:[%s192 + $0x7d0] sm:$0xff]
      %v449 = vld [vmem:[%s192 + $0x7d8] sm:$0xff]
      %v450 = vld [vmem:[%s192 + $0x7e0] sm:$0xff]
      %v451 = vld [vmem:[%s192 + $0x7e8] sm:$0xff]
      %v452 = vld [vmem:[%s192 + $0x7f0] sm:$0xff]
      %v453 = vld [vmem:[%s192 + $0x7f8] sm:$0xff]
      %v454 = vld [vmem:[%s1] sm:$0xff]
      %v455 = vld [vmem:[%s1 + $0x8] sm:$0xff]
      %v456 = vld [vmem:[%s1 + $0x10] sm:$0xff]
      %v457 = vld [vmem:[%s1 + $0x18] sm:$0xff]
      %458 = vmatpush.msra.mxu0 %v258
      %459 = vmatpush.msra.mxu0 %v254
      %460 = vmatpush.msra.mxu0 %v250
      %461 = vmatpush.msra.mxu0 %v246
      %462 = vmatpush.msra.mxu0 %v242
      %463 = vmatpush.msra.mxu0 %v238
      %464 = vmatpush.msra.mxu0 %v234
      %465 = vmatpush.msra.mxu0 %v230
      %466 = vmatpush.msra.mxu0 %v226
      %467 = vmatpush.msra.mxu0 %v222
      %468 = vmatpush.msra.mxu0 %v218
      %469 = vmatpush.msra.mxu0 %v214
      %470 = vmatpush.msra.mxu0 %v210
      %471 = vmatpush.msra.mxu0 %v206
      %472 = vmatpush.msra.mxu0 %v202
      %473 = vmatpush.msra.mxu0 %v198
      %474 = vmatmul.f32.gmra.mxu0 %v454
      %v475 = vpop.f32.mrf.mxu0
      %v476 = vadd.f32 0.0, %v475
      %477 = vdwg.mxu0
      %478 = vmatpush.msra.mxu0 %v322
      %479 = vmatpush.msra.mxu0 %v318
      %480 = vmatpush.msra.mxu0 %v314
      %481 = vmatpush.msra.mxu0 %v310
      %482 = vmatpush.msra.mxu0 %v306
      %483 = vmatpush.msra.mxu0 %v302
      %484 = vmatpush.msra.mxu0 %v298
      %485 = vmatpush.msra.mxu0 %v294
      %486 = vmatpush.msra.mxu0 %v290
      %487 = vmatpush.msra.mxu0 %v286
      %488 = vmatpush.msra.mxu0 %v282
      %489 = vmatpush.msra.mxu0 %v278
      %490 = vmatpush.msra.mxu0 %v274
      %491 = vmatpush.msra.mxu0 %v270
      %492 = vmatpush.msra.mxu0 %v266
      %493 = vmatpush.msra.mxu0 %v262
      %494 = vmatmul.f32.gmra.mxu0 %v455
      %v495 = vpop.f32.mrf.mxu0
      %v496 = vadd.f32 %v476, %v495
      %497 = vdwg.mxu0
      %498 = vmatpush.msra.mxu0 %v386
      %499 = vmatpush.msra.mxu0 %v382
      %500 = vmatpush.msra.mxu0 %v378
      %501 = vmatpush.msra.mxu0 %v374
      %502 = vmatpush.msra.mxu0 %v370
      %503 = vmatpush.msra.mxu0 %v366
      %504 = vmatpush.msra.mxu0 %v362
      %505 = vmatpush.msra.mxu0 %v358
      %506 = vmatpush.msra.mxu0 %v354
      %507 = vmatpush.msra.mxu0 %v350
      %508 = vmatpush.msra.mxu0 %v346
      %509 = vmatpush.msra.mxu0 %v342
      %510 = vmatpush.msra.mxu0 %v338
      %511 = vmatpush.msra.mxu0 %v334
      %512 = vmatpush.msra.mxu0 %v330
      %513 = vmatpush.msra.mxu0 %v326
      %514 = vmatmul.f32.gmra.mxu0 %v456
      %v515 = vpop.f32.mrf.mxu0
      %v516 = vadd.f32 %v496, %v515
      %517 = vdwg.mxu0
      %518 = vmatpush.msra.mxu0 %v450
      %519 = vmatpush.msra.mxu0 %v446
      %520 = vmatpush.msra.mxu0 %v442
      %521 = vmatpush.msra.mxu0 %v438
      %522 = vmatpush.msra.mxu0 %v434
      %523 = vmatpush.msra.mxu0 %v430
      %524 = vmatpush.msra.mxu0 %v426
      %525 = vmatpush.msra.mxu0 %v422
      %526 = vmatpush.msra.mxu0 %v418
      %527 = vmatpush.msra.mxu0 %v414
      %528 = vmatpush.msra.mxu0 %v410
      %529 = vmatpush.msra.mxu0 %v406
      %530 = vmatpush.msra.mxu0 %v402
      %531 = vmatpush.msra.mxu0 %v398
      %532 = vmatpush.msra.mxu0 %v394
      %533 = vmatpush.msra.mxu0 %v390
      %534 = vmatmul.f32.gmra.mxu0 %v457
      %v535 = vpop.f32.mrf.mxu0
      %v536 = vadd.f32 %v516, %v535
      %537 = vdwg.mxu0
      %538 = vmatpush.msra.mxu0 %v259
      %539 = vmatpush.msra.mxu0 %v255
      %540 = vmatpush.msra.mxu0 %v251
      %541 = vmatpush.msra.mxu0 %v247
      %542 = vmatpush.msra.mxu0 %v243
      %543 = vmatpush.msra.mxu0 %v239
      %544 = vmatpush.msra.mxu0 %v235
      %545 = vmatpush.msra.mxu0 %v231
      %546 = vmatpush.msra.mxu0 %v227
      %547 = vmatpush.msra.mxu0 %v223
      %548 = vmatpush.msra.mxu0 %v219
      %549 = vmatpush.msra.mxu0 %v215
      %550 = vmatpush.msra.mxu0 %v211
      %551 = vmatpush.msra.mxu0 %v207
      %552 = vmatpush.msra.mxu0 %v203
      %553 = vmatpush.msra.mxu0 %v199
      %554 = vmatmul.f32.gmra.mxu0 %v454
      %v555 = vpop.f32.mrf.mxu0
      %v556 = vadd.f32 0.0, %v555
      %557 = vdwg.mxu0
      %558 = vmatpush.msra.mxu0 %v323
      %559 = vmatpush.msra.mxu0 %v319
      %560 = vmatpush.msra.mxu0 %v315
      %561 = vmatpush.msra.mxu0 %v311
      %562 = vmatpush.msra.mxu0 %v307
      %563 = vmatpush.msra.mxu0 %v303
      %564 = vmatpush.msra.mxu0 %v299
      %565 = vmatpush.msra.mxu0 %v295
      %566 = vmatpush.msra.mxu0 %v291
      %567 = vmatpush.msra.mxu0 %v287
      %568 = vmatpush.msra.mxu0 %v283
      %569 = vmatpush.msra.mxu0 %v279
      %570 = vmatpush.msra.mxu0 %v275
      %571 = vmatpush.msra.mxu0 %v271
      %572 = vmatpush.msra.mxu0 %v267
      %573 = vmatpush.msra.mxu0 %v263
      %574 = vmatmul.f32.gmra.mxu0 %v455
      %v575 = vpop.f32.mrf.mxu0
      %v576 = vadd.f32 %v556, %v575
      %577 = vdwg.mxu0
      %578 = vmatpush.msra.mxu0 %v387
      %579 = vmatpush.msra.mxu0 %v383
      %580 = vmatpush.msra.mxu0 %v379
      %581 = vmatpush.msra.mxu0 %v375
      %582 = vmatpush.msra.mxu0 %v371
      %583 = vmatpush.msra.mxu0 %v367
      %584 = vmatpush.msra.mxu0 %v363
      %585 = vmatpush.msra.mxu0 %v359
      %586 = vmatpush.msra.mxu0 %v355
      %587 = vmatpush.msra.mxu0 %v351
      %588 = vmatpush.msra.mxu0 %v347
      %589 = vmatpush.msra.mxu0 %v343
      %590 = vmatpush.msra.mxu0 %v339
      %591 = vmatpush.msra.mxu0 %v335
      %592 = vmatpush.msra.mxu0 %v331
      %593 = vmatpush.msra.mxu0 %v327
      %594 = vmatmul.f32.gmra.mxu0 %v456
      %v595 = vpop.f32.mrf.mxu0
      %v596 = vadd.f32 %v576, %v595
      %597 = vdwg.mxu0
      %598 = vmatpush.msra.mxu0 %v451
      %599 = vmatpush.msra.mxu0 %v447
      %600 = vmatpush.msra.mxu0 %v443
      %601 = vmatpush.msra.mxu0 %v439
      %602 = vmatpush.msra.mxu0 %v435
      %603 = vmatpush.msra.mxu0 %v431
      %604 = vmatpush.msra.mxu0 %v427
      %605 = vmatpush.msra.mxu0 %v423
      %606 = vmatpush.msra.mxu0 %v419
      %607 = vmatpush.msra.mxu0 %v415
      %608 = vmatpush.msra.mxu0 %v411
      %609 = vmatpush.msra.mxu0 %v407
      %610 = vmatpush.msra.mxu0 %v403
      %611 = vmatpush.msra.mxu0 %v399
      %612 = vmatpush.msra.mxu0 %v395
      %613 = vmatpush.msra.mxu0 %v391
      %614 = vmatmul.f32.gmra.mxu0 %v457
      %v615 = vpop.f32.mrf.mxu0
      %v616 = vadd.f32 %v596, %v615
      %617 = vdwg.mxu0
      %618 = vmatpush.msra.mxu0 %v260
      %619 = vmatpush.msra.mxu0 %v256
      %620 = vmatpush.msra.mxu0 %v252
      %621 = vmatpush.msra.mxu0 %v248
      %622 = vmatpush.msra.mxu0 %v244
      %623 = vmatpush.msra.mxu0 %v240
      %624 = vmatpush.msra.mxu0 %v236
      %625 = vmatpush.msra.mxu0 %v232
      %626 = vmatpush.msra.mxu0 %v228
      %627 = vmatpush.msra.mxu0 %v224
      %628 = vmatpush.msra.mxu0 %v220
      %629 = vmatpush.msra.mxu0 %v216
      %630 = vmatpush.msra.mxu0 %v212
      %631 = vmatpush.msra.mxu0 %v208
      %632 = vmatpush.msra.mxu0 %v204
      %633 = vmatpush.msra.mxu0 %v200
      %634 = vmatmul.f32.gmra.mxu0 %v454
      %v635 = vpop.f32.mrf.mxu0
      %v636 = vadd.f32 0.0, %v635
      %637 = vdwg.mxu0
      %638 = vmatpush.msra.mxu0 %v324
      %639 = vmatpush.msra.mxu0 %v320
      %640 = vmatpush.msra.mxu0 %v316
      %641 = vmatpush.msra.mxu0 %v312
      %642 = vmatpush.msra.mxu0 %v308
      %643 = vmatpush.msra.mxu0 %v304
      %644 = vmatpush.msra.mxu0 %v300
      %645 = vmatpush.msra.mxu0 %v296
      %646 = vmatpush.msra.mxu0 %v292
      %647 = vmatpush.msra.mxu0 %v288
      %648 = vmatpush.msra.mxu0 %v284
      %649 = vmatpush.msra.mxu0 %v280
      %650 = vmatpush.msra.mxu0 %v276
      %651 = vmatpush.msra.mxu0 %v272
      %652 = vmatpush.msra.mxu0 %v268
      %653 = vmatpush.msra.mxu0 %v264
      %654 = vmatmul.f32.gmra.mxu0 %v455
      %v655 = vpop.f32.mrf.mxu0
      %v656 = vadd.f32 %v636, %v655
      %657 = vdwg.mxu0
      %658 = vmatpush.msra.mxu0 %v388
      %659 = vmatpush.msra.mxu0 %v384
      %660 = vmatpush.msra.mxu0 %v380
      %661 = vmatpush.msra.mxu0 %v376
      %662 = vmatpush.msra.mxu0 %v372
      %663 = vmatpush.msra.mxu0 %v368
      %664 = vmatpush.msra.mxu0 %v364
      %665 = vmatpush.msra.mxu0 %v360
      %666 = vmatpush.msra.mxu0 %v356
      %667 = vmatpush.msra.mxu0 %v352
      %668 = vmatpush.msra.mxu0 %v348
      %669 = vmatpush.msra.mxu0 %v344
      %670 = vmatpush.msra.mxu0 %v340
      %671 = vmatpush.msra.mxu0 %v336
      %672 = vmatpush.msra.mxu0 %v332
      %673 = vmatpush.msra.mxu0 %v328
      %674 = vmatmul.f32.gmra.mxu0 %v456
      %v675 = vpop.f32.mrf.mxu0
      %v676 = vadd.f32 %v656, %v675
      %677 = vdwg.mxu0
      %678 = vmatpush.msra.mxu0 %v452
      %679 = vmatpush.msra.mxu0 %v448
      %680 = vmatpush.msra.mxu0 %v444
      %681 = vmatpush.msra.mxu0 %v440
      %682 = vmatpush.msra.mxu0 %v436
      %683 = vmatpush.msra.mxu0 %v432
      %684 = vmatpush.msra.mxu0 %v428
      %685 = vmatpush.msra.mxu0 %v424
      %686 = vmatpush.msra.mxu0 %v420
      %687 = vmatpush.msra.mxu0 %v416
      %688 = vmatpush.msra.mxu0 %v412
      %689 = vmatpush.msra.mxu0 %v408
      %690 = vmatpush.msra.mxu0 %v404
      %691 = vmatpush.msra.mxu0 %v400
      %692 = vmatpush.msra.mxu0 %v396
      %693 = vmatpush.msra.mxu0 %v392
      %694 = vmatmul.f32.gmra.mxu0 %v457
      %v695 = vpop.f32.mrf.mxu0
      %v696 = vadd.f32 %v676, %v695
      %697 = vdwg.mxu0
      %698 = vmatpush.msra.mxu0 %v261
      %699 = vmatpush.msra.mxu0 %v257
      %700 = vmatpush.msra.mxu0 %v253
      %701 = vmatpush.msra.mxu0 %v249
      %702 = vmatpush.msra.mxu0 %v245
      %703 = vmatpush.msra.mxu0 %v241
      %704 = vmatpush.msra.mxu0 %v237
      %705 = vmatpush.msra.mxu0 %v233
      %706 = vmatpush.msra.mxu0 %v229
      %707 = vmatpush.msra.mxu0 %v225
      %708 = vmatpush.msra.mxu0 %v221
      %709 = vmatpush.msra.mxu0 %v217
      %710 = vmatpush.msra.mxu0 %v213
      %711 = vmatpush.msra.mxu0 %v209
      %712 = vmatpush.msra.mxu0 %v205
      %713 = vmatpush.msra.mxu0 %v201
      %714 = vmatmul.f32.gmra.mxu0 %v454
      %v715 = vpop.f32.mrf.mxu0
      %v716 = vadd.f32 0.0, %v715
      %717 = vdwg.mxu0
      %718 = vmatpush.msra.mxu0 %v325
      %719 = vmatpush.msra.mxu0 %v321
      %720 = vmatpush.msra.mxu0 %v317
      %721 = vmatpush.msra.mxu0 %v313
      %722 = vmatpush.msra.mxu0 %v309
      %723 = vmatpush.msra.mxu0 %v305
      %724 = vmatpush.msra.mxu0 %v301
      %725 = vmatpush.msra.mxu0 %v297
      %726 = vmatpush.msra.mxu0 %v293
      %727 = vmatpush.msra.mxu0 %v289
      %728 = vmatpush.msra.mxu0 %v285
      %729 = vmatpush.msra.mxu0 %v281
      %730 = vmatpush.msra.mxu0 %v277
      %731 = vmatpush.msra.mxu0 %v273
      %732 = vmatpush.msra.mxu0 %v269
      %733 = vmatpush.msra.mxu0 %v265
      %734 = vmatmul.f32.gmra.mxu0 %v455
      %v735 = vpop.f32.mrf.mxu0
      %v736 = vadd.f32 %v716, %v735
      %737 = vdwg.mxu0
      %738 = vmatpush.msra.mxu0 %v389
      %739 = vmatpush.msra.mxu0 %v385
      %740 = vmatpush.msra.mxu0 %v381
      %741 = vmatpush.msra.mxu0 %v377
      %742 = vmatpush.msra.mxu0 %v373
      %743 = vmatpush.msra.mxu0 %v369
      %744 = vmatpush.msra.mxu0 %v365
      %745 = vmatpush.msra.mxu0 %v361
      %746 = vmatpush.msra.mxu0 %v357
      %747 = vmatpush.msra.mxu0 %v353
      %748 = vmatpush.msra.mxu0 %v349
      %749 = vmatpush.msra.mxu0 %v345
      %750 = vmatpush.msra.mxu0 %v341
      %751 = vmatpush.msra.mxu0 %v337
      %752 = vmatpush.msra.mxu0 %v333
      %753 = vmatpush.msra.mxu0 %v329
      %754 = vmatmul.f32.gmra.mxu0 %v456
      %v755 = vpop.f32.mrf.mxu0
      %v756 = vadd.f32 %v736, %v755
      %757 = vdwg.mxu0
      %758 = vmatpush.msra.mxu0 %v453
      %759 = vmatpush.msra.mxu0 %v449
      %760 = vmatpush.msra.mxu0 %v445
      %761 = vmatpush.msra.mxu0 %v441
      %762 = vmatpush.msra.mxu0 %v437
      %763 = vmatpush.msra.mxu0 %v433
      %764 = vmatpush.msra.mxu0 %v429
      %765 = vmatpush.msra.mxu0 %v425
      %766 = vmatpush.msra.mxu0 %v421
      %767 = vmatpush.msra.mxu0 %v417
      %768 = vmatpush.msra.mxu0 %v413
      %769 = vmatpush.msra.mxu0 %v409
      %770 = vmatpush.msra.mxu0 %v405
      %771 = vmatpush.msra.mxu0 %v401
      %772 = vmatpush.msra.mxu0 %v397
      %773 = vmatpush.msra.mxu0 %v393
      %774 = vmatmul.f32.gmra.mxu0 %v457
      %v775 = vpop.f32.mrf.mxu0
      %v776 = vadd.f32 %v756, %v775
      %777 = vdwg.mxu0
      %v778 = vadd.f32 %v536, %v616
      %v779 = vadd.f32 %v778, %v696
      %v780 = vadd.f32 %v779, %v776
      %781 = vadd.xlane.f32.xlu0 %v780
      %v782 = vpop.xlane.xlu0 %781
      %v783 = vrcp.pop 512.0
      %v784 = vmul.f32 512.0, %v783
      %v785 = vsub.f32 1.0, %v784
      %v786 = vmul.f32 %v783, %v785
      %v787 = vadd.f32 %v783, %v786
      %vm788 = vweird.f32 %v783
      %v789 = vsel %vm788, %v783, %v787
      %v790 = vmul.f32 %v782, %v789
      %v791 = vsub.f32 %v536, %v790
      %v792 = vsub.f32 %v616, %v790
      %v793 = vsub.f32 %v696, %v790
      %v794 = vsub.f32 %v776, %v790
      %v795 = vmul.f32 %v791, %v791
      %v796 = vmul.f32 %v792, %v792
      %v797 = vmul.f32 %v793, %v793
      %v798 = vmul.f32 %v794, %v794
      %v799 = vadd.f32 %v795, %v796
      %v800 = vadd.f32 %v799, %v797
      %v801 = vadd.f32 %v800, %v798
      %802 = vadd.xlane.f32.xlu0 %v801
      %v803 = vpop.xlane.xlu0 %802
      %v804 = vmul.f32 %v803, %v789
      %v805 = vadd.f32 %v804, 1e-05
      %v806 = vrsqrt.pop %v805
      %v807 = vmul.f32 %v806, %v805
      %v808 = vmul.f32 %v807, %v806
      %v809 = vmul.f32 0.5, %v808
      %v810 = vsub.f32 1.5, %v809
      %v811 = vmul.f32 %v806, %v810
      %vm812 = vweird.f32 %v805
      %vm813 = vweird.f32 %v806
      %vm814 = vmor %vm812, %vm813
      %v815 = vsel %vm814, %v806, %v811
      %v816 = vmul.f32 %v791, %v815
      %v817 = vmul.f32 %v792, %v815
      %v818 = vmul.f32 %v793, %v815
      %v819 = vmul.f32 %v794, %v815
      %v820 = vld [vmem:[%s2] sm:$0xff]
      %822 = vset.pattern.permute.xlu0 0
      %823 = vperm.xlu0 %822, %v820
      %v824 = vpop.permute.xlu0 %823
      %v826 = vmul.f32 %v816, %v824
      %v827 = vmul.f32 %v817, %v824
      %v828 = vmul.f32 %v818, %v824
      %v829 = vmul.f32 %v819, %v824
      %v830 = vld [vmem:[%s3] sm:$0xff]
      %832 = vset.pattern.permute.xlu0 0
      %833 = vperm.xlu0 %832, %v830
      %v834 = vpop.permute.xlu0 %833
      %v836 = vadd.f32 %v826, %v834
      %v837 = vadd.f32 %v827, %v834
      %v838 = vadd.f32 %v828, %v834
      %v839 = vadd.f32 %v829, %v834
      %vm840 = vcmp.ge.f32.partialorder %v836, 0.0
      %vm841 = vcmp.ge.f32.partialorder %v837, 0.0
      %vm842 = vcmp.ge.f32.partialorder %v838, 0.0
      %vm843 = vcmp.ge.f32.partialorder %v839, 0.0
      %v844 = vmul.f32 %v836, 0.01
      %v845 = vmul.f32 %v837, 0.01
      %v846 = vmul.f32 %v838, 0.01
      %v847 = vmul.f32 %v839, 0.01
      %v848 = vsel %vm840, %v836, %v844
      %v849 = vsel %vm841, %v837, %v845
      %v850 = vsel %vm842, %v838, %v846
      %v851 = vsel %vm843, %v839, %v847
      %852 = vst [vmem:[%s197] sm:$0xff] %v848
      %853 = vst [vmem:[%s197 + $0x8] sm:$0xff] %v849
      %854 = vst [vmem:[%s197 + $0x10] sm:$0xff] %v850
      %855 = vst [vmem:[%s197 + $0x18] sm:$0xff] %v851
      %p856 = scmp.lt.s32.totalorder %s15, 1
      %s857 = scalar_select %p856, %s15, 1
      %s858 = smul.addr %s857, 4
      %s859 = smul.addr %s858, 8
      %s860 = scalar_lea.vmem %s4, %s859
      // Predicated region
      $region37: #{_lambda_.14} parent=35 // pred_check
        %p861 = pneg %p122
      $region38: #{_lambda_.14} parent=35 // pred_check_branch
        %863 = sbr.rel (%p861) target = $region40
      $region39: #{_lambda_.14} parent=35 // pred_region
        _
      $region40: #{_lambda_.14} parent=35 // pred_fallthru
        _
    $region36: #{_lambda_.14} parent=5 // pred_fallthru
      _
    %p864 = scmp.le.s32.totalorder 2, %s10
    // Predicated region
    $region41: #{_lambda_.14} parent=5 // pred_check
      %p865 = pneg %p864
    $region42: #{_lambda_.14} parent=5 // pred_check_branch
      %867 = sbr.rel (%p865) target = $region44
    $region43: #{_lambda_.14} parent=5 // pred_region
      %s868 = ssub.s32 %s10, 2
      // Predicated region
      $region45: #{_lambda_.14} parent=43 // pred_check
        %p869 = pneg %p128
      $region46: #{_lambda_.14} parent=43 // pred_check_branch
        %871 = sbr.rel (%p869) target = $region48
      $region47: #{_lambda_.14} parent=43 // pred_region
        %p872 = scmp.lt.s32.totalorder %s16, 1
        %s873 = scalar_select %p872, %s16, 1
        %s874 = smul.addr %s873, 4
        %s875 = smul.addr %s874, 8
        %s876 = scalar_lea.vmem %s4, %s875
      $region48: #{_lambda_.14} parent=43 // pred_fallthru
        _
    $region44: #{_lambda_.14} parent=5 // pred_fallthru
      _
  $region6: #{_lambda_.14} parent=0 // loop_footer
    %s14 = sadd.s32 1, %s10
  $region7: #{_lambda_.14} parent=0 // loop_footer_branch
    %9 = sbr.rel target = $region3
  $region8: #{_lambda_.14} parent=0 // loop_exit
    _

// kernel: _lambda_.15
$region0: #{_lambda_.15}
  #allocation0 [shape = 'u32[]', space=smem, size = 0x4, offset = 0x4, fixed_abs, tag = 'smem constant byte address 0x4 - core index']
  #allocation1 [shape = 'u32[72,128]{1,0:T(1,128)}', space=vmem, size = 0x9000, scoped, tag = 'internal scratch']
  %s0 = inlined_call_operand.vmem [shape: f32[2,768,512], index: 0, kind: input, shape index: {}]
  %s1 = inlined_call_operand.vmem [shape: f32[8,768], index: 1, kind: input, shape index: {}]
  %s2 = inlined_call_operand.vmem [shape: f32[8,1], index: 2, kind: input, shape index: {}]
  %s3 = inlined_call_operand.vmem [shape: f32[8,1], index: 3, kind: input, shape index: {}]
  %s4 = inlined_call_operand.vmem [shape: f32[2,8,512], index: 4, kind: output, shape index: {}]
  %s5 = sld [smem:[#allocation0]]
  $region49: #{_lambda_.15} parent=0
    _
  %s7 = ssub.s32 1, %s5
  %s8 = scalar_select 0, %s7, %s5
  loop: start=0, step=1, limit=4
  $region2: #{_lambda_.15} parent=0 // loop_pre_header
    _
  $region3: #{_lambda_.15} parent=0 // loop_header
    %s10 = sphi 0, %s14
    %p11 = scmp.ge.s32.totalorder %s10, 4
    %s20 = sphi 0, %s22
    %s23 = sphi 0, %s20
    %s24 = sphi 0, %s23
    %s40 = sphi 0, %s24
    %s44 = sphi 0, %s44
    %s46 = sphi 0, %s44
    %s47 = sphi 0, %s46
    %s61 = sphi 0, %s47
    %s65 = sphi 0, %s65
    %s67 = sphi 0, %s65
    %s68 = sphi 0, %s67
    %s82 = sphi 0, %s68
    %s86 = sphi 0, %s86
    %s88 = sphi 0, %s86
    %s89 = sphi 0, %s88
    %s103 = sphi 0, %s89
    %s109 = sphi 0, %s111
    %s112 = sphi 0, %s109
    %s113 = sphi 0, %s112
    %s129 = sphi 0, %s113
  $region4: #{_lambda_.15} parent=0 // loop_header_branch
    %13 = sbr.rel (%p11) target = $region8
  $region5: #{_lambda_.15} parent=0 // loop_body
    %s15 = ssub.s32 %s10, 1
    %s16 = ssub.s32 %s10, 2
    %s17 = sadd.s32 %s10, 1
    %s18 = ssub.s32 %s10, %s17
    %p19 = scmp.eq.s32.totalorder %s18, 0
    %s21 = sadd.s32 %s20, 1
    %s22 = scalar_select %p19, %s20, %s21
    %p25 = pneg %p19
    %p26 = scmp.eq.s32.totalorder %s10, 1
    %p27 = por %p25, %p26
    %p28 = scmp.ne.s32.totalorder %s20, %s23
    %p29 = scmp.eq.s32.totalorder %s10, 0
    %p30 = por %p28, %p29
    %p31 = scmp.ne.s32.totalorder %s20, %s23
    %p32 = scmp.eq.s32.totalorder %s15, 1
    %p33 = por %p31, %p32
    %p34 = scmp.ne.s32.totalorder %s23, %s24
    %p35 = scmp.eq.s32.totalorder %s15, 0
    %p36 = por %p34, %p35
    %p37 = scmp.ne.s32.totalorder %s23, %s24
    %p38 = scmp.eq.s32.totalorder %s16, 1
    %p39 = por %p37, %p38
    %p41 = scmp.ne.s32.totalorder %s24, %s40
    %p42 = scmp.eq.s32.totalorder %s16, 0
    %p43 = por %p41, %p42
    %s45 = sadd.s32 %s44, 1
    %p48 = scmp.eq.s32.totalorder %s10, 1
    %p49 = scmp.ne.s32.totalorder %s44, %s46
    %p50 = scmp.eq.s32.totalorder %s10, 0
    %p51 = por %p49, %p50
    %p52 = scmp.ne.s32.totalorder %s44, %s46
    %p53 = scmp.eq.s32.totalorder %s15, 1
    %p54 = por %p52, %p53
    %p55 = scmp.ne.s32.totalorder %s46, %s47
    %p56 = scmp.eq.s32.totalorder %s15, 0
    %p57 = por %p55, %p56
    %p58 = scmp.ne.s32.totalorder %s46, %s47
    %p59 = scmp.eq.s32.totalorder %s16, 1
    %p60 = por %p58, %p59
    %p62 = scmp.ne.s32.totalorder %s47, %s61
    %p63 = scmp.eq.s32.totalorder %s16, 0
    %p64 = por %p62, %p63
    %s66 = sadd.s32 %s65, 1
    %p69 = scmp.eq.s32.totalorder %s10, 1
    %p70 = scmp.ne.s32.totalorder %s65, %s67
    %p71 = scmp.eq.s32.totalorder %s10, 0
    %p72 = por %p70, %p71
    %p73 = scmp.ne.s32.totalorder %s65, %s67
    %p74 = scmp.eq.s32.totalorder %s15, 1
    %p75 = por %p73, %p74
    %p76 = scmp.ne.s32.totalorder %s67, %s68
    %p77 = scmp.eq.s32.totalorder %s15, 0
    %p78 = por %p76, %p77
    %p79 = scmp.ne.s32.totalorder %s67, %s68
    %p80 = scmp.eq.s32.totalorder %s16, 1
    %p81 = por %p79, %p80
    %p83 = scmp.ne.s32.totalorder %s68, %s82
    %p84 = scmp.eq.s32.totalorder %s16, 0
    %p85 = por %p83, %p84
    %s87 = sadd.s32 %s86, 1
    %p90 = scmp.eq.s32.totalorder %s10, 1
    %p91 = scmp.ne.s32.totalorder %s86, %s88
    %p92 = scmp.eq.s32.totalorder %s10, 0
    %p93 = por %p91, %p92
    %p94 = scmp.ne.s32.totalorder %s86, %s88
    %p95 = scmp.eq.s32.totalorder %s15, 1
    %p96 = por %p94, %p95
    %p97 = scmp.ne.s32.totalorder %s88, %s89
    %p98 = scmp.eq.s32.totalorder %s15, 0
    %p99 = por %p97, %p98
    %p100 = scmp.ne.s32.totalorder %s88, %s89
    %p101 = scmp.eq.s32.totalorder %s16, 1
    %p102 = por %p100, %p101
    %p104 = scmp.ne.s32.totalorder %s89, %s103
    %p105 = scmp.eq.s32.totalorder %s16, 0
    %p106 = por %p104, %p105
    %s107 = ssub.s32 %s10, %s17
    %p108 = scmp.eq.s32.totalorder %s107, 0
    %s110 = sadd.s32 %s109, 1
    %s111 = scalar_select %p108, %s109, %s110
    %p114 = pneg %p108
    %p115 = scmp.eq.s32.totalorder %s10, 1
    %p116 = por %p114, %p115
    %p117 = scmp.ne.s32.totalorder %s109, %s112
    %p118 = scmp.eq.s32.totalorder %s10, 0
    %p119 = por %p117, %p118
    %p120 = scmp.ne.s32.totalorder %s109, %s112
    %p121 = scmp.eq.s32.totalorder %s15, 1
    %p122 = por %p120, %p121
    %p123 = scmp.ne.s32.totalorder %s112, %s113
    %p124 = scmp.eq.s32.totalorder %s15, 0
    %p125 = por %p123, %p124
    %p126 = scmp.ne.s32.totalorder %s112, %s113
    %p127 = scmp.eq.s32.totalorder %s16, 1
    %p128 = por %p126, %p127
    %p130 = scmp.ne.s32.totalorder %s113, %s129
    %p131 = scmp.eq.s32.totalorder %s16, 0
    %p132 = por %p130, %p131
    %p133 = scmp.le.s32.totalorder 1, %s10
    %p134 = scmp.lt.s32.totalorder %s10, 3
    %p135 = pnand %p133, %p134
    %p136 = pneg %p135
    // Predicated region
    $region9: #{_lambda_.15} parent=5 // pred_check
      _
    $region10: #{_lambda_.15} parent=5 // pred_check_branch
      %138 = sbr.rel (%p135) target = $region12
    $region11: #{_lambda_.15} parent=5 // pred_region
      %s139 = ssub.s32 %s10, 1
      // Predicated region
      $region13: #{_lambda_.15} parent=11 // pred_check
        %p140 = pneg %p57
      $region14: #{_lambda_.15} parent=11 // pred_check_branch
        %142 = sbr.rel (%p140) target = $region16
      $region15: #{_lambda_.15} parent=11 // pred_region
        _
      $region16: #{_lambda_.15} parent=11 // pred_fallthru
        _
      // Predicated region
      $region17: #{_lambda_.15} parent=11 // pred_check
        %p143 = pneg %p78
      $region18: #{_lambda_.15} parent=11 // pred_check_branch
        %145 = sbr.rel (%p143) target = $region20
      $region19: #{_lambda_.15} parent=11 // pred_region
        _
      $region20: #{_lambda_.15} parent=11 // pred_fallthru
        _
      // Predicated region
      $region21: #{_lambda_.15} parent=11 // pred_check
        %p146 = pneg %p99
      $region22: #{_lambda_.15} parent=11 // pred_check_branch
        %148 = sbr.rel (%p146) target = $region24
      $region23: #{_lambda_.15} parent=11 // pred_region
        _
      $region24: #{_lambda_.15} parent=11 // pred_fallthru
        _
    $region12: #{_lambda_.15} parent=5 // pred_fallthru
      _
    %p149 = scmp.lt.s32.totalorder %s10, 2
    // Predicated region
    $region25: #{_lambda_.15} parent=5 // pred_check
      %p150 = pneg %p149
    $region26: #{_lambda_.15} parent=5 // pred_check_branch
      %152 = sbr.rel (%p150) target = $region28
    $region27: #{_lambda_.15} parent=5 // pred_region
      // Predicated region
      $region29: #{_lambda_.15} parent=27 // pred_check
        %p153 = pneg %p30
      $region30: #{_lambda_.15} parent=27 // pred_check_branch
        %155 = sbr.rel (%p153) target = $region32
      $region31: #{_lambda_.15} parent=27 // pred_region
        %p156 = scmp.lt.s32.totalorder %s10, 1
        %s157 = scalar_select %p156, %s10, 1
        %s158 = smul.addr %s157, 384
        %s159 = smul.addr %s158, 8
        %s160 = scalar_lea.vmem %s0, %s159
      $region32: #{_lambda_.15} parent=27 // pred_fallthru
        _
    $region28: #{_lambda_.15} parent=5 // pred_fallthru
      _
    %p161 = scmp.le.s32.totalorder 1, %s10
    %p162 = scmp.lt.s32.totalorder %s10, 3
    %p163 = pnand %p161, %p162
    %p164 = pneg %p163
    // Predicated region
    $region33: #{_lambda_.15} parent=5 // pred_check
      _
    $region34: #{_lambda_.15} parent=5 // pred_check_branch
      %166 = sbr.rel (%p163) target = $region36
    $region35: #{_lambda_.15} parent=5 // pred_region
      %s167 = ssub.s32 %s10, 1
      %p168 = scmp.lt.s32.totalorder %s15, 1
      %s169 = scalar_select %p168, %s15, 1
      %s170 = smul.addr %s169, 384
      %s171 = smul.addr %s170, 8
      %s172 = scalar_lea.vmem %s0, %s171
      %p173 = pneg %p36
      %p174 = pneg %p33
      %p175 = pneg %p57
      %p176 = pneg %p54
      %p177 = pneg %p78
      %p178 = pneg %p75
      %p179 = pneg %p99
      %p180 = pneg %p96
      %p181 = pneg %p125
      %p182 = pneg %p122
      %p183 = scmp.lt.s32.totalorder %s15, 1
      %s184 = scalar_select %p183, %s15, 1
      %s185 = smul.addr %s184, 4
      %s186 = smul.addr %s185, 8
      %s187 = scalar_lea.vmem %s4, %s186
      %p188 = scmp.lt.s32.totalorder %s15, 1
      %s189 = scalar_select %p188, %s15, 1
      %s190 = smul.addr %s189, 384
      %s191 = smul.addr %s190, 8
      %s192 = scalar_lea.vmem %s0, %s191
      %p193 = scmp.lt.s32.totalorder %s15, 1
      %s194 = scalar_select %p193, %s15, 1
      %s195 = smul.addr %s194, 4
      %s196 = smul.addr %s195, 8
      %s197 = scalar_lea.vmem %s4, %s196
      %v198 = vld [vmem:[%s192] sm:$0xff]
      %v199 = vld [vmem:[%s192 + $0x8] sm:$0xff]
      %v200 = vld [vmem:[%s192 + $0x10] sm:$0xff]
      %v201 = vld [vmem:[%s192 + $0x18] sm:$0xff]
      %v202 = vld [vmem:[%s192 + $0x20] sm:$0xff]
      %v203 = vld [vmem:[%s192 + $0x28] sm:$0xff]
      %v204 = vld [vmem:[%s192 + $0x30] sm:$0xff]
      %v205 = vld [vmem:[%s192 + $0x38] sm:$0xff]
      %v206 = vld [vmem:[%s192 + $0x40] sm:$0xff]
      %v207 = vld [vmem:[%s192 + $0x48] sm:$0xff]
      %v208 = vld [vmem:[%s192 + $0x50] sm:$0xff]
      %v209 = vld [vmem:[%s192 + $0x58] sm:$0xff]
      %v210 = vld [vmem:[%s192 + $0x60] sm:$0xff]
      %v211 = vld [vmem:[%s192 + $0x68] sm:$0xff]
      %v212 = vld [vmem:[%s192 + $0x70] sm:$0xff]
      %v213 = vld [vmem:[%s192 + $0x78] sm:$0xff]
      %v214 = vld [vmem:[%s192 + $0x80] sm:$0xff]
      %v215 = vld [vmem:[%s192 + $0x88] sm:$0xff]
      %v216 = vld [vmem:[%s192 + $0x90] sm:$0xff]
      %v217 = vld [vmem:[%s192 + $0x98] sm:$0xff]
      %v218 = vld [vmem:[%s192 + $0xa0] sm:$0xff]
      %v219 = vld [vmem:[%s192 + $0xa8] sm:$0xff]
      %v220 = vld [vmem:[%s192 + $0xb0] sm:$0xff]
      %v221 = vld [vmem:[%s192 + $0xb8] sm:$0xff]
      %v222 = vld [vmem:[%s192 + $0xc0] sm:$0xff]
      %v223 = vld [vmem:[%s192 + $0xc8] sm:$0xff]
      %v224 = vld [vmem:[%s192 + $0xd0] sm:$0xff]
      %v225 = vld [vmem:[%s192 + $0xd8] sm:$0xff]
      %v226 = vld [vmem:[%s192 + $0xe0] sm:$0xff]
      %v227 = vld [vmem:[%s192 + $0xe8] sm:$0xff]
      %v228 = vld [vmem:[%s192 + $0xf0] sm:$0xff]
      %v229 = vld [vmem:[%s192 + $0xf8] sm:$0xff]
      %v230 = vld [vmem:[%s192 + $0x100] sm:$0xff]
      %v231 = vld [vmem:[%s192 + $0x108] sm:$0xff]
      %v232 = vld [vmem:[%s192 + $0x110] sm:$0xff]
      %v233 = vld [vmem:[%s192 + $0x118] sm:$0xff]
      %v234 = vld [vmem:[%s192 + $0x120] sm:$0xff]
      %v235 = vld [vmem:[%s192 + $0x128] sm:$0xff]
      %v236 = vld [vmem:[%s192 + $0x130] sm:$0xff]
      %v237 = vld [vmem:[%s192 + $0x138] sm:$0xff]
      %v238 = vld [vmem:[%s192 + $0x140] sm:$0xff]
      %v239 = vld [vmem:[%s192 + $0x148] sm:$0xff]
      %v240 = vld [vmem:[%s192 + $0x150] sm:$0xff]
      %v241 = vld [vmem:[%s192 + $0x158] sm:$0xff]
      %v242 = vld [vmem:[%s192 + $0x160] sm:$0xff]
      %v243 = vld [vmem:[%s192 + $0x168] sm:$0xff]
      %v244 = vld [vmem:[%s192 + $0x170] sm:$0xff]
      %v245 = vld [vmem:[%s192 + $0x178] sm:$0xff]
      %v246 = vld [vmem:[%s192 + $0x180] sm:$0xff]
      %v247 = vld [vmem:[%s192 + $0x188] sm:$0xff]
      %v248 = vld [vmem:[%s192 + $0x190] sm:$0xff]
      %v249 = vld [vmem:[%s192 + $0x198] sm:$0xff]
      %v250 = vld [vmem:[%s192 + $0x1a0] sm:$0xff]
      %v251 = vld [vmem:[%s192 + $0x1a8] sm:$0xff]
      %v252 = vld [vmem:[%s192 + $0x1b0] sm:$0xff]
      %v253 = vld [vmem:[%s192 + $0x1b8] sm:$0xff]
      %v254 = vld [vmem:[%s192 + $0x1c0] sm:$0xff]
      %v255 = vld [vmem:[%s192 + $0x1c8] sm:$0xff]
      %v256 = vld [vmem:[%s192 + $0x1d0] sm:$0xff]
      %v257 = vld [vmem:[%s192 + $0x1d8] sm:$0xff]
      %v258 = vld [vmem:[%s192 + $0x1e0] sm:$0xff]
      %v259 = vld [vmem:[%s192 + $0x1e8] sm:$0xff]
      %v260 = vld [vmem:[%s192 + $0x1f0] sm:$0xff]
      %v261 = vld [vmem:[%s192 + $0x1f8] sm:$0xff]
      %v262 = vld [vmem:[%s192 + $0x200] sm:$0xff]
      %v263 = vld [vmem:[%s192 + $0x208] sm:$0xff]
      %v264 = vld [vmem:[%s192 + $0x210] sm:$0xff]
      %v265 = vld [vmem:[%s192 + $0x218] sm:$0xff]
      %v266 = vld [vmem:[%s192 + $0x220] sm:$0xff]
      %v267 = vld [vmem:[%s192 + $0x228] sm:$0xff]
      %v268 = vld [vmem:[%s192 + $0x230] sm:$0xff]
      %v269 = vld [vmem:[%s192 + $0x238] sm:$0xff]
      %v270 = vld [vmem:[%s192 + $0x240] sm:$0xff]
      %v271 = vld [vmem:[%s192 + $0x248] sm:$0xff]
      %v272 = vld [vmem:[%s192 + $0x250] sm:$0xff]
      %v273 = vld [vmem:[%s192 + $0x258] sm:$0xff]
      %v274 = vld [vmem:[%s192 + $0x260] sm:$0xff]
      %v275 = vld [vmem:[%s192 + $0x268] sm:$0xff]
      %v276 = vld [vmem:[%s192 + $0x270] sm:$0xff]
      %v277 = vld [vmem:[%s192 + $0x278] sm:$0xff]
      %v278 = vld [vmem:[%s192 + $0x280] sm:$0xff]
      %v279 = vld [vmem:[%s192 + $0x288] sm:$0xff]
      %v280 = vld [vmem:[%s192 + $0x290] sm:$0xff]
      %v281 = vld [vmem:[%s192 + $0x298] sm:$0xff]
      %v282 = vld [vmem:[%s192 + $0x2a0] sm:$0xff]
      %v283 = vld [vmem:[%s192 + $0x2a8] sm:$0xff]
      %v284 = vld [vmem:[%s192 + $0x2b0] sm:$0xff]
      %v285 = vld [vmem:[%s192 + $0x2b8] sm:$0xff]
      %v286 = vld [vmem:[%s192 + $0x2c0] sm:$0xff]
      %v287 = vld [vmem:[%s192 + $0x2c8] sm:$0xff]
      %v288 = vld [vmem:[%s192 + $0x2d0] sm:$0xff]
      %v289 = vld [vmem:[%s192 + $0x2d8] sm:$0xff]
      %v290 = vld [vmem:[%s192 + $0x2e0] sm:$0xff]
      %v291 = vld [vmem:[%s192 + $0x2e8] sm:$0xff]
      %v292 = vld [vmem:[%s192 + $0x2f0] sm:$0xff]
      %v293 = vld [vmem:[%s192 + $0x2f8] sm:$0xff]
      %v294 = vld [vmem:[%s192 + $0x300] sm:$0xff]
      %v295 = vld [vmem:[%s192 + $0x308] sm:$0xff]
      %v296 = vld [vmem:[%s192 + $0x310] sm:$0xff]
      %v297 = vld [vmem:[%s192 + $0x318] sm:$0xff]
      %v298 = vld [vmem:[%s192 + $0x320] sm:$0xff]
      %v299 = vld [vmem:[%s192 + $0x328] sm:$0xff]
      %v300 = vld [vmem:[%s192 + $0x330] sm:$0xff]
      %v301 = vld [vmem:[%s192 + $0x338] sm:$0xff]
      %v302 = vld [vmem:[%s192 + $0x340] sm:$0xff]
      %v303 = vld [vmem:[%s192 + $0x348] sm:$0xff]
      %v304 = vld [vmem:[%s192 + $0x350] sm:$0xff]
      %v305 = vld [vmem:[%s192 + $0x358] sm:$0xff]
      %v306 = vld [vmem:[%s192 + $0x360] sm:$0xff]
      %v307 = vld [vmem:[%s192 + $0x368] sm:$0xff]
      %v308 = vld [vmem:[%s192 + $0x370] sm:$0xff]
      %v309 = vld [vmem:[%s192 + $0x378] sm:$0xff]
      %v310 = vld [vmem:[%s192 + $0x380] sm:$0xff]
      %v311 = vld [vmem:[%s192 + $0x388] sm:$0xff]
      %v312 = vld [vmem:[%s192 + $0x390] sm:$0xff]
      %v313 = vld [vmem:[%s192 + $0x398] sm:$0xff]
      %v314 = vld [vmem:[%s192 + $0x3a0] sm:$0xff]
      %v315 = vld [vmem:[%s192 + $0x3a8] sm:$0xff]
      %v316 = vld [vmem:[%s192 + $0x3b0] sm:$0xff]
      %v317 = vld [vmem:[%s192 + $0x3b8] sm:$0xff]
      %v318 = vld [vmem:[%s192 + $0x3c0] sm:$0xff]
      %v319 = vld [vmem:[%s192 + $0x3c8] sm:$0xff]
      %v320 = vld [vmem:[%s192 + $0x3d0] sm:$0xff]
      %v321 = vld [vmem:[%s192 + $0x3d8] sm:$0xff]
      %v322 = vld [vmem:[%s192 + $0x3e0] sm:$0xff]
      %v323 = vld [vmem:[%s192 + $0x3e8] sm:$0xff]
      %v324 = vld [vmem:[%s192 + $0x3f0] sm:$0xff]
      %v325 = vld [vmem:[%s192 + $0x3f8] sm:$0xff]
      %v326 = vld [vmem:[%s192 + $0x400] sm:$0xff]
      %v327 = vld [vmem:[%s192 + $0x408] sm:$0xff]
      %v328 = vld [vmem:[%s192 + $0x410] sm:$0xff]
      %v329 = vld [vmem:[%s192 + $0x418] sm:$0xff]
      %v330 = vld [vmem:[%s192 + $0x420] sm:$0xff]
      %v331 = vld [vmem:[%s192 + $0x428] sm:$0xff]
      %v332 = vld [vmem:[%s192 + $0x430] sm:$0xff]
      %v333 = vld [vmem:[%s192 + $0x438] sm:$0xff]
      %v334 = vld [vmem:[%s192 + $0x440] sm:$0xff]
      %v335 = vld [vmem:[%s192 + $0x448] sm:$0xff]
      %v336 = vld [vmem:[%s192 + $0x450] sm:$0xff]
      %v337 = vld [vmem:[%s192 + $0x458] sm:$0xff]
      %v338 = vld [vmem:[%s192 + $0x460] sm:$0xff]
      %v339 = vld [vmem:[%s192 + $0x468] sm:$0xff]
      %v340 = vld [vmem:[%s192 + $0x470] sm:$0xff]
      %v341 = vld [vmem:[%s192 + $0x478] sm:$0xff]
      %v342 = vld [vmem:[%s192 + $0x480] sm:$0xff]
      %v343 = vld [vmem:[%s192 + $0x488] sm:$0xff]
      %v344 = vld [vmem:[%s192 + $0x490] sm:$0xff]
      %v345 = vld [vmem:[%s192 + $0x498] sm:$0xff]
      %v346 = vld [vmem:[%s192 + $0x4a0] sm:$0xff]
      %v347 = vld [vmem:[%s192 + $0x4a8] sm:$0xff]
      %v348 = vld [vmem:[%s192 + $0x4b0] sm:$0xff]
      %v349 = vld [vmem:[%s192 + $0x4b8] sm:$0xff]
      %v350 = vld [vmem:[%s192 + $0x4c0] sm:$0xff]
      %v351 = vld [vmem:[%s192 + $0x4c8] sm:$0xff]
      %v352 = vld [vmem:[%s192 + $0x4d0] sm:$0xff]
      %v353 = vld [vmem:[%s192 + $0x4d8] sm:$0xff]
      %v354 = vld [vmem:[%s192 + $0x4e0] sm:$0xff]
      %v355 = vld [vmem:[%s192 + $0x4e8] sm:$0xff]
      %v356 = vld [vmem:[%s192 + $0x4f0] sm:$0xff]
      %v357 = vld [vmem:[%s192 + $0x4f8] sm:$0xff]
      %v358 = vld [vmem:[%s192 + $0x500] sm:$0xff]
      %v359 = vld [vmem:[%s192 + $0x508] sm:$0xff]
      %v360 = vld [vmem:[%s192 + $0x510] sm:$0xff]
      %v361 = vld [vmem:[%s192 + $0x518] sm:$0xff]
      %v362 = vld [vmem:[%s192 + $0x520] sm:$0xff]
      %v363 = vld [vmem:[%s192 + $0x528] sm:$0xff]
      %v364 = vld [vmem:[%s192 + $0x530] sm:$0xff]
      %v365 = vld [vmem:[%s192 + $0x538] sm:$0xff]
      %v366 = vld [vmem:[%s192 + $0x540] sm:$0xff]
      %v367 = vld [vmem:[%s192 + $0x548] sm:$0xff]
      %v368 = vld [vmem:[%s192 + $0x550] sm:$0xff]
      %v369 = vld [vmem:[%s192 + $0x558] sm:$0xff]
      %v370 = vld [vmem:[%s192 + $0x560] sm:$0xff]
      %v371 = vld [vmem:[%s192 + $0x568] sm:$0xff]
      %v372 = vld [vmem:[%s192 + $0x570] sm:$0xff]
      %v373 = vld [vmem:[%s192 + $0x578] sm:$0xff]
      %v374 = vld [vmem:[%s192 + $0x580] sm:$0xff]
      %v375 = vld [vmem:[%s192 + $0x588] sm:$0xff]
      %v376 = vld [vmem:[%s192 + $0x590] sm:$0xff]
      %v377 = vld [vmem:[%s192 + $0x598] sm:$0xff]
      %v378 = vld [vmem:[%s192 + $0x5a0] sm:$0xff]
      %v379 = vld [vmem:[%s192 + $0x5a8] sm:$0xff]
      %v380 = vld [vmem:[%s192 + $0x5b0] sm:$0xff]
      %v381 = vld [vmem:[%s192 + $0x5b8] sm:$0xff]
      %v382 = vld [vmem:[%s192 + $0x5c0] sm:$0xff]
      %v383 = vld [vmem:[%s192 + $0x5c8] sm:$0xff]
      %v384 = vld [vmem:[%s192 + $0x5d0] sm:$0xff]
      %v385 = vld [vmem:[%s192 + $0x5d8] sm:$0xff]
      %v386 = vld [vmem:[%s192 + $0x5e0] sm:$0xff]
      %v387 = vld [vmem:[%s192 + $0x5e8] sm:$0xff]
      %v388 = vld [vmem:[%s192 + $0x5f0] sm:$0xff]
      %v389 = vld [vmem:[%s192 + $0x5f8] sm:$0xff]
      %v390 = vld [vmem:[%s192 + $0x600] sm:$0xff]
      %v391 = vld [vmem:[%s192 + $0x608] sm:$0xff]
      %v392 = vld [vmem:[%s192 + $0x610] sm:$0xff]
      %v393 = vld [vmem:[%s192 + $0x618] sm:$0xff]
      %v394 = vld [vmem:[%s192 + $0x620] sm:$0xff]
      %v395 = vld [vmem:[%s192 + $0x628] sm:$0xff]
      %v396 = vld [vmem:[%s192 + $0x630] sm:$0xff]
      %v397 = vld [vmem:[%s192 + $0x638] sm:$0xff]
      %v398 = vld [vmem:[%s192 + $0x640] sm:$0xff]
      %v399 = vld [vmem:[%s192 + $0x648] sm:$0xff]
      %v400 = vld [vmem:[%s192 + $0x650] sm:$0xff]
      %v401 = vld [vmem:[%s192 + $0x658] sm:$0xff]
      %v402 = vld [vmem:[%s192 + $0x660] sm:$0xff]
      %v403 = vld [vmem:[%s192 + $0x668] sm:$0xff]
      %v404 = vld [vmem:[%s192 + $0x670] sm:$0xff]
      %v405 = vld [vmem:[%s192 + $0x678] sm:$0xff]
      %v406 = vld [vmem:[%s192 + $0x680] sm:$0xff]
      %v407 = vld [vmem:[%s192 + $0x688] sm:$0xff]
      %v408 = vld [vmem:[%s192 + $0x690] sm:$0xff]
      %v409 = vld [vmem:[%s192 + $0x698] sm:$0xff]
      %v410 = vld [vmem:[%s192 + $0x6a0] sm:$0xff]
      %v411 = vld [vmem:[%s192 + $0x6a8] sm:$0xff]
      %v412 = vld [vmem:[%s192 + $0x6b0] sm:$0xff]
      %v413 = vld [vmem:[%s192 + $0x6b8] sm:$0xff]
      %v414 = vld [vmem:[%s192 + $0x6c0] sm:$0xff]
      %v415 = vld [vmem:[%s192 + $0x6c8] sm:$0xff]
      %v416 = vld [vmem:[%s192 + $0x6d0] sm:$0xff]
      %v417 = vld [vmem:[%s192 + $0x6d8] sm:$0xff]
      %v418 = vld [vmem:[%s192 + $0x6e0] sm:$0xff]
      %v419 = vld [vmem:[%s192 + $0x6e8] sm:$0xff]
      %v420 = vld [vmem:[%s192 + $0x6f0] sm:$0xff]
      %v421 = vld [vmem:[%s192 + $0x6f8] sm:$0xff]
      %v422 = vld [vmem:[%s192 + $0x700] sm:$0xff]
      %v423 = vld [vmem:[%s192 + $0x708] sm:$0xff]
      %v424 = vld [vmem:[%s192 + $0x710] sm:$0xff]
      %v425 = vld [vmem:[%s192 + $0x718] sm:$0xff]
      %v426 = vld [vmem:[%s192 + $0x720] sm:$0xff]
      %v427 = vld [vmem:[%s192 + $0x728] sm:$0xff]
      %v428 = vld [vmem:[%s192 + $0x730] sm:$0xff]
      %v429 = vld [vmem:[%s192 + $0x738] sm:$0xff]
      %v430 = vld [vmem:[%s192 + $0x740] sm:$0xff]
      %v431 = vld [vmem:[%s192 + $0x748] sm:$0xff]
      %v432 = vld [vmem:[%s192 + $0x750] sm:$0xff]
      %v433 = vld [vmem:[%s192 + $0x758] sm:$0xff]
      %v434 = vld [vmem:[%s192 + $0x760] sm:$0xff]
      %v435 = vld [vmem:[%s192 + $0x768] sm:$0xff]
      %v436 = vld [vmem:[%s192 + $0x770] sm:$0xff]
      %v437 = vld [vmem:[%s192 + $0x778] sm:$0xff]
      %v438 = vld [vmem:[%s192 + $0x780] sm:$0xff]
      %v439 = vld [vmem:[%s192 + $0x788] sm:$0xff]
      %v440 = vld [vmem:[%s192 + $0x790] sm:$0xff]
      %v441 = vld [vmem:[%s192 + $0x798] sm:$0xff]
      %v442 = vld [vmem:[%s192 + $0x7a0] sm:$0xff]
      %v443 = vld [vmem:[%s192 + $0x7a8] sm:$0xff]
      %v444 = vld [vmem:[%s192 + $0x7b0] sm:$0xff]
      %v445 = vld [vmem:[%s192 + $0x7b8] sm:$0xff]
      %v446 = vld [vmem:[%s192 + $0x7c0] sm:$0xff]
      %v447 = vld [vmem:[%s192 + $0x7c8] sm:$0xff]
      %v448 = vld [vmem:[%s192 + $0x7d0] sm:$0xff]
      %v449 = vld [vmem:[%s192 + $0x7d8] sm:$0xff]
      %v450 = vld [vmem:[%s192 + $0x7e0] sm:$0xff]
      %v451 = vld [vmem:[%s192 + $0x7e8] sm:$0xff]
      %v452 = vld [vmem:[%s192 + $0x7f0] sm:$0xff]
      %v453 = vld [vmem:[%s192 + $0x7f8] sm:$0xff]
      %v454 = vld [vmem:[%s192 + $0x800] sm:$0xff]
      %v455 = vld [vmem:[%s192 + $0x808] sm:$0xff]
      %v456 = vld [vmem:[%s192 + $0x810] sm:$0xff]
      %v457 = vld [vmem:[%s192 + $0x818] sm:$0xff]
      %v458 = vld [vmem:[%s192 + $0x820] sm:$0xff]
      %v459 = vld [vmem:[%s192 + $0x828] sm:$0xff]
      %v460 = vld [vmem:[%s192 + $0x830] sm:$0xff]
      %v461 = vld [vmem:[%s192 + $0x838] sm:$0xff]
      %v462 = vld [vmem:[%s192 + $0x840] sm:$0xff]
      %v463 = vld [vmem:[%s192 + $0x848] sm:$0xff]
      %v464 = vld [vmem:[%s192 + $0x850] sm:$0xff]
      %v465 = vld [vmem:[%s192 + $0x858] sm:$0xff]
      %v466 = vld [vmem:[%s192 + $0x860] sm:$0xff]
      %v467 = vld [vmem:[%s192 + $0x868] sm:$0xff]
      %v468 = vld [vmem:[%s192 + $0x870] sm:$0xff]
      %v469 = vld [vmem:[%s192 + $0x878] sm:$0xff]
      %v470 = vld [vmem:[%s192 + $0x880] sm:$0xff]
      %v471 = vld [vmem:[%s192 + $0x888] sm:$0xff]
      %v472 = vld [vmem:[%s192 + $0x890] sm:$0xff]
      %v473 = vld [vmem:[%s192 + $0x898] sm:$0xff]
      %v474 = vld [vmem:[%s192 + $0x8a0] sm:$0xff]
      %v475 = vld [vmem:[%s192 + $0x8a8] sm:$0xff]
      %v476 = vld [vmem:[%s192 + $0x8b0] sm:$0xff]
      %v477 = vld [vmem:[%s192 + $0x8b8] sm:$0xff]
      %v478 = vld [vmem:[%s192 + $0x8c0] sm:$0xff]
      %v479 = vld [vmem:[%s192 + $0x8c8] sm:$0xff]
      %v480 = vld [vmem:[%s192 + $0x8d0] sm:$0xff]
      %v481 = vld [vmem:[%s192 + $0x8d8] sm:$0xff]
      %v482 = vld [vmem:[%s192 + $0x8e0] sm:$0xff]
      %v483 = vld [vmem:[%s192 + $0x8e8] sm:$0xff]
      %v484 = vld [vmem:[%s192 + $0x8f0] sm:$0xff]
      %v485 = vld [vmem:[%s192 + $0x8f8] sm:$0xff]
      %v486 = vld [vmem:[%s192 + $0x900] sm:$0xff]
      %v487 = vld [vmem:[%s192 + $0x908] sm:$0xff]
      %v488 = vld [vmem:[%s192 + $0x910] sm:$0xff]
      %v489 = vld [vmem:[%s192 + $0x918] sm:$0xff]
      %v490 = vld [vmem:[%s192 + $0x920] sm:$0xff]
      %v491 = vld [vmem:[%s192 + $0x928] sm:$0xff]
      %v492 = vld [vmem:[%s192 + $0x930] sm:$0xff]
      %v493 = vld [vmem:[%s192 + $0x938] sm:$0xff]
      %v494 = vld [vmem:[%s192 + $0x940] sm:$0xff]
      %v495 = vld [vmem:[%s192 + $0x948] sm:$0xff]
      %v496 = vld [vmem:[%s192 + $0x950] sm:$0xff]
      %v497 = vld [vmem:[%s192 + $0x958] sm:$0xff]
      %v498 = vld [vmem:[%s192 + $0x960] sm:$0xff]
      %v499 = vld [vmem:[%s192 + $0x968] sm:$0xff]
      %v500 = vld [vmem:[%s192 + $0x970] sm:$0xff]
      %v501 = vld [vmem:[%s192 + $0x978] sm:$0xff]
      %v502 = vld [vmem:[%s192 + $0x980] sm:$0xff]
      %v503 = vld [vmem:[%s192 + $0x988] sm:$0xff]
      %v504 = vld [vmem:[%s192 + $0x990] sm:$0xff]
      %v505 = vld [vmem:[%s192 + $0x998] sm:$0xff]
      %v506 = vld [vmem:[%s192 + $0x9a0] sm:$0xff]
      %v507 = vld [vmem:[%s192 + $0x9a8] sm:$0xff]
      %v508 = vld [vmem:[%s192 + $0x9b0] sm:$0xff]
      %v509 = vld [vmem:[%s192 + $0x9b8] sm:$0xff]
      %v510 = vld [vmem:[%s192 + $0x9c0] sm:$0xff]
      %v511 = vld [vmem:[%s192 + $0x9c8] sm:$0xff]
      %v512 = vld [vmem:[%s192 + $0x9d0] sm:$0xff]
      %v513 = vld [vmem:[%s192 + $0x9d8] sm:$0xff]
      %v514 = vld [vmem:[%s192 + $0x9e0] sm:$0xff]
      %v515 = vld [vmem:[%s192 + $0x9e8] sm:$0xff]
      %v516 = vld [vmem:[%s192 + $0x9f0] sm:$0xff]
      %v517 = vld [vmem:[%s192 + $0x9f8] sm:$0xff]
      %v518 = vld [vmem:[%s192 + $0xa00] sm:$0xff]
      %v519 = vld [vmem:[%s192 + $0xa08] sm:$0xff]
      %v520 = vld [vmem:[%s192 + $0xa10] sm:$0xff]
      %v521 = vld [vmem:[%s192 + $0xa18] sm:$0xff]
      %v522 = vld [vmem:[%s192 + $0xa20] sm:$0xff]
      %v523 = vld [vmem:[%s192 + $0xa28] sm:$0xff]
      %v524 = vld [vmem:[%s192 + $0xa30] sm:$0xff]
      %v525 = vld [vmem:[%s192 + $0xa38] sm:$0xff]
      %v526 = vld [vmem:[%s192 + $0xa40] sm:$0xff]
      %v527 = vld [vmem:[%s192 + $0xa48] sm:$0xff]
      %v528 = vld [vmem:[%s192 + $0xa50] sm:$0xff]
      %v529 = vld [vmem:[%s192 + $0xa58] sm:$0xff]
      %v530 = vld [vmem:[%s192 + $0xa60] sm:$0xff]
      %v531 = vld [vmem:[%s192 + $0xa68] sm:$0xff]
      %v532 = vld [vmem:[%s192 + $0xa70] sm:$0xff]
      %v533 = vld [vmem:[%s192 + $0xa78] sm:$0xff]
      %v534 = vld [vmem:[%s192 + $0xa80] sm:$0xff]
      %v535 = vld [vmem:[%s192 + $0xa88] sm:$0xff]
      %v536 = vld [vmem:[%s192 + $0xa90] sm:$0xff]
      %v537 = vld [vmem:[%s192 + $0xa98] sm:$0xff]
      %v538 = vld [vmem:[%s192 + $0xaa0] sm:$0xff]
      %v539 = vld [vmem:[%s192 + $0xaa8] sm:$0xff]
      %v540 = vld [vmem:[%s192 + $0xab0] sm:$0xff]
      %v541 = vld [vmem:[%s192 + $0xab8] sm:$0xff]
      %v542 = vld [vmem:[%s192 + $0xac0] sm:$0xff]
      %v543 = vld [vmem:[%s192 + $0xac8] sm:$0xff]
      %v544 = vld [vmem:[%s192 + $0xad0] sm:$0xff]
      %v545 = vld [vmem:[%s192 + $0xad8] sm:$0xff]
      %v546 = vld [vmem:[%s192 + $0xae0] sm:$0xff]
      %v547 = vld [vmem:[%s192 + $0xae8] sm:$0xff]
      %v548 = vld [vmem:[%s192 + $0xaf0] sm:$0xff]
      %v549 = vld [vmem:[%s192 + $0xaf8] sm:$0xff]
      %v550 = vld [vmem:[%s192 + $0xb00] sm:$0xff]
      %v551 = vld [vmem:[%s192 + $0xb08] sm:$0xff]
      %v552 = vld [vmem:[%s192 + $0xb10] sm:$0xff]
      %v553 = vld [vmem:[%s192 + $0xb18] sm:$0xff]
      %v554 = vld [vmem:[%s192 + $0xb20] sm:$0xff]
      %v555 = vld [vmem:[%s192 + $0xb28] sm:$0xff]
      %v556 = vld [vmem:[%s192 + $0xb30] sm:$0xff]
      %v557 = vld [vmem:[%s192 + $0xb38] sm:$0xff]
      %v558 = vld [vmem:[%s192 + $0xb40] sm:$0xff]
      %v559 = vld [vmem:[%s192 + $0xb48] sm:$0xff]
      %v560 = vld [vmem:[%s192 + $0xb50] sm:$0xff]
      %v561 = vld [vmem:[%s192 + $0xb58] sm:$0xff]
      %v562 = vld [vmem:[%s192 + $0xb60] sm:$0xff]
      %v563 = vld [vmem:[%s192 + $0xb68] sm:$0xff]
      %v564 = vld [vmem:[%s192 + $0xb70] sm:$0xff]
      %v565 = vld [vmem:[%s192 + $0xb78] sm:$0xff]
      %v566 = vld [vmem:[%s192 + $0xb80] sm:$0xff]
      %v567 = vld [vmem:[%s192 + $0xb88] sm:$0xff]
      %v568 = vld [vmem:[%s192 + $0xb90] sm:$0xff]
      %v569 = vld [vmem:[%s192 + $0xb98] sm:$0xff]
      %v570 = vld [vmem:[%s192 + $0xba0] sm:$0xff]
      %v571 = vld [vmem:[%s192 + $0xba8] sm:$0xff]
      %v572 = vld [vmem:[%s192 + $0xbb0] sm:$0xff]
      %v573 = vld [vmem:[%s192 + $0xbb8] sm:$0xff]
      %v574 = vld [vmem:[%s192 + $0xbc0] sm:$0xff]
      %v575 = vld [vmem:[%s192 + $0xbc8] sm:$0xff]
      %v576 = vld [vmem:[%s192 + $0xbd0] sm:$0xff]
      %v577 = vld [vmem:[%s192 + $0xbd8] sm:$0xff]
      %v578 = vld [vmem:[%s192 + $0xbe0] sm:$0xff]
      %v579 = vld [vmem:[%s192 + $0xbe8] sm:$0xff]
      %v580 = vld [vmem:[%s192 + $0xbf0] sm:$0xff]
      %v581 = vld [vmem:[%s192 + $0xbf8] sm:$0xff]
      %v582 = vld [vmem:[%s1] sm:$0xff]
      %v583 = vld [vmem:[%s1 + $0x8] sm:$0xff]
      %v584 = vld [vmem:[%s1 + $0x10] sm:$0xff]
      %v585 = vld [vmem:[%s1 + $0x18] sm:$0xff]
      %v586 = vld [vmem:[%s1 + $0x20] sm:$0xff]
      %v587 = vld [vmem:[%s1 + $0x28] sm:$0xff]
      %588 = vmatpush.msra.mxu0 %v258
      %589 = vmatpush.msra.mxu0 %v254
      %590 = vmatpush.msra.mxu0 %v250
      %591 = vmatpush.msra.mxu0 %v246
      %592 = vmatpush.msra.mxu0 %v242
      %593 = vmatpush.msra.mxu0 %v238
      %594 = vmatpush.msra.mxu0 %v234
      %595 = vmatpush.msra.mxu0 %v230
      %596 = vmatpush.msra.mxu0 %v226
      %597 = vmatpush.msra.mxu0 %v222
      %598 = vmatpush.msra.mxu0 %v218
      %599 = vmatpush.msra.mxu0 %v214
      %600 = vmatpush.msra.mxu0 %v210
      %601 = vmatpush.msra.mxu0 %v206
      %602 = vmatpush.msra.mxu0 %v202
      %603 = vmatpush.msra.mxu0 %v198
      %604 = vmatmul.f32.gmra.mxu0 %v582
      %v605 = vpop.f32.mrf.mxu0
      %v606 = vadd.f32 0.0, %v605
      %607 = vdwg.mxu0
      %608 = vmatpush.msra.mxu0 %v322
      %609 = vmatpush.msra.mxu0 %v318
      %610 = vmatpush.msra.mxu0 %v314
      %611 = vmatpush.msra.mxu0 %v310
      %612 = vmatpush.msra.mxu0 %v306
      %613 = vmatpush.msra.mxu0 %v302
      %614 = vmatpush.msra.mxu0 %v298
      %615 = vmatpush.msra.mxu0 %v294
      %616 = vmatpush.msra.mxu0 %v290
      %617 = vmatpush.msra.mxu0 %v286
      %618 = vmatpush.msra.mxu0 %v282
      %619 = vmatpush.msra.mxu0 %v278
      %620 = vmatpush.msra.mxu0 %v274
      %621 = vmatpush.msra.mxu0 %v270
      %622 = vmatpush.msra.mxu0 %v266
      %623 = vmatpush.msra.mxu0 %v262
      %624 = vmatmul.f32.gmra.mxu0 %v583
      %v625 = vpop.f32.mrf.mxu0
      %v626 = vadd.f32 %v606, %v625
      %627 = vdwg.mxu0
      %628 = vmatpush.msra.mxu0 %v386
      %629 = vmatpush.msra.mxu0 %v382
      %630 = vmatpush.msra.mxu0 %v378
      %631 = vmatpush.msra.mxu0 %v374
      %632 = vmatpush.msra.mxu0 %v370
      %633 = vmatpush.msra.mxu0 %v366
      %634 = vmatpush.msra.mxu0 %v362
      %635 = vmatpush.msra.mxu0 %v358
      %636 = vmatpush.msra.mxu0 %v354
      %637 = vmatpush.msra.mxu0 %v350
      %638 = vmatpush.msra.mxu0 %v346
      %639 = vmatpush.msra.mxu0 %v342
      %640 = vmatpush.msra.mxu0 %v338
      %641 = vmatpush.msra.mxu0 %v334
      %642 = vmatpush.msra.mxu0 %v330
      %643 = vmatpush.msra.mxu0 %v326
      %644 = vmatmul.f32.gmra.mxu0 %v584
      %v645 = vpop.f32.mrf.mxu0
      %v646 = vadd.f32 %v626, %v645
      %647 = vdwg.mxu0
      %648 = vmatpush.msra.mxu0 %v450
      %649 = vmatpush.msra.mxu0 %v446
      %650 = vmatpush.msra.mxu0 %v442
      %651 = vmatpush.msra.mxu0 %v438
      %652 = vmatpush.msra.mxu0 %v434
      %653 = vmatpush.msra.mxu0 %v430
      %654 = vmatpush.msra.mxu0 %v426
      %655 = vmatpush.msra.mxu0 %v422
      %656 = vmatpush.msra.mxu0 %v418
      %657 = vmatpush.msra.mxu0 %v414
      %658 = vmatpush.msra.mxu0 %v410
      %659 = vmatpush.msra.mxu0 %v406
      %660 = vmatpush.msra.mxu0 %v402
      %661 = vmatpush.msra.mxu0 %v398
      %662 = vmatpush.msra.mxu0 %v394
      %663 = vmatpush.msra.mxu0 %v390
      %664 = vmatmul.f32.gmra.mxu0 %v585
      %v665 = vpop.f32.mrf.mxu0
      %v666 = vadd.f32 %v646, %v665
      %667 = vdwg.mxu0
      %668 = vmatpush.msra.mxu0 %v514
      %669 = vmatpush.msra.mxu0 %v510
      %670 = vmatpush.msra.mxu0 %v506
      %671 = vmatpush.msra.mxu0 %v502
      %672 = vmatpush.msra.mxu0 %v498
      %673 = vmatpush.msra.mxu0 %v494
      %674 = vmatpush.msra.mxu0 %v490
      %675 = vmatpush.msra.mxu0 %v486
      %676 = vmatpush.msra.mxu0 %v482
      %677 = vmatpush.msra.mxu0 %v478
      %678 = vmatpush.msra.mxu0 %v474
      %679 = vmatpush.msra.mxu0 %v470
      %680 = vmatpush.msra.mxu0 %v466
      %681 = vmatpush.msra.mxu0 %v462
      %682 = vmatpush.msra.mxu0 %v458
      %683 = vmatpush.msra.mxu0 %v454
      %684 = vmatmul.f32.gmra.mxu0 %v586
      %v685 = vpop.f32.mrf.mxu0
      %v686 = vadd.f32 %v666, %v685
      %687 = vdwg.mxu0
      %688 = vmatpush.msra.mxu0 %v578
      %689 = vmatpush.msra.mxu0 %v574
      %690 = vmatpush.msra.mxu0 %v570
      %691 = vmatpush.msra.mxu0 %v566
      %692 = vmatpush.msra.mxu0 %v562
      %693 = vmatpush.msra.mxu0 %v558
      %694 = vmatpush.msra.mxu0 %v554
      %695 = vmatpush.msra.mxu0 %v550
      %696 = vmatpush.msra.mxu0 %v546
      %697 = vmatpush.msra.mxu0 %v542
      %698 = vmatpush.msra.mxu0 %v538
      %699 = vmatpush.msra.mxu0 %v534
      %700 = vmatpush.msra.mxu0 %v530
      %701 = vmatpush.msra.mxu0 %v526
      %702 = vmatpush.msra.mxu0 %v522
      %703 = vmatpush.msra.mxu0 %v518
      %704 = vmatmul.f32.gmra.mxu0 %v587
      %v705 = vpop.f32.mrf.mxu0
      %v706 = vadd.f32 %v686, %v705
      %707 = vdwg.mxu0
      %708 = vmatpush.msra.mxu0 %v259
      %709 = vmatpush.msra.mxu0 %v255
      %710 = vmatpush.msra.mxu0 %v251
      %711 = vmatpush.msra.mxu0 %v247
      %712 = vmatpush.msra.mxu0 %v243
      %713 = vmatpush.msra.mxu0 %v239
      %714 = vmatpush.msra.mxu0 %v235
      %715 = vmatpush.msra.mxu0 %v231
      %716 = vmatpush.msra.mxu0 %v227
      %717 = vmatpush.msra.mxu0 %v223
      %718 = vmatpush.msra.mxu0 %v219
      %719 = vmatpush.msra.mxu0 %v215
      %720 = vmatpush.msra.mxu0 %v211
      %721 = vmatpush.msra.mxu0 %v207
      %722 = vmatpush.msra.mxu0 %v203
      %723 = vmatpush.msra.mxu0 %v199
      %724 = vmatmul.f32.gmra.mxu0 %v582
      %v725 = vpop.f32.mrf.mxu0
      %v726 = vadd.f32 0.0, %v725
      %727 = vdwg.mxu0
      %728 = vmatpush.msra.mxu0 %v323
      %729 = vmatpush.msra.mxu0 %v319
      %730 = vmatpush.msra.mxu0 %v315
      %731 = vmatpush.msra.mxu0 %v311
      %732 = vmatpush.msra.mxu0 %v307
      %733 = vmatpush.msra.mxu0 %v303
      %734 = vmatpush.msra.mxu0 %v299
      %735 = vmatpush.msra.mxu0 %v295
      %736 = vmatpush.msra.mxu0 %v291
      %737 = vmatpush.msra.mxu0 %v287
      %738 = vmatpush.msra.mxu0 %v283
      %739 = vmatpush.msra.mxu0 %v279
      %740 = vmatpush.msra.mxu0 %v275
      %741 = vmatpush.msra.mxu0 %v271
      %742 = vmatpush.msra.mxu0 %v267
      %743 = vmatpush.msra.mxu0 %v263
      %744 = vmatmul.f32.gmra.mxu0 %v583
      %v745 = vpop.f32.mrf.mxu0
      %v746 = vadd.f32 %v726, %v745
      %747 = vdwg.mxu0
      %748 = vmatpush.msra.mxu0 %v387
      %749 = vmatpush.msra.mxu0 %v383
      %750 = vmatpush.msra.mxu0 %v379
      %751 = vmatpush.msra.mxu0 %v375
      %752 = vmatpush.msra.mxu0 %v371
      %753 = vmatpush.msra.mxu0 %v367
      %754 = vmatpush.msra.mxu0 %v363
      %755 = vmatpush.msra.mxu0 %v359
      %756 = vmatpush.msra.mxu0 %v355
      %757 = vmatpush.msra.mxu0 %v351
      %758 = vmatpush.msra.mxu0 %v347
      %759 = vmatpush.msra.mxu0 %v343
      %760 = vmatpush.msra.mxu0 %v339
      %761 = vmatpush.msra.mxu0 %v335
      %762 = vmatpush.msra.mxu0 %v331
      %763 = vmatpush.msra.mxu0 %v327
      %764 = vmatmul.f32.gmra.mxu0 %v584
      %v765 = vpop.f32.mrf.mxu0
      %v766 = vadd.f32 %v746, %v765
      %767 = vdwg.mxu0
      %768 = vmatpush.msra.mxu0 %v451
      %769 = vmatpush.msra.mxu0 %v447
      %770 = vmatpush.msra.mxu0 %v443
      %771 = vmatpush.msra.mxu0 %v439
      %772 = vmatpush.msra.mxu0 %v435
      %773 = vmatpush.msra.mxu0 %v431
      %774 = vmatpush.msra.mxu0 %v427
      %775 = vmatpush.msra.mxu0 %v423
      %776 = vmatpush.msra.mxu0 %v419
      %777 = vmatpush.msra.mxu0 %v415
      %778 = vmatpush.msra.mxu0 %v411
      %779 = vmatpush.msra.mxu0 %v407
      %780 = vmatpush.msra.mxu0 %v403
      %781 = vmatpush.msra.mxu0 %v399
      %782 = vmatpush.msra.mxu0 %v395
      %783 = vmatpush.msra.mxu0 %v391
      %784 = vmatmul.f32.gmra.mxu0 %v585
      %v785 = vpop.f32.mrf.mxu0
      %v786 = vadd.f32 %v766, %v785
      %787 = vdwg.mxu0
      %788 = vmatpush.msra.mxu0 %v515
      %789 = vmatpush.msra.mxu0 %v511
      %790 = vmatpush.msra.mxu0 %v507
      %791 = vmatpush.msra.mxu0 %v503
      %792 = vmatpush.msra.mxu0 %v499
      %793 = vmatpush.msra.mxu0 %v495
      %794 = vmatpush.msra.mxu0 %v491
      %795 = vmatpush.msra.mxu0 %v487
      %796 = vmatpush.msra.mxu0 %v483
      %797 = vmatpush.msra.mxu0 %v479
      %798 = vmatpush.msra.mxu0 %v475
      %799 = vmatpush.msra.mxu0 %v471
      %800 = vmatpush.msra.mxu0 %v467
      %801 = vmatpush.msra.mxu0 %v463
      %802 = vmatpush.msra.mxu0 %v459
      %803 = vmatpush.msra.mxu0 %v455
      %804 = vmatmul.f32.gmra.mxu0 %v586
      %v805 = vpop.f32.mrf.mxu0
      %v806 = vadd.f32 %v786, %v805
      %807 = vdwg.mxu0
      %808 = vmatpush.msra.mxu0 %v579
      %809 = vmatpush.msra.mxu0 %v575
      %810 = vmatpush.msra.mxu0 %v571
      %811 = vmatpush.msra.mxu0 %v567
      %812 = vmatpush.msra.mxu0 %v563
      %813 = vmatpush.msra.mxu0 %v559
      %814 = vmatpush.msra.mxu0 %v555
      %815 = vmatpush.msra.mxu0 %v551
      %816 = vmatpush.msra.mxu0 %v547
      %817 = vmatpush.msra.mxu0 %v543
      %818 = vmatpush.msra.mxu0 %v539
      %819 = vmatpush.msra.mxu0 %v535
      %820 = vmatpush.msra.mxu0 %v531
      %821 = vmatpush.msra.mxu0 %v527
      %822 = vmatpush.msra.mxu0 %v523
      %823 = vmatpush.msra.mxu0 %v519
      %824 = vmatmul.f32.gmra.mxu0 %v587
      %v825 = vpop.f32.mrf.mxu0
      %v826 = vadd.f32 %v806, %v825
      %827 = vdwg.mxu0
      %828 = vmatpush.msra.mxu0 %v260
      %829 = vmatpush.msra.mxu0 %v256
      %830 = vmatpush.msra.mxu0 %v252
      %831 = vmatpush.msra.mxu0 %v248
      %832 = vmatpush.msra.mxu0 %v244
      %833 = vmatpush.msra.mxu0 %v240
      %834 = vmatpush.msra.mxu0 %v236
      %835 = vmatpush.msra.mxu0 %v232
      %836 = vmatpush.msra.mxu0 %v228
      %837 = vmatpush.msra.mxu0 %v224
      %838 = vmatpush.msra.mxu0 %v220
      %839 = vmatpush.msra.mxu0 %v216
      %840 = vmatpush.msra.mxu0 %v212
      %841 = vmatpush.msra.mxu0 %v208
      %842 = vmatpush.msra.mxu0 %v204
      %843 = vmatpush.msra.mxu0 %v200
      %844 = vmatmul.f32.gmra.mxu0 %v582
      %v845 = vpop.f32.mrf.mxu0
      %v846 = vadd.f32 0.0, %v845
      %847 = vdwg.mxu0
      %848 = vmatpush.msra.mxu0 %v324
      %849 = vmatpush.msra.mxu0 %v320
      %850 = vmatpush.msra.mxu0 %v316
      %851 = vmatpush.msra.mxu0 %v312
      %852 = vmatpush.msra.mxu0 %v308
      %853 = vmatpush.msra.mxu0 %v304
      %854 = vmatpush.msra.mxu0 %v300
      %855 = vmatpush.msra.mxu0 %v296
      %856 = vmatpush.msra.mxu0 %v292
      %857 = vmatpush.msra.mxu0 %v288
      %858 = vmatpush.msra.mxu0 %v284
      %859 = vmatpush.msra.mxu0 %v280
      %860 = vmatpush.msra.mxu0 %v276
      %861 = vmatpush.msra.mxu0 %v272
      %862 = vmatpush.msra.mxu0 %v268
      %863 = vmatpush.msra.mxu0 %v264
      %864 = vmatmul.f32.gmra.mxu0 %v583
      %v865 = vpop.f32.mrf.mxu0
      %v866 = vadd.f32 %v846, %v865
      %867 = vdwg.mxu0
      %868 = vmatpush.msra.mxu0 %v388
      %869 = vmatpush.msra.mxu0 %v384
      %870 = vmatpush.msra.mxu0 %v380
      %871 = vmatpush.msra.mxu0 %v376
      %872 = vmatpush.msra.mxu0 %v372
      %873 = vmatpush.msra.mxu0 %v368
      %874 = vmatpush.msra.mxu0 %v364
      %875 = vmatpush.msra.mxu0 %v360
      %876 = vmatpush.msra.mxu0 %v356
      %877 = vmatpush.msra.mxu0 %v352
      %878 = vmatpush.msra.mxu0 %v348
      %879 = vmatpush.msra.mxu0 %v344
      %880 = vmatpush.msra.mxu0 %v340
      %881 = vmatpush.msra.mxu0 %v336
      %882 = vmatpush.msra.mxu0 %v332
      %883 = vmatpush.msra.mxu0 %v328
      %884 = vmatmul.f32.gmra.mxu0 %v584
      %v885 = vpop.f32.mrf.mxu0
      %v886 = vadd.f32 %v866, %v885
      %887 = vdwg.mxu0
      %888 = vmatpush.msra.mxu0 %v452
      %889 = vmatpush.msra.mxu0 %v448
      %890 = vmatpush.msra.mxu0 %v444
      %891 = vmatpush.msra.mxu0 %v440
      %892 = vmatpush.msra.mxu0 %v436
      %893 = vmatpush.msra.mxu0 %v432
      %894 = vmatpush.msra.mxu0 %v428
      %895 = vmatpush.msra.mxu0 %v424
      %896 = vmatpush.msra.mxu0 %v420
      %897 = vmatpush.msra.mxu0 %v416
      %898 = vmatpush.msra.mxu0 %v412
      %899 = vmatpush.msra.mxu0 %v408
      %900 = vmatpush.msra.mxu0 %v404
      %901 = vmatpush.msra.mxu0 %v400
      %902 = vmatpush.msra.mxu0 %v396
      %903 = vmatpush.msra.mxu0 %v392
      %904 = vmatmul.f32.gmra.mxu0 %v585
      %v905 = vpop.f32.mrf.mxu0
      %v906 = vadd.f32 %v886, %v905
      %907 = vdwg.mxu0
      %908 = vmatpush.msra.mxu0 %v516
      %909 = vmatpush.msra.mxu0 %v512
      %910 = vmatpush.msra.mxu0 %v508
      %911 = vmatpush.msra.mxu0 %v504
      %912 = vmatpush.msra.mxu0 %v500
      %913 = vmatpush.msra.mxu0 %v496
      %914 = vmatpush.msra.mxu0 %v492
      %915 = vmatpush.msra.mxu0 %v488
      %916 = vmatpush.msra.mxu0 %v484
      %917 = vmatpush.msra.mxu0 %v480
      %918 = vmatpush.msra.mxu0 %v476
      %919 = vmatpush.msra.mxu0 %v472
      %920 = vmatpush.msra.mxu0 %v468
      %921 = vmatpush.msra.mxu0 %v464
      %922 = vmatpush.msra.mxu0 %v460
      %923 = vmatpush.msra.mxu0 %v456
      %924 = vmatmul.f32.gmra.mxu0 %v586
      %v925 = vpop.f32.mrf.mxu0
      %v926 = vadd.f32 %v906, %v925
      %927 = vdwg.mxu0
      %928 = vmatpush.msra.mxu0 %v580
      %929 = vmatpush.msra.mxu0 %v576
      %930 = vmatpush.msra.mxu0 %v572
      %931 = vmatpush.msra.mxu0 %v568
      %932 = vmatpush.msra.mxu0 %v564
      %933 = vmatpush.msra.mxu0 %v560
      %934 = vmatpush.msra.mxu0 %v556
      %935 = vmatpush.msra.mxu0 %v552
      %936 = vmatpush.msra.mxu0 %v548
      %937 = vmatpush.msra.mxu0 %v544
      %938 = vmatpush.msra.mxu0 %v540
      %939 = vmatpush.msra.mxu0 %v536
      %940 = vmatpush.msra.mxu0 %v532
      %941 = vmatpush.msra.mxu0 %v528
      %942 = vmatpush.msra.mxu0 %v524
      %943 = vmatpush.msra.mxu0 %v520
      %944 = vmatmul.f32.gmra.mxu0 %v587
      %v945 = vpop.f32.mrf.mxu0
      %v946 = vadd.f32 %v926, %v945
      %947 = vdwg.mxu0
      %948 = vmatpush.msra.mxu0 %v261
      %949 = vmatpush.msra.mxu0 %v257
      %950 = vmatpush.msra.mxu0 %v253
      %951 = vmatpush.msra.mxu0 %v249
      %952 = vmatpush.msra.mxu0 %v245
      %953 = vmatpush.msra.mxu0 %v241
      %954 = vmatpush.msra.mxu0 %v237
      %955 = vmatpush.msra.mxu0 %v233
      %956 = vmatpush.msra.mxu0 %v229
      %957 = vmatpush.msra.mxu0 %v225
      %958 = vmatpush.msra.mxu0 %v221
      %959 = vmatpush.msra.mxu0 %v217
      %960 = vmatpush.msra.mxu0 %v213
      %961 = vmatpush.msra.mxu0 %v209
      %962 = vmatpush.msra.mxu0 %v205
      %963 = vmatpush.msra.mxu0 %v201
      %964 = vmatmul.f32.gmra.mxu0 %v582
      %v965 = vpop.f32.mrf.mxu0
      %v966 = vadd.f32 0.0, %v965
      %967 = vdwg.mxu0
      %968 = vmatpush.msra.mxu0 %v325
      %969 = vmatpush.msra.mxu0 %v321
      %970 = vmatpush.msra.mxu0 %v317
      %971 = vmatpush.msra.mxu0 %v313
      %972 = vmatpush.msra.mxu0 %v309
      %973 = vmatpush.msra.mxu0 %v305
      %974 = vmatpush.msra.mxu0 %v301
      %975 = vmatpush.msra.mxu0 %v297
      %976 = vmatpush.msra.mxu0 %v293
      %977 = vmatpush.msra.mxu0 %v289
      %978 = vmatpush.msra.mxu0 %v285
      %979 = vmatpush.msra.mxu0 %v281
      %980 = vmatpush.msra.mxu0 %v277
      %981 = vmatpush.msra.mxu0 %v273
      %982 = vmatpush.msra.mxu0 %v269
      %983 = vmatpush.msra.mxu0 %v265
      %984 = vmatmul.f32.gmra.mxu0 %v583
      %v985 = vpop.f32.mrf.mxu0
      %v986 = vadd.f32 %v966, %v985
      %987 = vdwg.mxu0
      %988 = vmatpush.msra.mxu0 %v389
      %989 = vmatpush.msra.mxu0 %v385
      %990 = vmatpush.msra.mxu0 %v381
      %991 = vmatpush.msra.mxu0 %v377
      %992 = vmatpush.msra.mxu0 %v373
      %993 = vmatpush.msra.mxu0 %v369
      %994 = vmatpush.msra.mxu0 %v365
      %995 = vmatpush.msra.mxu0 %v361
      %996 = vmatpush.msra.mxu0 %v357
      %997 = vmatpush.msra.mxu0 %v353
      %998 = vmatpush.msra.mxu0 %v349
      %999 = vmatpush.msra.mxu0 %v345
      %1000 = vmatpush.msra.mxu0 %v341
      %1001 = vmatpush.msra.mxu0 %v337
      %1002 = vmatpush.msra.mxu0 %v333
      %1003 = vmatpush.msra.mxu0 %v329
      %1004 = vmatmul.f32.gmra.mxu0 %v584
      %v1005 = vpop.f32.mrf.mxu0
      %v1006 = vadd.f32 %v986, %v1005
      %1007 = vdwg.mxu0
      %1008 = vmatpush.msra.mxu0 %v453
      %1009 = vmatpush.msra.mxu0 %v449
      %1010 = vmatpush.msra.mxu0 %v445
      %1011 = vmatpush.msra.mxu0 %v441
      %1012 = vmatpush.msra.mxu0 %v437
      %1013 = vmatpush.msra.mxu0 %v433
      %1014 = vmatpush.msra.mxu0 %v429
      %1015 = vmatpush.msra.mxu0 %v425
      %1016 = vmatpush.msra.mxu0 %v421
      %1017 = vmatpush.msra.mxu0 %v417
      %1018 = vmatpush.msra.mxu0 %v413
      %1019 = vmatpush.msra.mxu0 %v409
      %1020 = vmatpush.msra.mxu0 %v405
      %1021 = vmatpush.msra.mxu0 %v401
      %1022 = vmatpush.msra.mxu0 %v397
      %1023 = vmatpush.msra.mxu0 %v393
      %1024 = vmatmul.f32.gmra.mxu0 %v585
      %v1025 = vpop.f32.mrf.mxu0
      %v1026 = vadd.f32 %v1006, %v1025
      %1027 = vdwg.mxu0
      %1028 = vmatpush.msra.mxu0 %v517
      %1029 = vmatpush.msra.mxu0 %v513
      %1030 = vmatpush.msra.mxu0 %v509
      %1031 = vmatpush.msra.mxu0 %v505
      %1032 = vmatpush.msra.mxu0 %v501
      %1033 = vmatpush.msra.mxu0 %v497
      %1034 = vmatpush.msra.mxu0 %v493
      %1035 = vmatpush.msra.mxu0 %v489
      %1036 = vmatpush.msra.mxu0 %v485
      %1037 = vmatpush.msra.mxu0 %v481
      %1038 = vmatpush.msra.mxu0 %v477
      %1039 = vmatpush.msra.mxu0 %v473
      %1040 = vmatpush.msra.mxu0 %v469
      %1041 = vmatpush.msra.mxu0 %v465
      %1042 = vmatpush.msra.mxu0 %v461
      %1043 = vmatpush.msra.mxu0 %v457
      %1044 = vmatmul.f32.gmra.mxu0 %v586
      %v1045 = vpop.f32.mrf.mxu0
      %v1046 = vadd.f32 %v1026, %v1045
      %1047 = vdwg.mxu0
      %1048 = vmatpush.msra.mxu0 %v581
      %1049 = vmatpush.msra.mxu0 %v577
      %1050 = vmatpush.msra.mxu0 %v573
      %1051 = vmatpush.msra.mxu0 %v569
      %1052 = vmatpush.msra.mxu0 %v565
      %1053 = vmatpush.msra.mxu0 %v561
      %1054 = vmatpush.msra.mxu0 %v557
      %1055 = vmatpush.msra.mxu0 %v553
      %1056 = vmatpush.msra.mxu0 %v549
      %1057 = vmatpush.msra.mxu0 %v545
      %1058 = vmatpush.msra.mxu0 %v541
      %1059 = vmatpush.msra.mxu0 %v537
      %1060 = vmatpush.msra.mxu0 %v533
      %1061 = vmatpush.msra.mxu0 %v529
      %1062 = vmatpush.msra.mxu0 %v525
      %1063 = vmatpush.msra.mxu0 %v521
      %1064 = vmatmul.f32.gmra.mxu0 %v587
      %v1065 = vpop.f32.mrf.mxu0
      %v1066 = vadd.f32 %v1046, %v1065
      %1067 = vdwg.mxu0
      %v1068 = vadd.f32 %v706, %v826
      %v1069 = vadd.f32 %v1068, %v946
      %v1070 = vadd.f32 %v1069, %v1066
      %1071 = vadd.xlane.f32.xlu0 %v1070
      %v1072 = vpop.xlane.xlu0 %1071
      %v1073 = vrcp.pop 512.0
      %v1074 = vmul.f32 512.0, %v1073
      %v1075 = vsub.f32 1.0, %v1074
      %v1076 = vmul.f32 %v1073, %v1075
      %v1077 = vadd.f32 %v1073, %v1076
      %vm1078 = vweird.f32 %v1073
      %v1079 = vsel %vm1078, %v1073, %v1077
      %v1080 = vmul.f32 %v1072, %v1079
      %v1081 = vsub.f32 %v706, %v1080
      %v1082 = vsub.f32 %v826, %v1080
      %v1083 = vsub.f32 %v946, %v1080
      %v1084 = vsub.f32 %v1066, %v1080
      %v1085 = vmul.f32 %v1081, %v1081
      %v1086 = vmul.f32 %v1082, %v1082
      %v1087 = vmul.f32 %v1083, %v1083
      %v1088 = vmul.f32 %v1084, %v1084
      %v1089 = vadd.f32 %v1085, %v1086
      %v1090 = vadd.f32 %v1089, %v1087
      %v1091 = vadd.f32 %v1090, %v1088
      %1092 = vadd.xlane.f32.xlu0 %v1091
      %v1093 = vpop.xlane.xlu0 %1092
      %v1094 = vmul.f32 %v1093, %v1079
      %v1095 = vadd.f32 %v1094, 1e-05
      %v1096 = vrsqrt.pop %v1095
      %v1097 = vmul.f32 %v1096, %v1095
      %v1098 = vmul.f32 %v1097, %v1096
      %v1099 = vmul.f32 0.5, %v1098
      %v1100 = vsub.f32 1.5, %v1099
      %v1101 = vmul.f32 %v1096, %v1100
      %vm1102 = vweird.f32 %v1095
      %vm1103 = vweird.f32 %v1096
      %vm1104 = vmor %vm1102, %vm1103
      %v1105 = vsel %vm1104, %v1096, %v1101
      %v1106 = vmul.f32 %v1081, %v1105
      %v1107 = vmul.f32 %v1082, %v1105
      %v1108 = vmul.f32 %v1083, %v1105
      %v1109 = vmul.f32 %v1084, %v1105
      %v1110 = vld [vmem:[%s2] sm:$0xff]
      %1112 = vset.pattern.permute.xlu0 0
      %1113 = vperm.xlu0 %1112, %v1110
      %v1114 = vpop.permute.xlu0 %1113
      %v1116 = vmul.f32 %v1106, %v1114
      %v1117 = vmul.f32 %v1107, %v1114
      %v1118 = vmul.f32 %v1108, %v1114
      %v1119 = vmul.f32 %v1109, %v1114
      %v1120 = vld [vmem:[%s3] sm:$0xff]
      %1122 = vset.pattern.permute.xlu0 0
      %1123 = vperm.xlu0 %1122, %v1120
      %v1124 = vpop.permute.xlu0 %1123
      %v1126 = vadd.f32 %v1116, %v1124
      %v1127 = vadd.f32 %v1117, %v1124
      %v1128 = vadd.f32 %v1118, %v1124
      %v1129 = vadd.f32 %v1119, %v1124
      %vm1130 = vcmp.ge.f32.partialorder %v1126, 0.0
      %vm1131 = vcmp.ge.f32.partialorder %v1127, 0.0
      %vm1132 = vcmp.ge.f32.partialorder %v1128, 0.0
      %vm1133 = vcmp.ge.f32.partialorder %v1129, 0.0
      %v1134 = vmul.f32 %v1126, 0.01
      %v1135 = vmul.f32 %v1127, 0.01
      %v1136 = vmul.f32 %v1128, 0.01
      %v1137 = vmul.f32 %v1129, 0.01
      %v1138 = vsel %vm1130, %v1126, %v1134
      %v1139 = vsel %vm1131, %v1127, %v1135
      %v1140 = vsel %vm1132, %v1128, %v1136
      %v1141 = vsel %vm1133, %v1129, %v1137
      %1142 = vst [vmem:[%s197] sm:$0xff] %v1138
      %1143 = vst [vmem:[%s197 + $0x8] sm:$0xff] %v1139
      %1144 = vst [vmem:[%s197 + $0x10] sm:$0xff] %v1140
      %1145 = vst [vmem:[%s197 + $0x18] sm:$0xff] %v1141
      %p1146 = scmp.lt.s32.totalorder %s15, 1
      %s1147 = scalar_select %p1146, %s15, 1
      %s1148 = smul.addr %s1147, 4
      %s1149 = smul.addr %s1148, 8
      %s1150 = scalar_lea.vmem %s4, %s1149
      // Predicated region
      $region37: #{_lambda_.15} parent=35 // pred_check
        %p1151 = pneg %p122
      $region38: #{_lambda_.15} parent=35 // pred_check_branch
        %1153 = sbr.rel (%p1151) target = $region40
      $region39: #{_lambda_.15} parent=35 // pred_region
        _
      $region40: #{_lambda_.15} parent=35 // pred_fallthru
        _
    $region36: #{_lambda_.15} parent=5 // pred_fallthru
      _
    %p1154 = scmp.le.s32.totalorder 2, %s10
    // Predicated region
    $region41: #{_lambda_.15} parent=5 // pred_check
      %p1155 = pneg %p1154
    $region42: #{_lambda_.15} parent=5 // pred_check_branch
      %1157 = sbr.rel (%p1155) target = $region44
    $region43: #{_lambda_.15} parent=5 // pred_region
      %s1158 = ssub.s32 %s10, 2
      // Predicated region
      $region45: #{_lambda_.15} parent=43 // pred_check
        %p1159 = pneg %p128
      $region46: #{_lambda_.15} parent=43 // pred_check_branch
        %1161 = sbr.rel (%p1159) target = $region48
      $region47: #{_lambda_.15} parent=43 // pred_region
        %p1162 = scmp.lt.s32.totalorder %s16, 1
        %s1163 = scalar_select %p1162, %s16, 1
        %s1164 = smul.addr %s1163, 4
        %s1165 = smul.addr %s1164, 8
        %s1166 = scalar_lea.vmem %s4, %s1165
      $region48: #{_lambda_.15} parent=43 // pred_fallthru
        _
    $region44: #{_lambda_.15} parent=5 // pred_fallthru
      _
  $region6: #{_lambda_.15} parent=0 // loop_footer
    %s14 = sadd.s32 1, %s10
  $region7: #{_lambda_.15} parent=0 // loop_footer_branch
    %9 = sbr.rel target = $region3
  $region8: #{_lambda_.15} parent=0 // loop_exit
    _

// kernel: _lambda_.16
$region0: #{_lambda_.16}
  #allocation0 [shape = 'u32[]', space=smem, size = 0x4, offset = 0x4, fixed_abs, tag = 'smem constant byte address 0x4 - core index']
  #allocation1 [shape = 'u32[72,128]{1,0:T(1,128)}', space=vmem, size = 0x9000, scoped, tag = 'internal scratch']
  %s0 = inlined_call_operand.vmem [shape: f32[2,128,512], index: 0, kind: input, shape index: {}]
  %s1 = inlined_call_operand.vmem [shape: f32[8,128], index: 1, kind: input, shape index: {}]
  %s2 = inlined_call_operand.vmem [shape: f32[8,1], index: 2, kind: input, shape index: {}]
  %s3 = inlined_call_operand.vmem [shape: f32[8,1], index: 3, kind: input, shape index: {}]
  %s4 = inlined_call_operand.vmem [shape: f32[2,8,512], index: 4, kind: output, shape index: {}]
  %s5 = sld [smem:[#allocation0]]
  $region49: #{_lambda_.16} parent=0
    _
  %s7 = ssub.s32 1, %s5
  %s8 = scalar_select 0, %s7, %s5
  loop: start=0, step=1, limit=4
  $region2: #{_lambda_.16} parent=0 // loop_pre_header
    _
  $region3: #{_lambda_.16} parent=0 // loop_header
    %s10 = sphi 0, %s14
    %p11 = scmp.ge.s32.totalorder %s10, 4
    %s20 = sphi 0, %s22
    %s23 = sphi 0, %s20
    %s24 = sphi 0, %s23
    %s40 = sphi 0, %s24
    %s44 = sphi 0, %s44
    %s46 = sphi 0, %s44
    %s47 = sphi 0, %s46
    %s61 = sphi 0, %s47
    %s65 = sphi 0, %s65
    %s67 = sphi 0, %s65
    %s68 = sphi 0, %s67
    %s82 = sphi 0, %s68
    %s86 = sphi 0, %s86
    %s88 = sphi 0, %s86
    %s89 = sphi 0, %s88
    %s103 = sphi 0, %s89
    %s109 = sphi 0, %s111
    %s112 = sphi 0, %s109
    %s113 = sphi 0, %s112
    %s129 = sphi 0, %s113
  $region4: #{_lambda_.16} parent=0 // loop_header_branch
    %13 = sbr.rel (%p11) target = $region8
  $region5: #{_lambda_.16} parent=0 // loop_body
    %s15 = ssub.s32 %s10, 1
    %s16 = ssub.s32 %s10, 2
    %s17 = sadd.s32 %s10, 1
    %s18 = ssub.s32 %s10, %s17
    %p19 = scmp.eq.s32.totalorder %s18, 0
    %s21 = sadd.s32 %s20, 1
    %s22 = scalar_select %p19, %s20, %s21
    %p25 = pneg %p19
    %p26 = scmp.eq.s32.totalorder %s10, 1
    %p27 = por %p25, %p26
    %p28 = scmp.ne.s32.totalorder %s20, %s23
    %p29 = scmp.eq.s32.totalorder %s10, 0
    %p30 = por %p28, %p29
    %p31 = scmp.ne.s32.totalorder %s20, %s23
    %p32 = scmp.eq.s32.totalorder %s15, 1
    %p33 = por %p31, %p32
    %p34 = scmp.ne.s32.totalorder %s23, %s24
    %p35 = scmp.eq.s32.totalorder %s15, 0
    %p36 = por %p34, %p35
    %p37 = scmp.ne.s32.totalorder %s23, %s24
    %p38 = scmp.eq.s32.totalorder %s16, 1
    %p39 = por %p37, %p38
    %p41 = scmp.ne.s32.totalorder %s24, %s40
    %p42 = scmp.eq.s32.totalorder %s16, 0
    %p43 = por %p41, %p42
    %s45 = sadd.s32 %s44, 1
    %p48 = scmp.eq.s32.totalorder %s10, 1
    %p49 = scmp.ne.s32.totalorder %s44, %s46
    %p50 = scmp.eq.s32.totalorder %s10, 0
    %p51 = por %p49, %p50
    %p52 = scmp.ne.s32.totalorder %s44, %s46
    %p53 = scmp.eq.s32.totalorder %s15, 1
    %p54 = por %p52, %p53
    %p55 = scmp.ne.s32.totalorder %s46, %s47
    %p56 = scmp.eq.s32.totalorder %s15, 0
    %p57 = por %p55, %p56
    %p58 = scmp.ne.s32.totalorder %s46, %s47
    %p59 = scmp.eq.s32.totalorder %s16, 1
    %p60 = por %p58, %p59
    %p62 = scmp.ne.s32.totalorder %s47, %s61
    %p63 = scmp.eq.s32.totalorder %s16, 0
    %p64 = por %p62, %p63
    %s66 = sadd.s32 %s65, 1
    %p69 = scmp.eq.s32.totalorder %s10, 1
    %p70 = scmp.ne.s32.totalorder %s65, %s67
    %p71 = scmp.eq.s32.totalorder %s10, 0
    %p72 = por %p70, %p71
    %p73 = scmp.ne.s32.totalorder %s65, %s67
    %p74 = scmp.eq.s32.totalorder %s15, 1
    %p75 = por %p73, %p74
    %p76 = scmp.ne.s32.totalorder %s67, %s68
    %p77 = scmp.eq.s32.totalorder %s15, 0
    %p78 = por %p76, %p77
    %p79 = scmp.ne.s32.totalorder %s67, %s68
    %p80 = scmp.eq.s32.totalorder %s16, 1
    %p81 = por %p79, %p80
    %p83 = scmp.ne.s32.totalorder %s68, %s82
    %p84 = scmp.eq.s32.totalorder %s16, 0
    %p85 = por %p83, %p84
    %s87 = sadd.s32 %s86, 1
    %p90 = scmp.eq.s32.totalorder %s10, 1
    %p91 = scmp.ne.s32.totalorder %s86, %s88
    %p92 = scmp.eq.s32.totalorder %s10, 0
    %p93 = por %p91, %p92
    %p94 = scmp.ne.s32.totalorder %s86, %s88
    %p95 = scmp.eq.s32.totalorder %s15, 1
    %p96 = por %p94, %p95
    %p97 = scmp.ne.s32.totalorder %s88, %s89
    %p98 = scmp.eq.s32.totalorder %s15, 0
    %p99 = por %p97, %p98
    %p100 = scmp.ne.s32.totalorder %s88, %s89
    %p101 = scmp.eq.s32.totalorder %s16, 1
    %p102 = por %p100, %p101
    %p104 = scmp.ne.s32.totalorder %s89, %s103
    %p105 = scmp.eq.s32.totalorder %s16, 0
    %p106 = por %p104, %p105
    %s107 = ssub.s32 %s10, %s17
    %p108 = scmp.eq.s32.totalorder %s107, 0
    %s110 = sadd.s32 %s109, 1
    %s111 = scalar_select %p108, %s109, %s110
    %p114 = pneg %p108
    %p115 = scmp.eq.s32.totalorder %s10, 1
    %p116 = por %p114, %p115
    %p117 = scmp.ne.s32.totalorder %s109, %s112
    %p118 = scmp.eq.s32.totalorder %s10, 0
    %p119 = por %p117, %p118
    %p120 = scmp.ne.s32.totalorder %s109, %s112
    %p121 = scmp.eq.s32.totalorder %s15, 1
    %p122 = por %p120, %p121
    %p123 = scmp.ne.s32.totalorder %s112, %s113
    %p124 = scmp.eq.s32.totalorder %s15, 0
    %p125 = por %p123, %p124
    %p126 = scmp.ne.s32.totalorder %s112, %s113
    %p127 = scmp.eq.s32.totalorder %s16, 1
    %p128 = por %p126, %p127
    %p130 = scmp.ne.s32.totalorder %s113, %s129
    %p131 = scmp.eq.s32.totalorder %s16, 0
    %p132 = por %p130, %p131
    %p133 = scmp.le.s32.totalorder 1, %s10
    %p134 = scmp.lt.s32.totalorder %s10, 3
    %p135 = pnand %p133, %p134
    %p136 = pneg %p135
    // Predicated region
    $region9: #{_lambda_.16} parent=5 // pred_check
      _
    $region10: #{_lambda_.16} parent=5 // pred_check_branch
      %138 = sbr.rel (%p135) target = $region12
    $region11: #{_lambda_.16} parent=5 // pred_region
      %s139 = ssub.s32 %s10, 1
      // Predicated region
      $region13: #{_lambda_.16} parent=11 // pred_check
        %p140 = pneg %p57
      $region14: #{_lambda_.16} parent=11 // pred_check_branch
        %142 = sbr.rel (%p140) target = $region16
      $region15: #{_lambda_.16} parent=11 // pred_region
        _
      $region16: #{_lambda_.16} parent=11 // pred_fallthru
        _
      // Predicated region
      $region17: #{_lambda_.16} parent=11 // pred_check
        %p143 = pneg %p78
      $region18: #{_lambda_.16} parent=11 // pred_check_branch
        %145 = sbr.rel (%p143) target = $region20
      $region19: #{_lambda_.16} parent=11 // pred_region
        _
      $region20: #{_lambda_.16} parent=11 // pred_fallthru
        _
      // Predicated region
      $region21: #{_lambda_.16} parent=11 // pred_check
        %p146 = pneg %p99
      $region22: #{_lambda_.16} parent=11 // pred_check_branch
        %148 = sbr.rel (%p146) target = $region24
      $region23: #{_lambda_.16} parent=11 // pred_region
        _
      $region24: #{_lambda_.16} parent=11 // pred_fallthru
        _
    $region12: #{_lambda_.16} parent=5 // pred_fallthru
      _
    %p149 = scmp.lt.s32.totalorder %s10, 2
    // Predicated region
    $region25: #{_lambda_.16} parent=5 // pred_check
      %p150 = pneg %p149
    $region26: #{_lambda_.16} parent=5 // pred_check_branch
      %152 = sbr.rel (%p150) target = $region28
    $region27: #{_lambda_.16} parent=5 // pred_region
      // Predicated region
      $region29: #{_lambda_.16} parent=27 // pred_check
        %p153 = pneg %p30
      $region30: #{_lambda_.16} parent=27 // pred_check_branch
        %155 = sbr.rel (%p153) target = $region32
      $region31: #{_lambda_.16} parent=27 // pred_region
        %p156 = scmp.lt.s32.totalorder %s10, 1
        %s157 = scalar_select %p156, %s10, 1
        %s158 = smul.addr %s157, 64
        %s159 = smul.addr %s158, 8
        %s160 = scalar_lea.vmem %s0, %s159
      $region32: #{_lambda_.16} parent=27 // pred_fallthru
        _
    $region28: #{_lambda_.16} parent=5 // pred_fallthru
      _
    %p161 = scmp.le.s32.totalorder 1, %s10
    %p162 = scmp.lt.s32.totalorder %s10, 3
    %p163 = pnand %p161, %p162
    %p164 = pneg %p163
    // Predicated region
    $region33: #{_lambda_.16} parent=5 // pred_check
      _
    $region34: #{_lambda_.16} parent=5 // pred_check_branch
      %166 = sbr.rel (%p163) target = $region36
    $region35: #{_lambda_.16} parent=5 // pred_region
      %s167 = ssub.s32 %s10, 1
      %p168 = scmp.lt.s32.totalorder %s15, 1
      %s169 = scalar_select %p168, %s15, 1
      %s170 = smul.addr %s169, 64
      %s171 = smul.addr %s170, 8
      %s172 = scalar_lea.vmem %s0, %s171
      %p173 = pneg %p36
      %p174 = pneg %p33
      %p175 = pneg %p57
      %p176 = pneg %p54
      %p177 = pneg %p78
      %p178 = pneg %p75
      %p179 = pneg %p99
      %p180 = pneg %p96
      %p181 = pneg %p125
      %p182 = pneg %p122
      %p183 = scmp.lt.s32.totalorder %s15, 1
      %s184 = scalar_select %p183, %s15, 1
      %s185 = smul.addr %s184, 4
      %s186 = smul.addr %s185, 8
      %s187 = scalar_lea.vmem %s4, %s186
      %p188 = scmp.lt.s32.totalorder %s15, 1
      %s189 = scalar_select %p188, %s15, 1
      %s190 = smul.addr %s189, 64
      %s191 = smul.addr %s190, 8
      %s192 = scalar_lea.vmem %s0, %s191
      %p193 = scmp.lt.s32.totalorder %s15, 1
      %s194 = scalar_select %p193, %s15, 1
      %s195 = smul.addr %s194, 4
      %s196 = smul.addr %s195, 8
      %s197 = scalar_lea.vmem %s4, %s196
      %v198 = vld [vmem:[%s192] sm:$0xff]
      %v199 = vld [vmem:[%s192 + $0x8] sm:$0xff]
      %v200 = vld [vmem:[%s192 + $0x10] sm:$0xff]
      %v201 = vld [vmem:[%s192 + $0x18] sm:$0xff]
      %v202 = vld [vmem:[%s192 + $0x20] sm:$0xff]
      %v203 = vld [vmem:[%s192 + $0x28] sm:$0xff]
      %v204 = vld [vmem:[%s192 + $0x30] sm:$0xff]
      %v205 = vld [vmem:[%s192 + $0x38] sm:$0xff]
      %v206 = vld [vmem:[%s192 + $0x40] sm:$0xff]
      %v207 = vld [vmem:[%s192 + $0x48] sm:$0xff]
      %v208 = vld [vmem:[%s192 + $0x50] sm:$0xff]
      %v209 = vld [vmem:[%s192 + $0x58] sm:$0xff]
      %v210 = vld [vmem:[%s192 + $0x60] sm:$0xff]
      %v211 = vld [vmem:[%s192 + $0x68] sm:$0xff]
      %v212 = vld [vmem:[%s192 + $0x70] sm:$0xff]
      %v213 = vld [vmem:[%s192 + $0x78] sm:$0xff]
      %v214 = vld [vmem:[%s192 + $0x80] sm:$0xff]
      %v215 = vld [vmem:[%s192 + $0x88] sm:$0xff]
      %v216 = vld [vmem:[%s192 + $0x90] sm:$0xff]
      %v217 = vld [vmem:[%s192 + $0x98] sm:$0xff]
      %v218 = vld [vmem:[%s192 + $0xa0] sm:$0xff]
      %v219 = vld [vmem:[%s192 + $0xa8] sm:$0xff]
      %v220 = vld [vmem:[%s192 + $0xb0] sm:$0xff]
      %v221 = vld [vmem:[%s192 + $0xb8] sm:$0xff]
      %v222 = vld [vmem:[%s192 + $0xc0] sm:$0xff]
      %v223 = vld [vmem:[%s192 + $0xc8] sm:$0xff]
      %v224 = vld [vmem:[%s192 + $0xd0] sm:$0xff]
      %v225 = vld [vmem:[%s192 + $0xd8] sm:$0xff]
      %v226 = vld [vmem:[%s192 + $0xe0] sm:$0xff]
      %v227 = vld [vmem:[%s192 + $0xe8] sm:$0xff]
      %v228 = vld [vmem:[%s192 + $0xf0] sm:$0xff]
      %v229 = vld [vmem:[%s192 + $0xf8] sm:$0xff]
      %v230 = vld [vmem:[%s192 + $0x100] sm:$0xff]
      %v231 = vld [vmem:[%s192 + $0x108] sm:$0xff]
      %v232 = vld [vmem:[%s192 + $0x110] sm:$0xff]
      %v233 = vld [vmem:[%s192 + $0x118] sm:$0xff]
      %v234 = vld [vmem:[%s192 + $0x120] sm:$0xff]
      %v235 = vld [vmem:[%s192 + $0x128] sm:$0xff]
      %v236 = vld [vmem:[%s192 + $0x130] sm:$0xff]
      %v237 = vld [vmem:[%s192 + $0x138] sm:$0xff]
      %v238 = vld [vmem:[%s192 + $0x140] sm:$0xff]
      %v239 = vld [vmem:[%s192 + $0x148] sm:$0xff]
      %v240 = vld [vmem:[%s192 + $0x150] sm:$0xff]
      %v241 = vld [vmem:[%s192 + $0x158] sm:$0xff]
      %v242 = vld [vmem:[%s192 + $0x160] sm:$0xff]
      %v243 = vld [vmem:[%s192 + $0x168] sm:$0xff]
      %v244 = vld [vmem:[%s192 + $0x170] sm:$0xff]
      %v245 = vld [vmem:[%s192 + $0x178] sm:$0xff]
      %v246 = vld [vmem:[%s192 + $0x180] sm:$0xff]
      %v247 = vld [vmem:[%s192 + $0x188] sm:$0xff]
      %v248 = vld [vmem:[%s192 + $0x190] sm:$0xff]
      %v249 = vld [vmem:[%s192 + $0x198] sm:$0xff]
      %v250 = vld [vmem:[%s192 + $0x1a0] sm:$0xff]
      %v251 = vld [vmem:[%s192 + $0x1a8] sm:$0xff]
      %v252 = vld [vmem:[%s192 + $0x1b0] sm:$0xff]
      %v253 = vld [vmem:[%s192 + $0x1b8] sm:$0xff]
      %v254 = vld [vmem:[%s192 + $0x1c0] sm:$0xff]
      %v255 = vld [vmem:[%s192 + $0x1c8] sm:$0xff]
      %v256 = vld [vmem:[%s192 + $0x1d0] sm:$0xff]
      %v257 = vld [vmem:[%s192 + $0x1d8] sm:$0xff]
      %v258 = vld [vmem:[%s192 + $0x1e0] sm:$0xff]
      %v259 = vld [vmem:[%s192 + $0x1e8] sm:$0xff]
      %v260 = vld [vmem:[%s192 + $0x1f0] sm:$0xff]
      %v261 = vld [vmem:[%s192 + $0x1f8] sm:$0xff]
      %v262 = vld [vmem:[%s1] sm:$0xff]
      %263 = vmatpush.msra.mxu0 %v258
      %264 = vmatpush.msra.mxu0 %v254
      %265 = vmatpush.msra.mxu0 %v250
      %266 = vmatpush.msra.mxu0 %v246
      %267 = vmatpush.msra.mxu0 %v242
      %268 = vmatpush.msra.mxu0 %v238
      %269 = vmatpush.msra.mxu0 %v234
      %270 = vmatpush.msra.mxu0 %v230
      %271 = vmatpush.msra.mxu0 %v226
      %272 = vmatpush.msra.mxu0 %v222
      %273 = vmatpush.msra.mxu0 %v218
      %274 = vmatpush.msra.mxu0 %v214
      %275 = vmatpush.msra.mxu0 %v210
      %276 = vmatpush.msra.mxu0 %v206
      %277 = vmatpush.msra.mxu0 %v202
      %278 = vmatpush.msra.mxu0 %v198
      %279 = vmatmul.f32.gmra.mxu0 %v262
      %v280 = vpop.f32.mrf.mxu0
      %v281 = vadd.f32 0.0, %v280
      %282 = vdwg.mxu0
      %283 = vmatpush.msra.mxu0 %v259
      %284 = vmatpush.msra.mxu0 %v255
      %285 = vmatpush.msra.mxu0 %v251
      %286 = vmatpush.msra.mxu0 %v247
      %287 = vmatpush.msra.mxu0 %v243
      %288 = vmatpush.msra.mxu0 %v239
      %289 = vmatpush.msra.mxu0 %v235
      %290 = vmatpush.msra.mxu0 %v231
      %291 = vmatpush.msra.mxu0 %v227
      %292 = vmatpush.msra.mxu0 %v223
      %293 = vmatpush.msra.mxu0 %v219
      %294 = vmatpush.msra.mxu0 %v215
      %295 = vmatpush.msra.mxu0 %v211
      %296 = vmatpush.msra.mxu0 %v207
      %297 = vmatpush.msra.mxu0 %v203
      %298 = vmatpush.msra.mxu0 %v199
      %299 = vmatmul.f32.gmra.mxu0 %v262
      %v300 = vpop.f32.mrf.mxu0
      %v301 = vadd.f32 0.0, %v300
      %302 = vdwg.mxu0
      %303 = vmatpush.msra.mxu0 %v260
      %304 = vmatpush.msra.mxu0 %v256
      %305 = vmatpush.msra.mxu0 %v252
      %306 = vmatpush.msra.mxu0 %v248
      %307 = vmatpush.msra.mxu0 %v244
      %308 = vmatpush.msra.mxu0 %v240
      %309 = vmatpush.msra.mxu0 %v236
      %310 = vmatpush.msra.mxu0 %v232
      %311 = vmatpush.msra.mxu0 %v228
      %312 = vmatpush.msra.mxu0 %v224
      %313 = vmatpush.msra.mxu0 %v220
      %314 = vmatpush.msra.mxu0 %v216
      %315 = vmatpush.msra.mxu0 %v212
      %316 = vmatpush.msra.mxu0 %v208
      %317 = vmatpush.msra.mxu0 %v204
      %318 = vmatpush.msra.mxu0 %v200
      %319 = vmatmul.f32.gmra.mxu0 %v262
      %v320 = vpop.f32.mrf.mxu0
      %v321 = vadd.f32 0.0, %v320
      %322 = vdwg.mxu0
      %323 = vmatpush.msra.mxu0 %v261
      %324 = vmatpush.msra.mxu0 %v257
      %325 = vmatpush.msra.mxu0 %v253
      %326 = vmatpush.msra.mxu0 %v249
      %327 = vmatpush.msra.mxu0 %v245
      %328 = vmatpush.msra.mxu0 %v241
      %329 = vmatpush.msra.mxu0 %v237
      %330 = vmatpush.msra.mxu0 %v233
      %331 = vmatpush.msra.mxu0 %v229
      %332 = vmatpush.msra.mxu0 %v225
      %333 = vmatpush.msra.mxu0 %v221
      %334 = vmatpush.msra.mxu0 %v217
      %335 = vmatpush.msra.mxu0 %v213
      %336 = vmatpush.msra.mxu0 %v209
      %337 = vmatpush.msra.mxu0 %v205
      %338 = vmatpush.msra.mxu0 %v201
      %339 = vmatmul.f32.gmra.mxu0 %v262
      %v340 = vpop.f32.mrf.mxu0
      %v341 = vadd.f32 0.0, %v340
      %342 = vdwg.mxu0
      %v343 = vadd.f32 %v281, %v301
      %v344 = vadd.f32 %v343, %v321
      %v345 = vadd.f32 %v344, %v341
      %346 = vadd.xlane.f32.xlu0 %v345
      %v347 = vpop.xlane.xlu0 %346
      %v348 = vrcp.pop 512.0
      %v349 = vmul.f32 512.0, %v348
      %v350 = vsub.f32 1.0, %v349
      %v351 = vmul.f32 %v348, %v350
      %v352 = vadd.f32 %v348, %v351
      %vm353 = vweird.f32 %v348
      %v354 = vsel %vm353, %v348, %v352
      %v355 = vmul.f32 %v347, %v354
      %v356 = vsub.f32 %v281, %v355
      %v357 = vsub.f32 %v301, %v355
      %v358 = vsub.f32 %v321, %v355
      %v359 = vsub.f32 %v341, %v355
      %v360 = vmul.f32 %v356, %v356
      %v361 = vmul.f32 %v357, %v357
      %v362 = vmul.f32 %v358, %v358
      %v363 = vmul.f32 %v359, %v359
      %v364 = vadd.f32 %v360, %v361
      %v365 = vadd.f32 %v364, %v362
      %v366 = vadd.f32 %v365, %v363
      %367 = vadd.xlane.f32.xlu0 %v366
      %v368 = vpop.xlane.xlu0 %367
      %v369 = vmul.f32 %v368, %v354
      %v370 = vadd.f32 %v369, 1e-05
      %v371 = vrsqrt.pop %v370
      %v372 = vmul.f32 %v371, %v370
      %v373 = vmul.f32 %v372, %v371
      %v374 = vmul.f32 0.5, %v373
      %v375 = vsub.f32 1.5, %v374
      %v376 = vmul.f32 %v371, %v375
      %vm377 = vweird.f32 %v370
      %vm378 = vweird.f32 %v371
      %vm379 = vmor %vm377, %vm378
      %v380 = vsel %vm379, %v371, %v376
      %v381 = vmul.f32 %v356, %v380
      %v382 = vmul.f32 %v357, %v380
      %v383 = vmul.f32 %v358, %v380
      %v384 = vmul.f32 %v359, %v380
      %v385 = vld [vmem:[%s2] sm:$0xff]
      %387 = vset.pattern.permute.xlu0 0
      %388 = vperm.xlu0 %387, %v385
      %v389 = vpop.permute.xlu0 %388
      %v391 = vmul.f32 %v381, %v389
      %v392 = vmul.f32 %v382, %v389
      %v393 = vmul.f32 %v383, %v389
      %v394 = vmul.f32 %v384, %v389
      %v395 = vld [vmem:[%s3] sm:$0xff]
      %397 = vset.pattern.permute.xlu0 0
      %398 = vperm.xlu0 %397, %v395
      %v399 = vpop.permute.xlu0 %398
      %v401 = vadd.f32 %v391, %v399
      %v402 = vadd.f32 %v392, %v399
      %v403 = vadd.f32 %v393, %v399
      %v404 = vadd.f32 %v394, %v399
      %vm405 = vcmp.ge.f32.partialorder %v401, 0.0
      %vm406 = vcmp.ge.f32.partialorder %v402, 0.0
      %vm407 = vcmp.ge.f32.partialorder %v403, 0.0
      %vm408 = vcmp.ge.f32.partialorder %v404, 0.0
      %v409 = vmul.f32 %v401, 0.01
      %v410 = vmul.f32 %v402, 0.01
      %v411 = vmul.f32 %v403, 0.01
      %v412 = vmul.f32 %v404, 0.01
      %v413 = vsel %vm405, %v401, %v409
      %v414 = vsel %vm406, %v402, %v410
      %v415 = vsel %vm407, %v403, %v411
      %v416 = vsel %vm408, %v404, %v412
      %417 = vst [vmem:[%s197] sm:$0xff] %v413
      %418 = vst [vmem:[%s197 + $0x8] sm:$0xff] %v414
      %419 = vst [vmem:[%s197 + $0x10] sm:$0xff] %v415
      %420 = vst [vmem:[%s197 + $0x18] sm:$0xff] %v416
      %p421 = scmp.lt.s32.totalorder %s15, 1
      %s422 = scalar_select %p421, %s15, 1
      %s423 = smul.addr %s422, 4
      %s424 = smul.addr %s423, 8
      %s425 = scalar_lea.vmem %s4, %s424
      // Predicated region
      $region37: #{_lambda_.16} parent=35 // pred_check
        %p426 = pneg %p122
      $region38: #{_lambda_.16} parent=35 // pred_check_branch
        %428 = sbr.rel (%p426) target = $region40
      $region39: #{_lambda_.16} parent=35 // pred_region
        _
      $region40: #{_lambda_.16} parent=35 // pred_fallthru
        _
    $region36: #{_lambda_.16} parent=5 // pred_fallthru
      _
    %p429 = scmp.le.s32.totalorder 2, %s10
    // Predicated region
    $region41: #{_lambda_.16} parent=5 // pred_check
      %p430 = pneg %p429
    $region42: #{_lambda_.16} parent=5 // pred_check_branch
      %432 = sbr.rel (%p430) target = $region44
    $region43: #{_lambda_.16} parent=5 // pred_region
      %s433 = ssub.s32 %s10, 2
      // Predicated region
      $region45: #{_lambda_.16} parent=43 // pred_check
        %p434 = pneg %p128
      $region46: #{_lambda_.16} parent=43 // pred_check_branch
        %436 = sbr.rel (%p434) target = $region48
      $region47: #{_lambda_.16} parent=43 // pred_region
        %p437 = scmp.lt.s32.totalorder %s16, 1
        %s438 = scalar_select %p437, %s16, 1
        %s439 = smul.addr %s438, 4
        %s440 = smul.addr %s439, 8
        %s441 = scalar_lea.vmem %s4, %s440
      $region48: #{_lambda_.16} parent=43 // pred_fallthru
        _
    $region44: #{_lambda_.16} parent=5 // pred_fallthru
      _
  $region6: #{_lambda_.16} parent=0 // loop_footer
    %s14 = sadd.s32 1, %s10
  $region7: #{_lambda_.16} parent=0 // loop_footer_branch
    %9 = sbr.rel target = $region3
  $region8: #{_lambda_.16} parent=0 // loop_exit
    _

</llo_original>
